<compile_context>
chip_gen: v6e
topology: v6e:2x2x1
jax: 0.10.0
libtpu: 0.0.40
codegen_flags: <defaults>
</compile_context>

<pallas_src>
import functools
import math

import jax
import jax.numpy as jnp
from jax import lax
from jax.experimental import pallas as pl
from jax.experimental.pallas import tpu as pltpu


_MAX_TILE_N = 32768                     # rows per grid step on the 128-lane axis
_VMEM_LIMIT_BYTES = 48 * 1024 * 1024    # scoped-VMEM cap; actual use ~16 MiB/step


# ----------------------------------------------------------------------------- #
# Chip-generation heuristics (performance defaults only; never affect results). #
# ----------------------------------------------------------------------------- #
def _device_kind():
    try:
        return jax.devices()[0].device_kind.lower()
    except Exception:
        return ""


def _dual_tensorcore(kind):
    # Chips whose "parallel" grid axes shard across 2 TensorCores.
    return any(tag in kind for tag in ("v4", "v5p", "7"))


def _bf16_vpu(kind):
    # v6e / v7x have bf16-capable VPU+EUP; v5e and older do not.
    return any(tag in kind for tag in ("v6", "7"))


def _round_up(v, m):
    return ((v + m - 1) // m) * m


def _pick_tile_n(n, max_tile, dual_core):
    """Rows per grid step (lane axis)."""
    n_pad = _round_up(max(n, 1), 128)
    if not dual_core:
        # Single TensorCore: the grid is a sequential loop -> biggest tile wins.
        return min(n_pad, max_tile)
    if n_pad <= 256:
        return n_pad
    # Dual TensorCore: even number of balanced steps (>=2) across the 2 cores.
    steps = max(2, pl.cdiv(n_pad, max_tile))
    if steps % 2:
        steps += 1
    return max(128, min(max_tile, _round_up(pl.cdiv(n_pad, steps), 128)))


# ------------------------------ kernel --------------------------------------- #
def _elu(x):
    # ELU(alpha=1), select-free: max(x,0) + (exp(min(x,0)) - 1).
    # exp argument is always <= 0, so the (dropped-write) ragged tail of the last
    # grid block cannot generate inf inside exp.
    zero = jnp.zeros((), x.dtype)
    one = jnp.ones((), x.dtype)
    return jnp.maximum(x, zero) + (jnp.exp(jnp.minimum(x, zero)) - one)


def _demod_kernel(x_ref, w1_ref, w2_ref, w3_ref, b1_ref, b2_ref, b3_ref,
                  o_ref, *, act_dtype, precision):
    # Lane-dense layout: features on sublanes, rows on the 128-lane axis.
    #   x_ref : (2, TN)   activations          o_ref : (2, TN)
    #   w1    : (24, 2)   w2 : (24, 24)   w3 : (2, 24)   (zero-padded, (out,in))
    #   b1,b2 : (24, 1)   b3 : (2, 1)
    x = x_ref[...]                                                    # (2, TN) f32

    # Layer 1: (24,2) @ (2,TN) -> (24,TN); padded rows 20..23 stay exactly 0.
    h = jnp.dot(w1_ref[...], x,
                preferred_element_type=jnp.float32, precision=precision)
    h = _elu(h.astype(act_dtype) + b1_ref[...].astype(act_dtype))

    # Layer 2: (24,24) @ (24,TN) -> (24,TN)
    h = jnp.dot(w2_ref[...].astype(act_dtype), h,
                preferred_element_type=jnp.float32, precision=precision)
    h = _elu(h.astype(act_dtype) + b2_ref[...].astype(act_dtype))

    # Layer 3: (2,24) @ (24,TN) -> (2,TN); finished in f32 (only 2 sublane rows).
    y = jnp.dot(w3_ref[...].astype(act_dtype), h,
                preferred_element_type=jnp.float32, precision=precision)
    y = _elu(y + b3_ref[...])
    o_ref[...] = y.astype(o_ref.dtype)


# ------------------------------ parameter packing ---------------------------- #
def pack_params(w1, b1, w2, b2, w3, b3):
    """Zero-pad PyTorch (out,in) weights/biases to tile-aligned shapes.
    Padding is exact: padded output rows get bias 0 -> ELU(0)=0, and padded
    weight columns only ever multiply those zero activations."""
    f32 = jnp.float32
    w1p = jnp.zeros((24, 2), f32).at[:20, :].set(w1.astype(f32))
    w2p = jnp.zeros((24, 24), f32).at[:20, :20].set(w2.astype(f32))
    w3p = jnp.zeros((2, 24), f32).at[:, :20].set(w3.astype(f32))
    b1p = jnp.zeros((24, 1), f32).at[:20, 0].set(b1.astype(f32))
    b2p = jnp.zeros((24, 1), f32).at[:20, 0].set(b2.astype(f32))
    b3p = b3.astype(f32).reshape(2, 1)
    return (w1p, w2p, w3p, b1p, b2p, b3p)


# ------------------------------ forward wrappers ------------------------------ #
def demodulator_forward_lane_dense(x2n, packed_params, *,
                                   max_tile_n=_MAX_TILE_N,
                                   use_bf16=None, high_precision=None):
    """Hot path.  x2n: (2, N) lane-dense input (features on sublanes, rows on
    lanes).  Returns (2, N) float32.  No layout changes happen here, so callers
    that keep data in this layout pay zero extra HBM transpose passes."""
    assert x2n.ndim == 2 and x2n.shape[0] == 2, "expected (2, N) lane-dense input"
    n = x2n.shape[1]
    w1p, w2p, w3p, b1p, b2p, b3p = packed_params

    kind = _device_kind()
    if use_bf16 is None:
        use_bf16 = _bf16_vpu(kind)        # bf16 VPU/EUP only on v6e / v7x
    if high_precision is None:
        high_precision = not use_bf16     # f32 path -> multi-pass MXU parity

    act_dtype = jnp.bfloat16 if use_bf16 else jnp.float32
    precision = (lax.Precision.HIGHEST if (high_precision and not use_bf16)
                 else lax.Precision.DEFAULT)

    tile_n = _pick_tile_n(n, max_tile_n, _dual_tensorcore(kind))
    grid = (pl.cdiv(n, tile_n),)          # ragged last block masked by Pallas

    kernel = functools.partial(_demod_kernel, act_dtype=act_dtype,
                               precision=precision)

    out = pl.pallas_call(
        kernel,
        out_shape=jax.ShapeDtypeStruct((2, n), jnp.float32),
        grid_spec=pltpu.PrefetchScalarGridSpec(
            num_scalar_prefetch=0,
            grid=grid,
            in_specs=[
                pl.BlockSpec((2, tile_n), lambda i: (0, i)),   # activations
                pl.BlockSpec((24, 2), lambda i: (0, 0)),       # W1 (resident)
                pl.BlockSpec((24, 24), lambda i: (0, 0)),      # W2 (resident)
                pl.BlockSpec((2, 24), lambda i: (0, 0)),       # W3 (resident)
                pl.BlockSpec((24, 1), lambda i: (0, 0)),       # b1
                pl.BlockSpec((24, 1), lambda i: (0, 0)),       # b2
                pl.BlockSpec((2, 1), lambda i: (0, 0)),        # b3
            ],
            out_specs=pl.BlockSpec((2, tile_n), lambda i: (0, i)),
        ),
        compiler_params=pltpu.CompilerParams(
            dimension_semantics=("parallel",),
            vmem_limit_bytes=_VMEM_LIMIT_BYTES),
        cost_estimate=pl.CostEstimate(
            flops=960 * n,
            transcendentals=42 * n,
            bytes_accessed=16 * n + 2888),
    )(x2n.astype(jnp.float32), w1p, w2p, w3p, b1p, b2p, b3p)
    return out


def demodulator_forward(x, packed_params, **kwargs):
    """PyTorch-layout convenience wrapper: x (..., 2) -> (..., 2).
    NOTE: the (N,2)<->(2,N) layout change costs one extra HBM pass each way;
    prefer demodulator_forward_lane_dense when the caller can stay in (2, N)."""
    orig_shape = x.shape
    assert orig_shape[-1] == 2, "demodulator expects last dim == 2"
    n = math.prod(orig_shape[:-1]) if len(orig_shape) > 1 else 1
    x2n = x.reshape(n, 2).T
    out = demodulator_forward_lane_dense(x2n, packed_params, **kwargs)
    return out.T.reshape(orig_shape)


# ------------------------------ init & reference ----------------------------- #
def init_params(key):
    """torch.nn.Linear default init: U(-1/sqrt(fan_in), +), (out,in) layout."""
    def linear(k, fan_in, fan_out):
        kw, kb = jax.random.split(k)
        bound = 1.0 / math.sqrt(fan_in)
        w = jax.random.uniform(kw, (fan_out, fan_in), jnp.float32, -bound, bound)
        b = jax.random.uniform(kb, (fan_out,), jnp.float32, -bound, bound)
        return w, b

    k1, k2, k3 = jax.random.split(key, 3)
    w1, b1 = linear(k1, 2, 20)
    w2, b2 = linear(k2, 20, 20)
    w3, b3 = linear(k3, 20, 2)
    return w1, b1, w2, b2, w3, b3


def _reference(x, raw_params):
    w1, b1, w2, b2, w3, b3 = raw_params
    hp = lax.Precision.HIGHEST
    elu = lambda v: jnp.where(v > 0, v, jnp.expm1(v))
    h = elu(jnp.matmul(x, w1.T, precision=hp) + b1)
    h = elu(jnp.matmul(h, w2.T, precision=hp) + b2)
    return elu(jnp.matmul(h, w3.T, precision=hp) + b3)


if __name__ == "__main__":
    key = jax.random.PRNGKey(0)
    k_param, k_x = jax.random.split(key)

    raw_params = init_params(k_param)
    packed = pack_params(*raw_params)

    # (2, 200, 2): 400 rows -> exercises the ragged / multi-step grid paths.
    x = jax.random.normal(k_x, (2, 200, 2), jnp.float32)
    ref = _reference(x, raw_params)

    # 1) f32 path with Precision.HIGHEST: parity with the f32 reference.
    fwd_f32 = jax.jit(functools.partial(demodulator_forward,
                                        use_bf16=False, high_precision=True))
    out_f32 = jax.block_until_ready(fwd_f32(x, packed))
    assert out_f32.shape == x.shape
    assert jnp.allclose(out_f32, ref, atol=1e-5, rtol=1e-5), float(
        jnp.max(jnp.abs(out_f32 - ref)))

    # 2) Auto performance path (bf16 intermediates on v6e/v7x, f32 elsewhere).
    fwd_auto = jax.jit(demodulator_forward)
    out_auto = jax.block_until_ready(fwd_auto(x, packed))
    assert jnp.allclose(out_auto, ref, atol=5e-2, rtol=5e-2), float(
        jnp.max(jnp.abs(out_auto - ref)))

    # 3) Lane-dense hot path (no wrapper transposes at all).
    x2n = x.reshape(-1, 2).T
    fwd_ld = jax.jit(functools.partial(demodulator_forward_lane_dense,
                                       use_bf16=False, high_precision=True))
    out_ld = jax.block_until_ready(fwd_ld(x2n, packed))
    assert jnp.allclose(out_ld.T.reshape(x.shape), ref, atol=1e-5, rtol=1e-5)

    print("KERNEL_OK")
</pallas_src>

<mosaic_0001>
module attributes {stable_mosaic.version = 11 : i64} {
  func.func @_demod_kernel(%arg0: i32, %arg1: memref<2x512xf32, #tpu.memory_space<vmem>>, %arg2: memref<24x2xf32, #tpu.memory_space<vmem>>, %arg3: memref<24x24xf32, #tpu.memory_space<vmem>>, %arg4: memref<2x24xf32, #tpu.memory_space<vmem>>, %arg5: memref<24x1xf32, #tpu.memory_space<vmem>>, %arg6: memref<24x1xf32, #tpu.memory_space<vmem>>, %arg7: memref<2x1xf32, #tpu.memory_space<vmem>>, %arg8: memref<2x512xf32, #tpu.memory_space<vmem>>) attributes {dimension_semantics = [#tpu.dimension_semantics<parallel>], iteration_bounds = array<i64: 1>, scalar_prefetch = 0 : i64, scratch_operands = 0 : i64, tpu.core_type = #tpu.core_type<tc>, window_params = [{transform_indices = @transform_0, window_bounds = array<i64: 2, 512>}, {pipeline_mode = #tpu.pipeline_mode<synchronous>, transform_indices = @transform_1, window_bounds = array<i64: 24, 2>}, {pipeline_mode = #tpu.pipeline_mode<synchronous>, transform_indices = @transform_2, window_bounds = array<i64: 24, 24>}, {pipeline_mode = #tpu.pipeline_mode<synchronous>, transform_indices = @transform_3, window_bounds = array<i64: 2, 24>}, {pipeline_mode = #tpu.pipeline_mode<synchronous>, transform_indices = @transform_4, window_bounds = array<i64: 24, 1>}, {pipeline_mode = #tpu.pipeline_mode<synchronous>, transform_indices = @transform_5, window_bounds = array<i64: 24, 1>}, {pipeline_mode = #tpu.pipeline_mode<synchronous>, transform_indices = @transform_6, window_bounds = array<i64: 2, 1>}, {transform_indices = @transform_7, window_bounds = array<i64: 2, 512>}]} {
    %c0 = arith.constant 0 : index
    %c0_0 = arith.constant 0 : index
    %0 = vector.load %arg1[%c0, %c0_0] : memref<2x512xf32, #tpu.memory_space<vmem>>, vector<2x512xf32>
    %c0_1 = arith.constant 0 : index
    %c0_2 = arith.constant 0 : index
    %1 = vector.load %arg2[%c0_1, %c0_2] : memref<24x2xf32, #tpu.memory_space<vmem>>, vector<24x2xf32>
    %cst = arith.constant dense<0.000000e+00> : vector<24x512xf32>
    %2 = tpu.matmul %1, %0, %cst {dimension_numbers = #tpu.dot_dimension_numbers<[1], [0], [0], [1], [0, 0, 1, 1], [], []>, precision = #tpu.contract_precision<fp32>} : vector<24x2xf32>, vector<2x512xf32>, vector<24x512xf32> -> vector<24x512xf32>
    %c0_3 = arith.constant 0 : index
    %c0_4 = arith.constant 0 : index
    %3 = vector.load %arg5[%c0_3, %c0_4] : memref<24x1xf32, #tpu.memory_space<vmem>>, vector<24x1xf32>
    %4 = vector.broadcast %3 : vector<24x1xf32> to vector<24x512xf32>
    %5 = arith.addf %2, %4 : vector<24x512xf32>
    %cst_5 = arith.constant 0.000000e+00 : f32
    %6 = vector.broadcast %cst_5 : f32 to vector<24x512xf32>
    %7 = arith.maximumf %5, %6 : vector<24x512xf32>
    %cst_6 = arith.constant 0.000000e+00 : f32
    %8 = vector.broadcast %cst_6 : f32 to vector<24x512xf32>
    %9 = arith.minimumf %5, %8 : vector<24x512xf32>
    %10 = math.exp %9 : vector<24x512xf32>
    %cst_7 = arith.constant 1.000000e+00 : f32
    %11 = vector.broadcast %cst_7 : f32 to vector<24x512xf32>
    %12 = arith.subf %10, %11 : vector<24x512xf32>
    %13 = arith.addf %7, %12 : vector<24x512xf32>
    %c0_8 = arith.constant 0 : index
    %c0_9 = arith.constant 0 : index
    %14 = vector.load %arg3[%c0_8, %c0_9] : memref<24x24xf32, #tpu.memory_space<vmem>>, vector<24x24xf32>
    %cst_10 = arith.constant dense<0.000000e+00> : vector<24x512xf32>
    %15 = tpu.matmul %14, %13, %cst_10 {dimension_numbers = #tpu.dot_dimension_numbers<[1], [0], [0], [1], [0, 0, 1, 1], [], []>, precision = #tpu.contract_precision<fp32>} : vector<24x24xf32>, vector<24x512xf32>, vector<24x512xf32> -> vector<24x512xf32>
    %c0_11 = arith.constant 0 : index
    %c0_12 = arith.constant 0 : index
    %16 = vector.load %arg6[%c0_11, %c0_12] : memref<24x1xf32, #tpu.memory_space<vmem>>, vector<24x1xf32>
    %17 = vector.broadcast %16 : vector<24x1xf32> to vector<24x512xf32>
    %18 = arith.addf %15, %17 : vector<24x512xf32>
    %cst_13 = arith.constant 0.000000e+00 : f32
    %19 = vector.broadcast %cst_13 : f32 to vector<24x512xf32>
    %20 = arith.maximumf %18, %19 : vector<24x512xf32>
    %cst_14 = arith.constant 0.000000e+00 : f32
    %21 = vector.broadcast %cst_14 : f32 to vector<24x512xf32>
    %22 = arith.minimumf %18, %21 : vector<24x512xf32>
    %23 = math.exp %22 : vector<24x512xf32>
    %cst_15 = arith.constant 1.000000e+00 : f32
    %24 = vector.broadcast %cst_15 : f32 to vector<24x512xf32>
    %25 = arith.subf %23, %24 : vector<24x512xf32>
    %26 = arith.addf %20, %25 : vector<24x512xf32>
    %c0_16 = arith.constant 0 : index
    %c0_17 = arith.constant 0 : index
    %27 = vector.load %arg4[%c0_16, %c0_17] : memref<2x24xf32, #tpu.memory_space<vmem>>, vector<2x24xf32>
    %cst_18 = arith.constant dense<0.000000e+00> : vector<2x512xf32>
    %28 = tpu.matmul %27, %26, %cst_18 {dimension_numbers = #tpu.dot_dimension_numbers<[1], [0], [0], [1], [0, 0, 1, 1], [], []>, precision = #tpu.contract_precision<fp32>} : vector<2x24xf32>, vector<24x512xf32>, vector<2x512xf32> -> vector<2x512xf32>
    %c0_19 = arith.constant 0 : index
    %c0_20 = arith.constant 0 : index
    %29 = vector.load %arg7[%c0_19, %c0_20] : memref<2x1xf32, #tpu.memory_space<vmem>>, vector<2x1xf32>
    %30 = vector.broadcast %29 : vector<2x1xf32> to vector<2x512xf32>
    %31 = arith.addf %28, %30 : vector<2x512xf32>
    %cst_21 = arith.constant 0.000000e+00 : f32
    %32 = vector.broadcast %cst_21 : f32 to vector<2x512xf32>
    %33 = arith.maximumf %31, %32 : vector<2x512xf32>
    %cst_22 = arith.constant 0.000000e+00 : f32
    %34 = vector.broadcast %cst_22 : f32 to vector<2x512xf32>
    %35 = arith.minimumf %31, %34 : vector<2x512xf32>
    %36 = math.exp %35 : vector<2x512xf32>
    %cst_23 = arith.constant 1.000000e+00 : f32
    %37 = vector.broadcast %cst_23 : f32 to vector<2x512xf32>
    %38 = arith.subf %36, %37 : vector<2x512xf32>
    %39 = arith.addf %33, %38 : vector<2x512xf32>
    %c0_24 = arith.constant 0 : index
    %c0_25 = arith.constant 0 : index
    %40 = vector.load %arg8[%c0_24, %c0_25] : memref<2x512xf32, #tpu.memory_space<vmem>>, vector<2x512xf32>
    tpu.vector_store %arg8[%c0_24, %c0_25], %39 {strides = array<i32>} : memref<2x512xf32, #tpu.memory_space<vmem>>, vector<2x512xf32>,
    return
  }
  func.func @transform_0(%arg0: i32) -> (i32, i32) {
    %c0_i32 = arith.constant 0 : i32
    %c0_i32_0 = arith.constant 0 : i32
    return %c0_i32, %arg0 : i32, i32
  }
  func.func @transform_1(%arg0: i32) -> (i32, i32) {
    %c0_i32 = arith.constant 0 : i32
    %c0_i32_0 = arith.constant 0 : i32
    %c0_i32_1 = arith.constant 0 : i32
    return %c0_i32, %c0_i32_0 : i32, i32
  }
  func.func @transform_2(%arg0: i32) -> (i32, i32) {
    %c0_i32 = arith.constant 0 : i32
    %c0_i32_0 = arith.constant 0 : i32
    %c0_i32_1 = arith.constant 0 : i32
    return %c0_i32, %c0_i32_0 : i32, i32
  }
  func.func @transform_3(%arg0: i32) -> (i32, i32) {
    %c0_i32 = arith.constant 0 : i32
    %c0_i32_0 = arith.constant 0 : i32
    %c0_i32_1 = arith.constant 0 : i32
    return %c0_i32, %c0_i32_0 : i32, i32
  }
  func.func @transform_4(%arg0: i32) -> (i32, i32) {
    %c0_i32 = arith.constant 0 : i32
    %c0_i32_0 = arith.constant 0 : i32
    %c0_i32_1 = arith.constant 0 : i32
    return %c0_i32, %c0_i32_0 : i32, i32
  }
  func.func @transform_5(%arg0: i32) -> (i32, i32) {
    %c0_i32 = arith.constant 0 : i32
    %c0_i32_0 = arith.constant 0 : i32
    %c0_i32_1 = arith.constant 0 : i32
    return %c0_i32, %c0_i32_0 : i32, i32
  }
  func.func @transform_6(%arg0: i32) -> (i32, i32) {
    %c0_i32 = arith.constant 0 : i32
    %c0_i32_0 = arith.constant 0 : i32
    %c0_i32_1 = arith.constant 0 : i32
    return %c0_i32, %c0_i32_0 : i32, i32
  }
  func.func @transform_7(%arg0: i32) -> (i32, i32) {
    %c0_i32 = arith.constant 0 : i32
    %c0_i32_0 = arith.constant 0 : i32
    return %c0_i32, %arg0 : i32, i32
  }
}

</mosaic_0001>

<llo_original>
// kernel: demodulator_forward.1
$region0: #{demodulator_forward.1}
  #allocation0 [shape = 'u32[]', space=smem, size = 0x4, offset = 0x4, fixed_abs, tag = 'smem constant byte address 0x4 - core index']
  #allocation1 [shape = 'u32[144,128]{1,0:T(1,128)}', space=vmem, size = 0x12000, scoped, tag = 'internal scratch']
  %s0 = inlined_call_operand.vmem [shape: f32[2,400], index: 0, kind: input, shape index: {}]
  %s1 = inlined_call_operand.vmem [shape: f32[24,2], index: 1, kind: input, shape index: {}]
  %s2 = inlined_call_operand.vmem [shape: f32[24,24], index: 2, kind: input, shape index: {}]
  %s3 = inlined_call_operand.vmem [shape: f32[2,24], index: 3, kind: input, shape index: {}]
  %s4 = inlined_call_operand.vmem [shape: f32[24,1], index: 4, kind: input, shape index: {}]
  %s5 = inlined_call_operand.vmem [shape: f32[24,1], index: 5, kind: input, shape index: {}]
  %s6 = inlined_call_operand.vmem [shape: f32[2,1], index: 6, kind: input, shape index: {}]
  %s7 = inlined_call_operand.vmem [shape: f32[2,400], index: 7, kind: output, shape index: {}]
  %s8 = sld [smem:[#allocation0]]
  $region38: #{demodulator_forward.1} parent=0
    _
  %s10 = ssub.s32 1, %s8
  %s11 = scalar_select 0, %s10, %s8
  // Predicated region
  $region2: #{demodulator_forward.1} parent=0 // pred_check
    _
  $region3: #{demodulator_forward.1} parent=0 // pred_check_branch
    %13 = sbr.rel (0) target = $region5
  $region4: #{demodulator_forward.1} parent=0 // pred_region
    _
  $region5: #{demodulator_forward.1} parent=0 // pred_fallthru
    _
  // Predicated region
  $region6: #{demodulator_forward.1} parent=0 // pred_check
    _
  $region7: #{demodulator_forward.1} parent=0 // pred_check_branch
    %15 = sbr.rel (0) target = $region9
  $region8: #{demodulator_forward.1} parent=0 // pred_region
    _
  $region9: #{demodulator_forward.1} parent=0 // pred_fallthru
    _
  // Predicated region
  $region10: #{demodulator_forward.1} parent=0 // pred_check
    _
  $region11: #{demodulator_forward.1} parent=0 // pred_check_branch
    %17 = sbr.rel (0) target = $region13
  $region12: #{demodulator_forward.1} parent=0 // pred_region
    _
  $region13: #{demodulator_forward.1} parent=0 // pred_fallthru
    _
  // Predicated region
  $region14: #{demodulator_forward.1} parent=0 // pred_check
    _
  $region15: #{demodulator_forward.1} parent=0 // pred_check_branch
    %19 = sbr.rel (0) target = $region17
  $region16: #{demodulator_forward.1} parent=0 // pred_region
    _
  $region17: #{demodulator_forward.1} parent=0 // pred_fallthru
    _
  // Predicated region
  $region18: #{demodulator_forward.1} parent=0 // pred_check
    _
  $region19: #{demodulator_forward.1} parent=0 // pred_check_branch
    %21 = sbr.rel (0) target = $region21
  $region20: #{demodulator_forward.1} parent=0 // pred_region
    _
  $region21: #{demodulator_forward.1} parent=0 // pred_fallthru
    _
  // Predicated region
  $region22: #{demodulator_forward.1} parent=0 // pred_check
    _
  $region23: #{demodulator_forward.1} parent=0 // pred_check_branch
    %23 = sbr.rel (0) target = $region25
  $region24: #{demodulator_forward.1} parent=0 // pred_region
    _
  $region25: #{demodulator_forward.1} parent=0 // pred_fallthru
    _
  // Predicated region
  $region26: #{demodulator_forward.1} parent=0 // pred_check
    _
  $region27: #{demodulator_forward.1} parent=0 // pred_check_branch
    %25 = sbr.rel (0) target = $region29
  $region28: #{demodulator_forward.1} parent=0 // pred_region
    _
  $region29: #{demodulator_forward.1} parent=0 // pred_fallthru
    _
  %v26 = vld [vmem:[%s0] sm:$0xff]
  %v27 = vld [vmem:[%s1] sm:$0xff]
  %v28 = vld [vmem:[%s1 + $0x8] sm:$0xff]
  %v29 = vld [vmem:[%s1 + $0x10] sm:$0xff]
  %v30 = vld [vmem:[%s4] sm:$0xff]
  %v31 = vld [vmem:[%s4 + $0x8] sm:$0xff]
  %v32 = vld [vmem:[%s4 + $0x10] sm:$0xff]
  %34 = vset.pattern.permute.xlu0 0
  %35 = vperm.xlu0 %34, %v30
  %v36 = vpop.permute.xlu0 %35
  %39 = vset.pattern.permute.xlu0 0
  %40 = vperm.xlu0 %39, %v31
  %v41 = vpop.permute.xlu0 %40
  %44 = vset.pattern.permute.xlu0 0
  %45 = vperm.xlu0 %44, %v32
  %v46 = vpop.permute.xlu0 %45
  %v49 = vcombine.high %v26, %v26
  %v51 = vunpack.c.l.s4 1983009808
  %v52 = vunpack.c.0.s8 %v51
  %v53 = vlaneseq
  %v54 = vshrl.u32 %v53, 7
  %v55 = vsub.s32 %v52, %v54
  %v56 = vrot.slane %v26, %v55
  %v58 = vunpack.c.l.s4 1983009808
  %v59 = vunpack.c.0.s8 %v58
  %v60 = vlaneseq
  %v61 = vshrl.u32 %v60, 7
  %v62 = vsub.s32 %v59, %v61
  %v63 = vrot.slane %v49, %v62
  %v64 = vcombine.high %v56, %v56
  %v65 = vcombine.high %v63, %v63
  %vm66 = vcmask 15360
  %v68 = vsel %vm66, %v27, 0
  %v71 = vsel %vm66, %v28, 0
  %v74 = vsel %vm66, %v29, 0
  %vm76 = vcmask 1041408
  %v77 = vsel %vm76, %v56, 0
  %v79 = vsel %vm76, %v64, 0
  %v81 = vsel %vm76, %v63, 0
  %v83 = vsel %vm76, %v65, 0
  %85 = vmatprep.subr.mxu0 0.0
  %86 = vmatpush1.msra.mxu0 0.0
  %87 = vmatprep.subr.mxu0 0.0
  %88 = vmatpush1.msra.mxu0 0.0
  %89 = vmatprep.subr.mxu0 0.0
  %90 = vmatpush1.msra.mxu0 0.0
  %91 = vmatprep.subr.mxu0 0.0
  %92 = vmatpush1.msra.mxu0 0.0
  %93 = vmatprep.subr.mxu0 0.0
  %94 = vmatpush1.msra.mxu0 0.0
  %95 = vmatprep.subr.mxu0 0.0
  %96 = vmatpush1.msra.mxu0 0.0
  %97 = vmatprep.subr.mxu0 0.0
  %98 = vmatpush1.msra.mxu0 0.0
  %99 = vmatprep.subr.mxu0 0.0
  %100 = vmatpush1.msra.mxu0 0.0
  %101 = vmatprep.subr.mxu0 0.0
  %102 = vmatpush1.msra.mxu0 0.0
  %103 = vmatprep.subr.mxu0 0.0
  %104 = vmatpush1.msra.mxu0 0.0
  %105 = vmatprep.subr.mxu0 0.0
  %106 = vmatpush1.msra.mxu0 0.0
  %107 = vmatprep.subr.mxu0 0.0
  %108 = vmatpush1.msra.mxu0 0.0
  %109 = vmatprep.subr.mxu0 0.0
  %110 = vmatpush1.msra.mxu0 0.0
  %111 = vmatprep.subr.mxu0 0.0
  %112 = vmatpush1.msra.mxu0 0.0
  %113 = vmatprep.subr.mxu0 0.0
  %114 = vmatpush1.msra.mxu0 0.0
  %v115 = vand.u32 %v79, 4294901760
  %116 = vmatprep.subr.mxu0 %v115
  %v117 = vand.u32 %v77, 4294901760
  %118 = vmatpush1.msra.mxu0 %v117
  %119 = vmatprep.subr.mxu0 0.0
  %120 = vmatpush2.msra.mxu0 0.0
  %121 = vmatprep.subr.mxu0 0.0
  %122 = vmatpush2.msra.mxu0 0.0
  %123 = vmatprep.subr.mxu0 0.0
  %124 = vmatpush2.msra.mxu0 0.0
  %125 = vmatprep.subr.mxu0 0.0
  %126 = vmatpush2.msra.mxu0 0.0
  %127 = vmatprep.subr.mxu0 0.0
  %128 = vmatpush2.msra.mxu0 0.0
  %129 = vmatprep.subr.mxu0 0.0
  %130 = vmatpush2.msra.mxu0 0.0
  %131 = vmatprep.subr.mxu0 0.0
  %132 = vmatpush2.msra.mxu0 0.0
  %133 = vmatprep.subr.mxu0 0.0
  %134 = vmatpush2.msra.mxu0 0.0
  %135 = vmatprep.subr.mxu0 0.0
  %136 = vmatpush2.msra.mxu0 0.0
  %137 = vmatprep.subr.mxu0 0.0
  %138 = vmatpush2.msra.mxu0 0.0
  %139 = vmatprep.subr.mxu0 0.0
  %140 = vmatpush2.msra.mxu0 0.0
  %141 = vmatprep.subr.mxu0 0.0
  %142 = vmatpush2.msra.mxu0 0.0
  %143 = vmatprep.subr.mxu0 0.0
  %144 = vmatpush2.msra.mxu0 0.0
  %145 = vmatprep.subr.mxu0 0.0
  %146 = vmatpush2.msra.mxu0 0.0
  %147 = vmatprep.subr.mxu0 0.0
  %148 = vmatpush2.msra.mxu0 0.0
  %149 = vmatprep.subr.mxu0 0.0
  %150 = vmatpush2.msra.mxu0 0.0
  %151 = vmatprep.mubr.f32.mxu0 0.0
  %v152 = vand.u32 %v68, 4294901760
  %v153 = vsub.f32 %v68, %v152
  %v154 = vand.u32 %v153, 4294901760
  %v155 = vsub.f32 %v153, %v154
  %v156 = vand.u32 %v155, 4294901760
  %157 = vmatmul.mubr.f32.gmra.mxu0 %v156
  %v158 = vpop.f32.mrf.mxu0
  %v159 = vadd.f32 %v36, %v158
  %v160 = vpop.f32.mrf.mxu0
  %v161 = vadd.f32 %v36, %v160
  %162 = vmatprep.mubr.f32.mxu0 0.0
  %v163 = vand.u32 %v71, 4294901760
  %v164 = vsub.f32 %v71, %v163
  %v165 = vand.u32 %v164, 4294901760
  %v166 = vsub.f32 %v164, %v165
  %v167 = vand.u32 %v166, 4294901760
  %168 = vmatmul.mubr.f32.gmra.mxu0 %v167
  %v169 = vpop.f32.mrf.mxu0
  %v170 = vadd.f32 %v41, %v169
  %v171 = vpop.f32.mrf.mxu0
  %v172 = vadd.f32 %v41, %v171
  %173 = vmatprep.mubr.f32.mxu0 0.0
  %v174 = vand.u32 %v74, 4294901760
  %v175 = vsub.f32 %v74, %v174
  %v176 = vand.u32 %v175, 4294901760
  %v177 = vsub.f32 %v175, %v176
  %v178 = vand.u32 %v177, 4294901760
  %179 = vmatmul.mubr.f32.gmra.mxu0 %v178
  %v180 = vpop.f32.mrf.mxu0
  %v181 = vadd.f32 %v46, %v180
  %v182 = vpop.f32.mrf.mxu0
  %v183 = vadd.f32 %v46, %v182
  %184 = vdwg.mxu0
  %185 = vmatprep.subr.mxu0 0.0
  %186 = vmatpush1.msra.mxu0 0.0
  %187 = vmatprep.subr.mxu0 0.0
  %188 = vmatpush1.msra.mxu0 0.0
  %189 = vmatprep.subr.mxu0 0.0
  %190 = vmatpush1.msra.mxu0 0.0
  %191 = vmatprep.subr.mxu0 0.0
  %192 = vmatpush1.msra.mxu0 0.0
  %193 = vmatprep.subr.mxu0 0.0
  %194 = vmatpush1.msra.mxu0 0.0
  %195 = vmatprep.subr.mxu0 0.0
  %196 = vmatpush1.msra.mxu0 0.0
  %197 = vmatprep.subr.mxu0 0.0
  %198 = vmatpush1.msra.mxu0 0.0
  %199 = vmatprep.subr.mxu0 0.0
  %200 = vmatpush1.msra.mxu0 0.0
  %201 = vmatprep.subr.mxu0 0.0
  %202 = vmatpush1.msra.mxu0 0.0
  %203 = vmatprep.subr.mxu0 0.0
  %204 = vmatpush1.msra.mxu0 0.0
  %205 = vmatprep.subr.mxu0 0.0
  %206 = vmatpush1.msra.mxu0 0.0
  %207 = vmatprep.subr.mxu0 0.0
  %208 = vmatpush1.msra.mxu0 0.0
  %209 = vmatprep.subr.mxu0 0.0
  %210 = vmatpush1.msra.mxu0 0.0
  %211 = vmatprep.subr.mxu0 0.0
  %212 = vmatpush1.msra.mxu0 0.0
  %213 = vmatprep.subr.mxu0 0.0
  %214 = vmatpush1.msra.mxu0 0.0
  %v215 = vand.u32 %v79, 4294901760
  %v216 = vsub.f32 %v79, %v215
  %v217 = vand.u32 %v216, 4294901760
  %v218 = vsub.f32 %v216, %v217
  %v219 = vand.u32 %v218, 4294901760
  %220 = vmatprep.subr.mxu0 %v219
  %v221 = vand.u32 %v77, 4294901760
  %v222 = vsub.f32 %v77, %v221
  %v223 = vand.u32 %v222, 4294901760
  %v224 = vsub.f32 %v222, %v223
  %v225 = vand.u32 %v224, 4294901760
  %226 = vmatpush1.msra.mxu0 %v225
  %227 = vmatprep.subr.mxu0 0.0
  %228 = vmatpush2.msra.mxu0 0.0
  %229 = vmatprep.subr.mxu0 0.0
  %230 = vmatpush2.msra.mxu0 0.0
  %231 = vmatprep.subr.mxu0 0.0
  %232 = vmatpush2.msra.mxu0 0.0
  %233 = vmatprep.subr.mxu0 0.0
  %234 = vmatpush2.msra.mxu0 0.0
  %235 = vmatprep.subr.mxu0 0.0
  %236 = vmatpush2.msra.mxu0 0.0
  %237 = vmatprep.subr.mxu0 0.0
  %238 = vmatpush2.msra.mxu0 0.0
  %239 = vmatprep.subr.mxu0 0.0
  %240 = vmatpush2.msra.mxu0 0.0
  %241 = vmatprep.subr.mxu0 0.0
  %242 = vmatpush2.msra.mxu0 0.0
  %243 = vmatprep.subr.mxu0 0.0
  %244 = vmatpush2.msra.mxu0 0.0
  %245 = vmatprep.subr.mxu0 0.0
  %246 = vmatpush2.msra.mxu0 0.0
  %247 = vmatprep.subr.mxu0 0.0
  %248 = vmatpush2.msra.mxu0 0.0
  %249 = vmatprep.subr.mxu0 0.0
  %250 = vmatpush2.msra.mxu0 0.0
  %251 = vmatprep.subr.mxu0 0.0
  %252 = vmatpush2.msra.mxu0 0.0
  %253 = vmatprep.subr.mxu0 0.0
  %254 = vmatpush2.msra.mxu0 0.0
  %255 = vmatprep.subr.mxu0 0.0
  %256 = vmatpush2.msra.mxu0 0.0
  %257 = vmatprep.subr.mxu0 0.0
  %258 = vmatpush2.msra.mxu0 0.0
  %259 = vmatprep.mubr.f32.mxu0 0.0
  %v260 = vand.u32 %v68, 4294901760
  %261 = vmatmul.mubr.f32.gmra.mxu0 %v260
  %v262 = vpop.f32.mrf.mxu0
  %v263 = vadd.f32 %v159, %v262
  %v264 = vpop.f32.mrf.mxu0
  %v265 = vadd.f32 %v161, %v264
  %266 = vmatprep.mubr.f32.mxu0 0.0
  %v267 = vand.u32 %v71, 4294901760
  %268 = vmatmul.mubr.f32.gmra.mxu0 %v267
  %v269 = vpop.f32.mrf.mxu0
  %v270 = vadd.f32 %v170, %v269
  %v271 = vpop.f32.mrf.mxu0
  %v272 = vadd.f32 %v172, %v271
  %273 = vmatprep.mubr.f32.mxu0 0.0
  %v274 = vand.u32 %v74, 4294901760
  %275 = vmatmul.mubr.f32.gmra.mxu0 %v274
  %v276 = vpop.f32.mrf.mxu0
  %v277 = vadd.f32 %v181, %v276
  %v278 = vpop.f32.mrf.mxu0
  %v279 = vadd.f32 %v183, %v278
  %280 = vdwg.mxu0
  %281 = vmatprep.subr.mxu0 0.0
  %282 = vmatpush1.msra.mxu0 0.0
  %283 = vmatprep.subr.mxu0 0.0
  %284 = vmatpush1.msra.mxu0 0.0
  %285 = vmatprep.subr.mxu0 0.0
  %286 = vmatpush1.msra.mxu0 0.0
  %287 = vmatprep.subr.mxu0 0.0
  %288 = vmatpush1.msra.mxu0 0.0
  %289 = vmatprep.subr.mxu0 0.0
  %290 = vmatpush1.msra.mxu0 0.0
  %291 = vmatprep.subr.mxu0 0.0
  %292 = vmatpush1.msra.mxu0 0.0
  %293 = vmatprep.subr.mxu0 0.0
  %294 = vmatpush1.msra.mxu0 0.0
  %295 = vmatprep.subr.mxu0 0.0
  %296 = vmatpush1.msra.mxu0 0.0
  %297 = vmatprep.subr.mxu0 0.0
  %298 = vmatpush1.msra.mxu0 0.0
  %299 = vmatprep.subr.mxu0 0.0
  %300 = vmatpush1.msra.mxu0 0.0
  %301 = vmatprep.subr.mxu0 0.0
  %302 = vmatpush1.msra.mxu0 0.0
  %303 = vmatprep.subr.mxu0 0.0
  %304 = vmatpush1.msra.mxu0 0.0
  %305 = vmatprep.subr.mxu0 0.0
  %306 = vmatpush1.msra.mxu0 0.0
  %307 = vmatprep.subr.mxu0 0.0
  %308 = vmatpush1.msra.mxu0 0.0
  %309 = vmatprep.subr.mxu0 0.0
  %310 = vmatpush1.msra.mxu0 0.0
  %v311 = vand.u32 %v79, 4294901760
  %v312 = vsub.f32 %v79, %v311
  %313 = vmatprep.subr.mxu0 %v312
  %v314 = vand.u32 %v77, 4294901760
  %v315 = vsub.f32 %v77, %v314
  %316 = vmatpush1.msra.mxu0 %v315
  %317 = vmatprep.subr.mxu0 0.0
  %318 = vmatpush2.msra.mxu0 0.0
  %319 = vmatprep.subr.mxu0 0.0
  %320 = vmatpush2.msra.mxu0 0.0
  %321 = vmatprep.subr.mxu0 0.0
  %322 = vmatpush2.msra.mxu0 0.0
  %323 = vmatprep.subr.mxu0 0.0
  %324 = vmatpush2.msra.mxu0 0.0
  %325 = vmatprep.subr.mxu0 0.0
  %326 = vmatpush2.msra.mxu0 0.0
  %327 = vmatprep.subr.mxu0 0.0
  %328 = vmatpush2.msra.mxu0 0.0
  %329 = vmatprep.subr.mxu0 0.0
  %330 = vmatpush2.msra.mxu0 0.0
  %331 = vmatprep.subr.mxu0 0.0
  %332 = vmatpush2.msra.mxu0 0.0
  %333 = vmatprep.subr.mxu0 0.0
  %334 = vmatpush2.msra.mxu0 0.0
  %335 = vmatprep.subr.mxu0 0.0
  %336 = vmatpush2.msra.mxu0 0.0
  %337 = vmatprep.subr.mxu0 0.0
  %338 = vmatpush2.msra.mxu0 0.0
  %339 = vmatprep.subr.mxu0 0.0
  %340 = vmatpush2.msra.mxu0 0.0
  %341 = vmatprep.subr.mxu0 0.0
  %342 = vmatpush2.msra.mxu0 0.0
  %343 = vmatprep.subr.mxu0 0.0
  %344 = vmatpush2.msra.mxu0 0.0
  %345 = vmatprep.subr.mxu0 0.0
  %346 = vmatpush2.msra.mxu0 0.0
  %347 = vmatprep.subr.mxu0 0.0
  %348 = vmatpush2.msra.mxu0 0.0
  %349 = vmatprep.mubr.f32.mxu0 0.0
  %v350 = vand.u32 %v68, 4294901760
  %v351 = vsub.f32 %v68, %v350
  %352 = vmatmul.mubr.f32.gmra.mxu0 %v351
  %v353 = vpop.f32.mrf.mxu0
  %v354 = vadd.f32 %v263, %v353
  %v355 = vpop.f32.mrf.mxu0
  %v356 = vadd.f32 %v265, %v355
  %357 = vmatprep.mubr.f32.mxu0 0.0
  %v358 = vand.u32 %v71, 4294901760
  %v359 = vsub.f32 %v71, %v358
  %360 = vmatmul.mubr.f32.gmra.mxu0 %v359
  %v361 = vpop.f32.mrf.mxu0
  %v362 = vadd.f32 %v270, %v361
  %v363 = vpop.f32.mrf.mxu0
  %v364 = vadd.f32 %v272, %v363
  %365 = vmatprep.mubr.f32.mxu0 0.0
  %v366 = vand.u32 %v74, 4294901760
  %v367 = vsub.f32 %v74, %v366
  %368 = vmatmul.mubr.f32.gmra.mxu0 %v367
  %v369 = vpop.f32.mrf.mxu0
  %v370 = vadd.f32 %v277, %v369
  %v371 = vpop.f32.mrf.mxu0
  %v372 = vadd.f32 %v279, %v371
  %373 = vdwg.mxu0
  %374 = vmatprep.subr.mxu0 0.0
  %375 = vmatpush1.msra.mxu0 0.0
  %376 = vmatprep.subr.mxu0 0.0
  %377 = vmatpush1.msra.mxu0 0.0
  %378 = vmatprep.subr.mxu0 0.0
  %379 = vmatpush1.msra.mxu0 0.0
  %380 = vmatprep.subr.mxu0 0.0
  %381 = vmatpush1.msra.mxu0 0.0
  %382 = vmatprep.subr.mxu0 0.0
  %383 = vmatpush1.msra.mxu0 0.0
  %384 = vmatprep.subr.mxu0 0.0
  %385 = vmatpush1.msra.mxu0 0.0
  %386 = vmatprep.subr.mxu0 0.0
  %387 = vmatpush1.msra.mxu0 0.0
  %388 = vmatprep.subr.mxu0 0.0
  %389 = vmatpush1.msra.mxu0 0.0
  %390 = vmatprep.subr.mxu0 0.0
  %391 = vmatpush1.msra.mxu0 0.0
  %392 = vmatprep.subr.mxu0 0.0
  %393 = vmatpush1.msra.mxu0 0.0
  %394 = vmatprep.subr.mxu0 0.0
  %395 = vmatpush1.msra.mxu0 0.0
  %396 = vmatprep.subr.mxu0 0.0
  %397 = vmatpush1.msra.mxu0 0.0
  %398 = vmatprep.subr.mxu0 0.0
  %399 = vmatpush1.msra.mxu0 0.0
  %400 = vmatprep.subr.mxu0 0.0
  %401 = vmatpush1.msra.mxu0 0.0
  %402 = vmatprep.subr.mxu0 0.0
  %403 = vmatpush1.msra.mxu0 0.0
  %v404 = vand.u32 %v79, 4294901760
  %405 = vmatprep.subr.mxu0 %v404
  %v406 = vand.u32 %v77, 4294901760
  %407 = vmatpush1.msra.mxu0 %v406
  %408 = vmatprep.subr.mxu0 0.0
  %409 = vmatpush2.msra.mxu0 0.0
  %410 = vmatprep.subr.mxu0 0.0
  %411 = vmatpush2.msra.mxu0 0.0
  %412 = vmatprep.subr.mxu0 0.0
  %413 = vmatpush2.msra.mxu0 0.0
  %414 = vmatprep.subr.mxu0 0.0
  %415 = vmatpush2.msra.mxu0 0.0
  %416 = vmatprep.subr.mxu0 0.0
  %417 = vmatpush2.msra.mxu0 0.0
  %418 = vmatprep.subr.mxu0 0.0
  %419 = vmatpush2.msra.mxu0 0.0
  %420 = vmatprep.subr.mxu0 0.0
  %421 = vmatpush2.msra.mxu0 0.0
  %422 = vmatprep.subr.mxu0 0.0
  %423 = vmatpush2.msra.mxu0 0.0
  %424 = vmatprep.subr.mxu0 0.0
  %425 = vmatpush2.msra.mxu0 0.0
  %426 = vmatprep.subr.mxu0 0.0
  %427 = vmatpush2.msra.mxu0 0.0
  %428 = vmatprep.subr.mxu0 0.0
  %429 = vmatpush2.msra.mxu0 0.0
  %430 = vmatprep.subr.mxu0 0.0
  %431 = vmatpush2.msra.mxu0 0.0
  %432 = vmatprep.subr.mxu0 0.0
  %433 = vmatpush2.msra.mxu0 0.0
  %434 = vmatprep.subr.mxu0 0.0
  %435 = vmatpush2.msra.mxu0 0.0
  %436 = vmatprep.subr.mxu0 0.0
  %437 = vmatpush2.msra.mxu0 0.0
  %438 = vmatprep.subr.mxu0 0.0
  %439 = vmatpush2.msra.mxu0 0.0
  %440 = vmatprep.mubr.f32.mxu0 0.0
  %v441 = vand.u32 %v68, 4294901760
  %v442 = vsub.f32 %v68, %v441
  %v443 = vand.u32 %v442, 4294901760
  %444 = vmatmul.mubr.f32.gmra.mxu0 %v443
  %v445 = vpop.f32.mrf.mxu0
  %v446 = vadd.f32 %v354, %v445
  %v447 = vpop.f32.mrf.mxu0
  %v448 = vadd.f32 %v356, %v447
  %449 = vmatprep.mubr.f32.mxu0 0.0
  %v450 = vand.u32 %v71, 4294901760
  %v451 = vsub.f32 %v71, %v450
  %v452 = vand.u32 %v451, 4294901760
  %453 = vmatmul.mubr.f32.gmra.mxu0 %v452
  %v454 = vpop.f32.mrf.mxu0
  %v455 = vadd.f32 %v362, %v454
  %v456 = vpop.f32.mrf.mxu0
  %v457 = vadd.f32 %v364, %v456
  %458 = vmatprep.mubr.f32.mxu0 0.0
  %v459 = vand.u32 %v74, 4294901760
  %v460 = vsub.f32 %v74, %v459
  %v461 = vand.u32 %v460, 4294901760
  %462 = vmatmul.mubr.f32.gmra.mxu0 %v461
  %v463 = vpop.f32.mrf.mxu0
  %v464 = vadd.f32 %v370, %v463
  %v465 = vpop.f32.mrf.mxu0
  %v466 = vadd.f32 %v372, %v465
  %467 = vdwg.mxu0
  %468 = vmatprep.subr.mxu0 0.0
  %469 = vmatpush1.msra.mxu0 0.0
  %470 = vmatprep.subr.mxu0 0.0
  %471 = vmatpush1.msra.mxu0 0.0
  %472 = vmatprep.subr.mxu0 0.0
  %473 = vmatpush1.msra.mxu0 0.0
  %474 = vmatprep.subr.mxu0 0.0
  %475 = vmatpush1.msra.mxu0 0.0
  %476 = vmatprep.subr.mxu0 0.0
  %477 = vmatpush1.msra.mxu0 0.0
  %478 = vmatprep.subr.mxu0 0.0
  %479 = vmatpush1.msra.mxu0 0.0
  %480 = vmatprep.subr.mxu0 0.0
  %481 = vmatpush1.msra.mxu0 0.0
  %482 = vmatprep.subr.mxu0 0.0
  %483 = vmatpush1.msra.mxu0 0.0
  %484 = vmatprep.subr.mxu0 0.0
  %485 = vmatpush1.msra.mxu0 0.0
  %486 = vmatprep.subr.mxu0 0.0
  %487 = vmatpush1.msra.mxu0 0.0
  %488 = vmatprep.subr.mxu0 0.0
  %489 = vmatpush1.msra.mxu0 0.0
  %490 = vmatprep.subr.mxu0 0.0
  %491 = vmatpush1.msra.mxu0 0.0
  %492 = vmatprep.subr.mxu0 0.0
  %493 = vmatpush1.msra.mxu0 0.0
  %494 = vmatprep.subr.mxu0 0.0
  %495 = vmatpush1.msra.mxu0 0.0
  %496 = vmatprep.subr.mxu0 0.0
  %497 = vmatpush1.msra.mxu0 0.0
  %v498 = vand.u32 %v79, 4294901760
  %v499 = vsub.f32 %v79, %v498
  %v500 = vand.u32 %v499, 4294901760
  %501 = vmatprep.subr.mxu0 %v500
  %v502 = vand.u32 %v77, 4294901760
  %v503 = vsub.f32 %v77, %v502
  %v504 = vand.u32 %v503, 4294901760
  %505 = vmatpush1.msra.mxu0 %v504
  %506 = vmatprep.subr.mxu0 0.0
  %507 = vmatpush2.msra.mxu0 0.0
  %508 = vmatprep.subr.mxu0 0.0
  %509 = vmatpush2.msra.mxu0 0.0
  %510 = vmatprep.subr.mxu0 0.0
  %511 = vmatpush2.msra.mxu0 0.0
  %512 = vmatprep.subr.mxu0 0.0
  %513 = vmatpush2.msra.mxu0 0.0
  %514 = vmatprep.subr.mxu0 0.0
  %515 = vmatpush2.msra.mxu0 0.0
  %516 = vmatprep.subr.mxu0 0.0
  %517 = vmatpush2.msra.mxu0 0.0
  %518 = vmatprep.subr.mxu0 0.0
  %519 = vmatpush2.msra.mxu0 0.0
  %520 = vmatprep.subr.mxu0 0.0
  %521 = vmatpush2.msra.mxu0 0.0
  %522 = vmatprep.subr.mxu0 0.0
  %523 = vmatpush2.msra.mxu0 0.0
  %524 = vmatprep.subr.mxu0 0.0
  %525 = vmatpush2.msra.mxu0 0.0
  %526 = vmatprep.subr.mxu0 0.0
  %527 = vmatpush2.msra.mxu0 0.0
  %528 = vmatprep.subr.mxu0 0.0
  %529 = vmatpush2.msra.mxu0 0.0
  %530 = vmatprep.subr.mxu0 0.0
  %531 = vmatpush2.msra.mxu0 0.0
  %532 = vmatprep.subr.mxu0 0.0
  %533 = vmatpush2.msra.mxu0 0.0
  %534 = vmatprep.subr.mxu0 0.0
  %535 = vmatpush2.msra.mxu0 0.0
  %536 = vmatprep.subr.mxu0 0.0
  %537 = vmatpush2.msra.mxu0 0.0
  %538 = vmatprep.mubr.f32.mxu0 0.0
  %v539 = vand.u32 %v68, 4294901760
  %540 = vmatmul.mubr.f32.gmra.mxu0 %v539
  %v541 = vpop.f32.mrf.mxu0
  %v542 = vadd.f32 %v446, %v541
  %v543 = vpop.f32.mrf.mxu0
  %v544 = vadd.f32 %v448, %v543
  %545 = vmatprep.mubr.f32.mxu0 0.0
  %v546 = vand.u32 %v71, 4294901760
  %547 = vmatmul.mubr.f32.gmra.mxu0 %v546
  %v548 = vpop.f32.mrf.mxu0
  %v549 = vadd.f32 %v455, %v548
  %v550 = vpop.f32.mrf.mxu0
  %v551 = vadd.f32 %v457, %v550
  %552 = vmatprep.mubr.f32.mxu0 0.0
  %v553 = vand.u32 %v74, 4294901760
  %554 = vmatmul.mubr.f32.gmra.mxu0 %v553
  %v555 = vpop.f32.mrf.mxu0
  %v556 = vadd.f32 %v464, %v555
  %v557 = vpop.f32.mrf.mxu0
  %v558 = vadd.f32 %v466, %v557
  %559 = vdwg.mxu0
  %560 = vmatprep.subr.mxu0 0.0
  %561 = vmatpush1.msra.mxu0 0.0
  %562 = vmatprep.subr.mxu0 0.0
  %563 = vmatpush1.msra.mxu0 0.0
  %564 = vmatprep.subr.mxu0 0.0
  %565 = vmatpush1.msra.mxu0 0.0
  %566 = vmatprep.subr.mxu0 0.0
  %567 = vmatpush1.msra.mxu0 0.0
  %568 = vmatprep.subr.mxu0 0.0
  %569 = vmatpush1.msra.mxu0 0.0
  %570 = vmatprep.subr.mxu0 0.0
  %571 = vmatpush1.msra.mxu0 0.0
  %572 = vmatprep.subr.mxu0 0.0
  %573 = vmatpush1.msra.mxu0 0.0
  %574 = vmatprep.subr.mxu0 0.0
  %575 = vmatpush1.msra.mxu0 0.0
  %576 = vmatprep.subr.mxu0 0.0
  %577 = vmatpush1.msra.mxu0 0.0
  %578 = vmatprep.subr.mxu0 0.0
  %579 = vmatpush1.msra.mxu0 0.0
  %580 = vmatprep.subr.mxu0 0.0
  %581 = vmatpush1.msra.mxu0 0.0
  %582 = vmatprep.subr.mxu0 0.0
  %583 = vmatpush1.msra.mxu0 0.0
  %584 = vmatprep.subr.mxu0 0.0
  %585 = vmatpush1.msra.mxu0 0.0
  %586 = vmatprep.subr.mxu0 0.0
  %587 = vmatpush1.msra.mxu0 0.0
  %588 = vmatprep.subr.mxu0 0.0
  %589 = vmatpush1.msra.mxu0 0.0
  %v590 = vand.u32 %v79, 4294901760
  %591 = vmatprep.subr.mxu0 %v590
  %v592 = vand.u32 %v77, 4294901760
  %593 = vmatpush1.msra.mxu0 %v592
  %594 = vmatprep.subr.mxu0 0.0
  %595 = vmatpush2.msra.mxu0 0.0
  %596 = vmatprep.subr.mxu0 0.0
  %597 = vmatpush2.msra.mxu0 0.0
  %598 = vmatprep.subr.mxu0 0.0
  %599 = vmatpush2.msra.mxu0 0.0
  %600 = vmatprep.subr.mxu0 0.0
  %601 = vmatpush2.msra.mxu0 0.0
  %602 = vmatprep.subr.mxu0 0.0
  %603 = vmatpush2.msra.mxu0 0.0
  %604 = vmatprep.subr.mxu0 0.0
  %605 = vmatpush2.msra.mxu0 0.0
  %606 = vmatprep.subr.mxu0 0.0
  %607 = vmatpush2.msra.mxu0 0.0
  %608 = vmatprep.subr.mxu0 0.0
  %609 = vmatpush2.msra.mxu0 0.0
  %610 = vmatprep.subr.mxu0 0.0
  %611 = vmatpush2.msra.mxu0 0.0
  %612 = vmatprep.subr.mxu0 0.0
  %613 = vmatpush2.msra.mxu0 0.0
  %614 = vmatprep.subr.mxu0 0.0
  %615 = vmatpush2.msra.mxu0 0.0
  %616 = vmatprep.subr.mxu0 0.0
  %617 = vmatpush2.msra.mxu0 0.0
  %618 = vmatprep.subr.mxu0 0.0
  %619 = vmatpush2.msra.mxu0 0.0
  %620 = vmatprep.subr.mxu0 0.0
  %621 = vmatpush2.msra.mxu0 0.0
  %622 = vmatprep.subr.mxu0 0.0
  %623 = vmatpush2.msra.mxu0 0.0
  %624 = vmatprep.subr.mxu0 0.0
  %625 = vmatpush2.msra.mxu0 0.0
  %626 = vmatprep.mubr.f32.mxu0 0.0
  %v627 = vand.u32 %v68, 4294901760
  %628 = vmatmul.mubr.f32.gmra.mxu0 %v627
  %v629 = vpop.f32.mrf.mxu0
  %v630 = vadd.f32 %v542, %v629
  %v631 = vpop.f32.mrf.mxu0
  %v632 = vadd.f32 %v544, %v631
  %633 = vmatprep.mubr.f32.mxu0 0.0
  %v634 = vand.u32 %v71, 4294901760
  %635 = vmatmul.mubr.f32.gmra.mxu0 %v634
  %v636 = vpop.f32.mrf.mxu0
  %v637 = vadd.f32 %v549, %v636
  %v638 = vpop.f32.mrf.mxu0
  %v639 = vadd.f32 %v551, %v638
  %640 = vmatprep.mubr.f32.mxu0 0.0
  %v641 = vand.u32 %v74, 4294901760
  %642 = vmatmul.mubr.f32.gmra.mxu0 %v641
  %v643 = vpop.f32.mrf.mxu0
  %v644 = vadd.f32 %v556, %v643
  %v645 = vpop.f32.mrf.mxu0
  %v646 = vadd.f32 %v558, %v645
  %647 = vdwg.mxu0
  %648 = vmatprep.subr.mxu0 0.0
  %649 = vmatpush1.msra.mxu0 0.0
  %650 = vmatprep.subr.mxu0 0.0
  %651 = vmatpush1.msra.mxu0 0.0
  %652 = vmatprep.subr.mxu0 0.0
  %653 = vmatpush1.msra.mxu0 0.0
  %654 = vmatprep.subr.mxu0 0.0
  %655 = vmatpush1.msra.mxu0 0.0
  %656 = vmatprep.subr.mxu0 0.0
  %657 = vmatpush1.msra.mxu0 0.0
  %658 = vmatprep.subr.mxu0 0.0
  %659 = vmatpush1.msra.mxu0 0.0
  %660 = vmatprep.subr.mxu0 0.0
  %661 = vmatpush1.msra.mxu0 0.0
  %662 = vmatprep.subr.mxu0 0.0
  %663 = vmatpush1.msra.mxu0 0.0
  %664 = vmatprep.subr.mxu0 0.0
  %665 = vmatpush1.msra.mxu0 0.0
  %666 = vmatprep.subr.mxu0 0.0
  %667 = vmatpush1.msra.mxu0 0.0
  %668 = vmatprep.subr.mxu0 0.0
  %669 = vmatpush1.msra.mxu0 0.0
  %670 = vmatprep.subr.mxu0 0.0
  %671 = vmatpush1.msra.mxu0 0.0
  %672 = vmatprep.subr.mxu0 0.0
  %673 = vmatpush1.msra.mxu0 0.0
  %674 = vmatprep.subr.mxu0 0.0
  %675 = vmatpush1.msra.mxu0 0.0
  %676 = vmatprep.subr.mxu0 0.0
  %677 = vmatpush1.msra.mxu0 0.0
  %v678 = vand.u32 %v83, 4294901760
  %679 = vmatprep.subr.mxu0 %v678
  %v680 = vand.u32 %v81, 4294901760
  %681 = vmatpush1.msra.mxu0 %v680
  %682 = vmatprep.subr.mxu0 0.0
  %683 = vmatpush2.msra.mxu0 0.0
  %684 = vmatprep.subr.mxu0 0.0
  %685 = vmatpush2.msra.mxu0 0.0
  %686 = vmatprep.subr.mxu0 0.0
  %687 = vmatpush2.msra.mxu0 0.0
  %688 = vmatprep.subr.mxu0 0.0
  %689 = vmatpush2.msra.mxu0 0.0
  %690 = vmatprep.subr.mxu0 0.0
  %691 = vmatpush2.msra.mxu0 0.0
  %692 = vmatprep.subr.mxu0 0.0
  %693 = vmatpush2.msra.mxu0 0.0
  %694 = vmatprep.subr.mxu0 0.0
  %695 = vmatpush2.msra.mxu0 0.0
  %696 = vmatprep.subr.mxu0 0.0
  %697 = vmatpush2.msra.mxu0 0.0
  %698 = vmatprep.subr.mxu0 0.0
  %699 = vmatpush2.msra.mxu0 0.0
  %700 = vmatprep.subr.mxu0 0.0
  %701 = vmatpush2.msra.mxu0 0.0
  %702 = vmatprep.subr.mxu0 0.0
  %703 = vmatpush2.msra.mxu0 0.0
  %704 = vmatprep.subr.mxu0 0.0
  %705 = vmatpush2.msra.mxu0 0.0
  %706 = vmatprep.subr.mxu0 0.0
  %707 = vmatpush2.msra.mxu0 0.0
  %708 = vmatprep.subr.mxu0 0.0
  %709 = vmatpush2.msra.mxu0 0.0
  %710 = vmatprep.subr.mxu0 0.0
  %711 = vmatpush2.msra.mxu0 0.0
  %712 = vmatprep.subr.mxu0 0.0
  %713 = vmatpush2.msra.mxu0 0.0
  %714 = vmatprep.mubr.f32.mxu0 0.0
  %v715 = vand.u32 %v68, 4294901760
  %v716 = vsub.f32 %v68, %v715
  %v717 = vand.u32 %v716, 4294901760
  %v718 = vsub.f32 %v716, %v717
  %v719 = vand.u32 %v718, 4294901760
  %720 = vmatmul.mubr.f32.gmra.mxu0 %v719
  %v721 = vpop.f32.mrf.mxu0
  %v722 = vadd.f32 %v36, %v721
  %v723 = vpop.f32.mrf.mxu0
  %v724 = vadd.f32 %v36, %v723
  %725 = vmatprep.mubr.f32.mxu0 0.0
  %v726 = vand.u32 %v71, 4294901760
  %v727 = vsub.f32 %v71, %v726
  %v728 = vand.u32 %v727, 4294901760
  %v729 = vsub.f32 %v727, %v728
  %v730 = vand.u32 %v729, 4294901760
  %731 = vmatmul.mubr.f32.gmra.mxu0 %v730
  %v732 = vpop.f32.mrf.mxu0
  %v733 = vadd.f32 %v41, %v732
  %v734 = vpop.f32.mrf.mxu0
  %v735 = vadd.f32 %v41, %v734
  %736 = vmatprep.mubr.f32.mxu0 0.0
  %v737 = vand.u32 %v74, 4294901760
  %v738 = vsub.f32 %v74, %v737
  %v739 = vand.u32 %v738, 4294901760
  %v740 = vsub.f32 %v738, %v739
  %v741 = vand.u32 %v740, 4294901760
  %742 = vmatmul.mubr.f32.gmra.mxu0 %v741
  %v743 = vpop.f32.mrf.mxu0
  %v744 = vadd.f32 %v46, %v743
  %v745 = vpop.f32.mrf.mxu0
  %v746 = vadd.f32 %v46, %v745
  %747 = vdwg.mxu0
  %748 = vmatprep.subr.mxu0 0.0
  %749 = vmatpush1.msra.mxu0 0.0
  %750 = vmatprep.subr.mxu0 0.0
  %751 = vmatpush1.msra.mxu0 0.0
  %752 = vmatprep.subr.mxu0 0.0
  %753 = vmatpush1.msra.mxu0 0.0
  %754 = vmatprep.subr.mxu0 0.0
  %755 = vmatpush1.msra.mxu0 0.0
  %756 = vmatprep.subr.mxu0 0.0
  %757 = vmatpush1.msra.mxu0 0.0
  %758 = vmatprep.subr.mxu0 0.0
  %759 = vmatpush1.msra.mxu0 0.0
  %760 = vmatprep.subr.mxu0 0.0
  %761 = vmatpush1.msra.mxu0 0.0
  %762 = vmatprep.subr.mxu0 0.0
  %763 = vmatpush1.msra.mxu0 0.0
  %764 = vmatprep.subr.mxu0 0.0
  %765 = vmatpush1.msra.mxu0 0.0
  %766 = vmatprep.subr.mxu0 0.0
  %767 = vmatpush1.msra.mxu0 0.0
  %768 = vmatprep.subr.mxu0 0.0
  %769 = vmatpush1.msra.mxu0 0.0
  %770 = vmatprep.subr.mxu0 0.0
  %771 = vmatpush1.msra.mxu0 0.0
  %772 = vmatprep.subr.mxu0 0.0
  %773 = vmatpush1.msra.mxu0 0.0
  %774 = vmatprep.subr.mxu0 0.0
  %775 = vmatpush1.msra.mxu0 0.0
  %776 = vmatprep.subr.mxu0 0.0
  %777 = vmatpush1.msra.mxu0 0.0
  %v778 = vand.u32 %v83, 4294901760
  %v779 = vsub.f32 %v83, %v778
  %v780 = vand.u32 %v779, 4294901760
  %v781 = vsub.f32 %v779, %v780
  %v782 = vand.u32 %v781, 4294901760
  %783 = vmatprep.subr.mxu0 %v782
  %v784 = vand.u32 %v81, 4294901760
  %v785 = vsub.f32 %v81, %v784
  %v786 = vand.u32 %v785, 4294901760
  %v787 = vsub.f32 %v785, %v786
  %v788 = vand.u32 %v787, 4294901760
  %789 = vmatpush1.msra.mxu0 %v788
  %790 = vmatprep.subr.mxu0 0.0
  %791 = vmatpush2.msra.mxu0 0.0
  %792 = vmatprep.subr.mxu0 0.0
  %793 = vmatpush2.msra.mxu0 0.0
  %794 = vmatprep.subr.mxu0 0.0
  %795 = vmatpush2.msra.mxu0 0.0
  %796 = vmatprep.subr.mxu0 0.0
  %797 = vmatpush2.msra.mxu0 0.0
  %798 = vmatprep.subr.mxu0 0.0
  %799 = vmatpush2.msra.mxu0 0.0
  %800 = vmatprep.subr.mxu0 0.0
  %801 = vmatpush2.msra.mxu0 0.0
  %802 = vmatprep.subr.mxu0 0.0
  %803 = vmatpush2.msra.mxu0 0.0
  %804 = vmatprep.subr.mxu0 0.0
  %805 = vmatpush2.msra.mxu0 0.0
  %806 = vmatprep.subr.mxu0 0.0
  %807 = vmatpush2.msra.mxu0 0.0
  %808 = vmatprep.subr.mxu0 0.0
  %809 = vmatpush2.msra.mxu0 0.0
  %810 = vmatprep.subr.mxu0 0.0
  %811 = vmatpush2.msra.mxu0 0.0
  %812 = vmatprep.subr.mxu0 0.0
  %813 = vmatpush2.msra.mxu0 0.0
  %814 = vmatprep.subr.mxu0 0.0
  %815 = vmatpush2.msra.mxu0 0.0
  %816 = vmatprep.subr.mxu0 0.0
  %817 = vmatpush2.msra.mxu0 0.0
  %818 = vmatprep.subr.mxu0 0.0
  %819 = vmatpush2.msra.mxu0 0.0
  %820 = vmatprep.subr.mxu0 0.0
  %821 = vmatpush2.msra.mxu0 0.0
  %822 = vmatprep.mubr.f32.mxu0 0.0
  %v823 = vand.u32 %v68, 4294901760
  %824 = vmatmul.mubr.f32.gmra.mxu0 %v823
  %v825 = vpop.f32.mrf.mxu0
  %v826 = vadd.f32 %v722, %v825
  %v827 = vpop.f32.mrf.mxu0
  %v828 = vadd.f32 %v724, %v827
  %829 = vmatprep.mubr.f32.mxu0 0.0
  %v830 = vand.u32 %v71, 4294901760
  %831 = vmatmul.mubr.f32.gmra.mxu0 %v830
  %v832 = vpop.f32.mrf.mxu0
  %v833 = vadd.f32 %v733, %v832
  %v834 = vpop.f32.mrf.mxu0
  %v835 = vadd.f32 %v735, %v834
  %836 = vmatprep.mubr.f32.mxu0 0.0
  %v837 = vand.u32 %v74, 4294901760
  %838 = vmatmul.mubr.f32.gmra.mxu0 %v837
  %v839 = vpop.f32.mrf.mxu0
  %v840 = vadd.f32 %v744, %v839
  %v841 = vpop.f32.mrf.mxu0
  %v842 = vadd.f32 %v746, %v841
  %843 = vdwg.mxu0
  %844 = vmatprep.subr.mxu0 0.0
  %845 = vmatpush1.msra.mxu0 0.0
  %846 = vmatprep.subr.mxu0 0.0
  %847 = vmatpush1.msra.mxu0 0.0
  %848 = vmatprep.subr.mxu0 0.0
  %849 = vmatpush1.msra.mxu0 0.0
  %850 = vmatprep.subr.mxu0 0.0
  %851 = vmatpush1.msra.mxu0 0.0
  %852 = vmatprep.subr.mxu0 0.0
  %853 = vmatpush1.msra.mxu0 0.0
  %854 = vmatprep.subr.mxu0 0.0
  %855 = vmatpush1.msra.mxu0 0.0
  %856 = vmatprep.subr.mxu0 0.0
  %857 = vmatpush1.msra.mxu0 0.0
  %858 = vmatprep.subr.mxu0 0.0
  %859 = vmatpush1.msra.mxu0 0.0
  %860 = vmatprep.subr.mxu0 0.0
  %861 = vmatpush1.msra.mxu0 0.0
  %862 = vmatprep.subr.mxu0 0.0
  %863 = vmatpush1.msra.mxu0 0.0
  %864 = vmatprep.subr.mxu0 0.0
  %865 = vmatpush1.msra.mxu0 0.0
  %866 = vmatprep.subr.mxu0 0.0
  %867 = vmatpush1.msra.mxu0 0.0
  %868 = vmatprep.subr.mxu0 0.0
  %869 = vmatpush1.msra.mxu0 0.0
  %870 = vmatprep.subr.mxu0 0.0
  %871 = vmatpush1.msra.mxu0 0.0
  %872 = vmatprep.subr.mxu0 0.0
  %873 = vmatpush1.msra.mxu0 0.0
  %v874 = vand.u32 %v83, 4294901760
  %v875 = vsub.f32 %v83, %v874
  %876 = vmatprep.subr.mxu0 %v875
  %v877 = vand.u32 %v81, 4294901760
  %v878 = vsub.f32 %v81, %v877
  %879 = vmatpush1.msra.mxu0 %v878
  %880 = vmatprep.subr.mxu0 0.0
  %881 = vmatpush2.msra.mxu0 0.0
  %882 = vmatprep.subr.mxu0 0.0
  %883 = vmatpush2.msra.mxu0 0.0
  %884 = vmatprep.subr.mxu0 0.0
  %885 = vmatpush2.msra.mxu0 0.0
  %886 = vmatprep.subr.mxu0 0.0
  %887 = vmatpush2.msra.mxu0 0.0
  %888 = vmatprep.subr.mxu0 0.0
  %889 = vmatpush2.msra.mxu0 0.0
  %890 = vmatprep.subr.mxu0 0.0
  %891 = vmatpush2.msra.mxu0 0.0
  %892 = vmatprep.subr.mxu0 0.0
  %893 = vmatpush2.msra.mxu0 0.0
  %894 = vmatprep.subr.mxu0 0.0
  %895 = vmatpush2.msra.mxu0 0.0
  %896 = vmatprep.subr.mxu0 0.0
  %897 = vmatpush2.msra.mxu0 0.0
  %898 = vmatprep.subr.mxu0 0.0
  %899 = vmatpush2.msra.mxu0 0.0
  %900 = vmatprep.subr.mxu0 0.0
  %901 = vmatpush2.msra.mxu0 0.0
  %902 = vmatprep.subr.mxu0 0.0
  %903 = vmatpush2.msra.mxu0 0.0
  %904 = vmatprep.subr.mxu0 0.0
  %905 = vmatpush2.msra.mxu0 0.0
  %906 = vmatprep.subr.mxu0 0.0
  %907 = vmatpush2.msra.mxu0 0.0
  %908 = vmatprep.subr.mxu0 0.0
  %909 = vmatpush2.msra.mxu0 0.0
  %910 = vmatprep.subr.mxu0 0.0
  %911 = vmatpush2.msra.mxu0 0.0
  %912 = vmatprep.mubr.f32.mxu0 0.0
  %v913 = vand.u32 %v68, 4294901760
  %v914 = vsub.f32 %v68, %v913
  %915 = vmatmul.mubr.f32.gmra.mxu0 %v914
  %v916 = vpop.f32.mrf.mxu0
  %v917 = vadd.f32 %v826, %v916
  %v918 = vpop.f32.mrf.mxu0
  %v919 = vadd.f32 %v828, %v918
  %920 = vmatprep.mubr.f32.mxu0 0.0
  %v921 = vand.u32 %v71, 4294901760
  %v922 = vsub.f32 %v71, %v921
  %923 = vmatmul.mubr.f32.gmra.mxu0 %v922
  %v924 = vpop.f32.mrf.mxu0
  %v925 = vadd.f32 %v833, %v924
  %v926 = vpop.f32.mrf.mxu0
  %v927 = vadd.f32 %v835, %v926
  %928 = vmatprep.mubr.f32.mxu0 0.0
  %v929 = vand.u32 %v74, 4294901760
  %v930 = vsub.f32 %v74, %v929
  %931 = vmatmul.mubr.f32.gmra.mxu0 %v930
  %v932 = vpop.f32.mrf.mxu0
  %v933 = vadd.f32 %v840, %v932
  %v934 = vpop.f32.mrf.mxu0
  %v935 = vadd.f32 %v842, %v934
  %936 = vdwg.mxu0
  %937 = vmatprep.subr.mxu0 0.0
  %938 = vmatpush1.msra.mxu0 0.0
  %939 = vmatprep.subr.mxu0 0.0
  %940 = vmatpush1.msra.mxu0 0.0
  %941 = vmatprep.subr.mxu0 0.0
  %942 = vmatpush1.msra.mxu0 0.0
  %943 = vmatprep.subr.mxu0 0.0
  %944 = vmatpush1.msra.mxu0 0.0
  %945 = vmatprep.subr.mxu0 0.0
  %946 = vmatpush1.msra.mxu0 0.0
  %947 = vmatprep.subr.mxu0 0.0
  %948 = vmatpush1.msra.mxu0 0.0
  %949 = vmatprep.subr.mxu0 0.0
  %950 = vmatpush1.msra.mxu0 0.0
  %951 = vmatprep.subr.mxu0 0.0
  %952 = vmatpush1.msra.mxu0 0.0
  %953 = vmatprep.subr.mxu0 0.0
  %954 = vmatpush1.msra.mxu0 0.0
  %955 = vmatprep.subr.mxu0 0.0
  %956 = vmatpush1.msra.mxu0 0.0
  %957 = vmatprep.subr.mxu0 0.0
  %958 = vmatpush1.msra.mxu0 0.0
  %959 = vmatprep.subr.mxu0 0.0
  %960 = vmatpush1.msra.mxu0 0.0
  %961 = vmatprep.subr.mxu0 0.0
  %962 = vmatpush1.msra.mxu0 0.0
  %963 = vmatprep.subr.mxu0 0.0
  %964 = vmatpush1.msra.mxu0 0.0
  %965 = vmatprep.subr.mxu0 0.0
  %966 = vmatpush1.msra.mxu0 0.0
  %v967 = vand.u32 %v83, 4294901760
  %968 = vmatprep.subr.mxu0 %v967
  %v969 = vand.u32 %v81, 4294901760
  %970 = vmatpush1.msra.mxu0 %v969
  %971 = vmatprep.subr.mxu0 0.0
  %972 = vmatpush2.msra.mxu0 0.0
  %973 = vmatprep.subr.mxu0 0.0
  %974 = vmatpush2.msra.mxu0 0.0
  %975 = vmatprep.subr.mxu0 0.0
  %976 = vmatpush2.msra.mxu0 0.0
  %977 = vmatprep.subr.mxu0 0.0
  %978 = vmatpush2.msra.mxu0 0.0
  %979 = vmatprep.subr.mxu0 0.0
  %980 = vmatpush2.msra.mxu0 0.0
  %981 = vmatprep.subr.mxu0 0.0
  %982 = vmatpush2.msra.mxu0 0.0
  %983 = vmatprep.subr.mxu0 0.0
  %984 = vmatpush2.msra.mxu0 0.0
  %985 = vmatprep.subr.mxu0 0.0
  %986 = vmatpush2.msra.mxu0 0.0
  %987 = vmatprep.subr.mxu0 0.0
  %988 = vmatpush2.msra.mxu0 0.0
  %989 = vmatprep.subr.mxu0 0.0
  %990 = vmatpush2.msra.mxu0 0.0
  %991 = vmatprep.subr.mxu0 0.0
  %992 = vmatpush2.msra.mxu0 0.0
  %993 = vmatprep.subr.mxu0 0.0
  %994 = vmatpush2.msra.mxu0 0.0
  %995 = vmatprep.subr.mxu0 0.0
  %996 = vmatpush2.msra.mxu0 0.0
  %997 = vmatprep.subr.mxu0 0.0
  %998 = vmatpush2.msra.mxu0 0.0
  %999 = vmatprep.subr.mxu0 0.0
  %1000 = vmatpush2.msra.mxu0 0.0
  %1001 = vmatprep.subr.mxu0 0.0
  %1002 = vmatpush2.msra.mxu0 0.0
  %1003 = vmatprep.mubr.f32.mxu0 0.0
  %v1004 = vand.u32 %v68, 4294901760
  %v1005 = vsub.f32 %v68, %v1004
  %v1006 = vand.u32 %v1005, 4294901760
  %1007 = vmatmul.mubr.f32.gmra.mxu0 %v1006
  %v1008 = vpop.f32.mrf.mxu0
  %v1009 = vadd.f32 %v917, %v1008
  %v1010 = vpop.f32.mrf.mxu0
  %v1011 = vadd.f32 %v919, %v1010
  %1012 = vmatprep.mubr.f32.mxu0 0.0
  %v1013 = vand.u32 %v71, 4294901760
  %v1014 = vsub.f32 %v71, %v1013
  %v1015 = vand.u32 %v1014, 4294901760
  %1016 = vmatmul.mubr.f32.gmra.mxu0 %v1015
  %v1017 = vpop.f32.mrf.mxu0
  %v1018 = vadd.f32 %v925, %v1017
  %v1019 = vpop.f32.mrf.mxu0
  %v1020 = vadd.f32 %v927, %v1019
  %1021 = vmatprep.mubr.f32.mxu0 0.0
  %v1022 = vand.u32 %v74, 4294901760
  %v1023 = vsub.f32 %v74, %v1022
  %v1024 = vand.u32 %v1023, 4294901760
  %1025 = vmatmul.mubr.f32.gmra.mxu0 %v1024
  %v1026 = vpop.f32.mrf.mxu0
  %v1027 = vadd.f32 %v933, %v1026
  %v1028 = vpop.f32.mrf.mxu0
  %v1029 = vadd.f32 %v935, %v1028
  %1030 = vdwg.mxu0
  %1031 = vmatprep.subr.mxu0 0.0
  %1032 = vmatpush1.msra.mxu0 0.0
  %1033 = vmatprep.subr.mxu0 0.0
  %1034 = vmatpush1.msra.mxu0 0.0
  %1035 = vmatprep.subr.mxu0 0.0
  %1036 = vmatpush1.msra.mxu0 0.0
  %1037 = vmatprep.subr.mxu0 0.0
  %1038 = vmatpush1.msra.mxu0 0.0
  %1039 = vmatprep.subr.mxu0 0.0
  %1040 = vmatpush1.msra.mxu0 0.0
  %1041 = vmatprep.subr.mxu0 0.0
  %1042 = vmatpush1.msra.mxu0 0.0
  %1043 = vmatprep.subr.mxu0 0.0
  %1044 = vmatpush1.msra.mxu0 0.0
  %1045 = vmatprep.subr.mxu0 0.0
  %1046 = vmatpush1.msra.mxu0 0.0
  %1047 = vmatprep.subr.mxu0 0.0
  %1048 = vmatpush1.msra.mxu0 0.0
  %1049 = vmatprep.subr.mxu0 0.0
  %1050 = vmatpush1.msra.mxu0 0.0
  %1051 = vmatprep.subr.mxu0 0.0
  %1052 = vmatpush1.msra.mxu0 0.0
  %1053 = vmatprep.subr.mxu0 0.0
  %1054 = vmatpush1.msra.mxu0 0.0
  %1055 = vmatprep.subr.mxu0 0.0
  %1056 = vmatpush1.msra.mxu0 0.0
  %1057 = vmatprep.subr.mxu0 0.0
  %1058 = vmatpush1.msra.mxu0 0.0
  %1059 = vmatprep.subr.mxu0 0.0
  %1060 = vmatpush1.msra.mxu0 0.0
  %v1061 = vand.u32 %v83, 4294901760
  %v1062 = vsub.f32 %v83, %v1061
  %v1063 = vand.u32 %v1062, 4294901760
  %1064 = vmatprep.subr.mxu0 %v1063
  %v1065 = vand.u32 %v81, 4294901760
  %v1066 = vsub.f32 %v81, %v1065
  %v1067 = vand.u32 %v1066, 4294901760
  %1068 = vmatpush1.msra.mxu0 %v1067
  %1069 = vmatprep.subr.mxu0 0.0
  %1070 = vmatpush2.msra.mxu0 0.0
  %1071 = vmatprep.subr.mxu0 0.0
  %1072 = vmatpush2.msra.mxu0 0.0
  %1073 = vmatprep.subr.mxu0 0.0
  %1074 = vmatpush2.msra.mxu0 0.0
  %1075 = vmatprep.subr.mxu0 0.0
  %1076 = vmatpush2.msra.mxu0 0.0
  %1077 = vmatprep.subr.mxu0 0.0
  %1078 = vmatpush2.msra.mxu0 0.0
  %1079 = vmatprep.subr.mxu0 0.0
  %1080 = vmatpush2.msra.mxu0 0.0
  %1081 = vmatprep.subr.mxu0 0.0
  %1082 = vmatpush2.msra.mxu0 0.0
  %1083 = vmatprep.subr.mxu0 0.0
  %1084 = vmatpush2.msra.mxu0 0.0
  %1085 = vmatprep.subr.mxu0 0.0
  %1086 = vmatpush2.msra.mxu0 0.0
  %1087 = vmatprep.subr.mxu0 0.0
  %1088 = vmatpush2.msra.mxu0 0.0
  %1089 = vmatprep.subr.mxu0 0.0
  %1090 = vmatpush2.msra.mxu0 0.0
  %1091 = vmatprep.subr.mxu0 0.0
  %1092 = vmatpush2.msra.mxu0 0.0
  %1093 = vmatprep.subr.mxu0 0.0
  %1094 = vmatpush2.msra.mxu0 0.0
  %1095 = vmatprep.subr.mxu0 0.0
  %1096 = vmatpush2.msra.mxu0 0.0
  %1097 = vmatprep.subr.mxu0 0.0
  %1098 = vmatpush2.msra.mxu0 0.0
  %1099 = vmatprep.subr.mxu0 0.0
  %1100 = vmatpush2.msra.mxu0 0.0
  %1101 = vmatprep.mubr.f32.mxu0 0.0
  %v1102 = vand.u32 %v68, 4294901760
  %1103 = vmatmul.mubr.f32.gmra.mxu0 %v1102
  %v1104 = vpop.f32.mrf.mxu0
  %v1105 = vadd.f32 %v1009, %v1104
  %v1106 = vpop.f32.mrf.mxu0
  %v1107 = vadd.f32 %v1011, %v1106
  %1108 = vmatprep.mubr.f32.mxu0 0.0
  %v1109 = vand.u32 %v71, 4294901760
  %1110 = vmatmul.mubr.f32.gmra.mxu0 %v1109
  %v1111 = vpop.f32.mrf.mxu0
  %v1112 = vadd.f32 %v1018, %v1111
  %v1113 = vpop.f32.mrf.mxu0
  %v1114 = vadd.f32 %v1020, %v1113
  %1115 = vmatprep.mubr.f32.mxu0 0.0
  %v1116 = vand.u32 %v74, 4294901760
  %1117 = vmatmul.mubr.f32.gmra.mxu0 %v1116
  %v1118 = vpop.f32.mrf.mxu0
  %v1119 = vadd.f32 %v1027, %v1118
  %v1120 = vpop.f32.mrf.mxu0
  %v1121 = vadd.f32 %v1029, %v1120
  %1122 = vdwg.mxu0
  %1123 = vmatprep.subr.mxu0 0.0
  %1124 = vmatpush1.msra.mxu0 0.0
  %1125 = vmatprep.subr.mxu0 0.0
  %1126 = vmatpush1.msra.mxu0 0.0
  %1127 = vmatprep.subr.mxu0 0.0
  %1128 = vmatpush1.msra.mxu0 0.0
  %1129 = vmatprep.subr.mxu0 0.0
  %1130 = vmatpush1.msra.mxu0 0.0
  %1131 = vmatprep.subr.mxu0 0.0
  %1132 = vmatpush1.msra.mxu0 0.0
  %1133 = vmatprep.subr.mxu0 0.0
  %1134 = vmatpush1.msra.mxu0 0.0
  %1135 = vmatprep.subr.mxu0 0.0
  %1136 = vmatpush1.msra.mxu0 0.0
  %1137 = vmatprep.subr.mxu0 0.0
  %1138 = vmatpush1.msra.mxu0 0.0
  %1139 = vmatprep.subr.mxu0 0.0
  %1140 = vmatpush1.msra.mxu0 0.0
  %1141 = vmatprep.subr.mxu0 0.0
  %1142 = vmatpush1.msra.mxu0 0.0
  %1143 = vmatprep.subr.mxu0 0.0
  %1144 = vmatpush1.msra.mxu0 0.0
  %1145 = vmatprep.subr.mxu0 0.0
  %1146 = vmatpush1.msra.mxu0 0.0
  %1147 = vmatprep.subr.mxu0 0.0
  %1148 = vmatpush1.msra.mxu0 0.0
  %1149 = vmatprep.subr.mxu0 0.0
  %1150 = vmatpush1.msra.mxu0 0.0
  %1151 = vmatprep.subr.mxu0 0.0
  %1152 = vmatpush1.msra.mxu0 0.0
  %v1153 = vand.u32 %v83, 4294901760
  %1154 = vmatprep.subr.mxu0 %v1153
  %v1155 = vand.u32 %v81, 4294901760
  %1156 = vmatpush1.msra.mxu0 %v1155
  %1157 = vmatprep.subr.mxu0 0.0
  %1158 = vmatpush2.msra.mxu0 0.0
  %1159 = vmatprep.subr.mxu0 0.0
  %1160 = vmatpush2.msra.mxu0 0.0
  %1161 = vmatprep.subr.mxu0 0.0
  %1162 = vmatpush2.msra.mxu0 0.0
  %1163 = vmatprep.subr.mxu0 0.0
  %1164 = vmatpush2.msra.mxu0 0.0
  %1165 = vmatprep.subr.mxu0 0.0
  %1166 = vmatpush2.msra.mxu0 0.0
  %1167 = vmatprep.subr.mxu0 0.0
  %1168 = vmatpush2.msra.mxu0 0.0
  %1169 = vmatprep.subr.mxu0 0.0
  %1170 = vmatpush2.msra.mxu0 0.0
  %1171 = vmatprep.subr.mxu0 0.0
  %1172 = vmatpush2.msra.mxu0 0.0
  %1173 = vmatprep.subr.mxu0 0.0
  %1174 = vmatpush2.msra.mxu0 0.0
  %1175 = vmatprep.subr.mxu0 0.0
  %1176 = vmatpush2.msra.mxu0 0.0
  %1177 = vmatprep.subr.mxu0 0.0
  %1178 = vmatpush2.msra.mxu0 0.0
  %1179 = vmatprep.subr.mxu0 0.0
  %1180 = vmatpush2.msra.mxu0 0.0
  %1181 = vmatprep.subr.mxu0 0.0
  %1182 = vmatpush2.msra.mxu0 0.0
  %1183 = vmatprep.subr.mxu0 0.0
  %1184 = vmatpush2.msra.mxu0 0.0
  %1185 = vmatprep.subr.mxu0 0.0
  %1186 = vmatpush2.msra.mxu0 0.0
  %1187 = vmatprep.subr.mxu0 0.0
  %1188 = vmatpush2.msra.mxu0 0.0
  %1189 = vmatprep.mubr.f32.mxu0 0.0
  %v1190 = vand.u32 %v68, 4294901760
  %1191 = vmatmul.mubr.f32.gmra.mxu0 %v1190
  %v1192 = vpop.f32.mrf.mxu0
  %v1193 = vadd.f32 %v1105, %v1192
  %v1194 = vpop.f32.mrf.mxu0
  %v1195 = vadd.f32 %v1107, %v1194
  %1196 = vmatprep.mubr.f32.mxu0 0.0
  %v1197 = vand.u32 %v71, 4294901760
  %1198 = vmatmul.mubr.f32.gmra.mxu0 %v1197
  %v1199 = vpop.f32.mrf.mxu0
  %v1200 = vadd.f32 %v1112, %v1199
  %v1201 = vpop.f32.mrf.mxu0
  %v1202 = vadd.f32 %v1114, %v1201
  %1203 = vmatprep.mubr.f32.mxu0 0.0
  %v1204 = vand.u32 %v74, 4294901760
  %1205 = vmatmul.mubr.f32.gmra.mxu0 %v1204
  %v1206 = vpop.f32.mrf.mxu0
  %v1207 = vadd.f32 %v1119, %v1206
  %v1208 = vpop.f32.mrf.mxu0
  %v1209 = vadd.f32 %v1121, %v1208
  %1210 = vdwg.mxu0
  %v1211 = vmax.f32 %v630, 0.0
  %v1212 = vmax.f32 %v632, 0.0
  %v1213 = vmax.f32 %v1193, 0.0
  %v1214 = vmax.f32 %v1195, 0.0
  %v1215 = vmax.f32 %v637, 0.0
  %v1216 = vmax.f32 %v639, 0.0
  %v1217 = vmax.f32 %v1200, 0.0
  %v1218 = vmax.f32 %v1202, 0.0
  %v1219 = vmax.f32 %v644, 0.0
  %v1220 = vmax.f32 %v646, 0.0
  %v1221 = vmax.f32 %v1207, 0.0
  %v1222 = vmax.f32 %v1209, 0.0
  %v1223 = vmin.f32 %v630, 0.0
  %v1224 = vmin.f32 %v632, 0.0
  %v1225 = vmin.f32 %v1193, 0.0
  %v1226 = vmin.f32 %v1195, 0.0
  %v1227 = vmin.f32 %v637, 0.0
  %v1228 = vmin.f32 %v639, 0.0
  %v1229 = vmin.f32 %v1200, 0.0
  %v1230 = vmin.f32 %v1202, 0.0
  %v1231 = vmin.f32 %v644, 0.0
  %v1232 = vmin.f32 %v646, 0.0
  %v1233 = vmin.f32 %v1207, 0.0
  %v1234 = vmin.f32 %v1209, 0.0
  %v1235 = vmul.f32 %v1223, 1.442695
  %v1236 = vpow.pop %v1235
  %v1237 = vmul.f32 %v1224, 1.442695
  %v1238 = vpow.pop %v1237
  %v1239 = vmul.f32 %v1225, 1.442695
  %v1240 = vpow.pop %v1239
  %v1241 = vmul.f32 %v1226, 1.442695
  %v1242 = vpow.pop %v1241
  %v1243 = vmul.f32 %v1227, 1.442695
  %v1244 = vpow.pop %v1243
  %v1245 = vmul.f32 %v1228, 1.442695
  %v1246 = vpow.pop %v1245
  %v1247 = vmul.f32 %v1229, 1.442695
  %v1248 = vpow.pop %v1247
  %v1249 = vmul.f32 %v1230, 1.442695
  %v1250 = vpow.pop %v1249
  %v1251 = vmul.f32 %v1231, 1.442695
  %v1252 = vpow.pop %v1251
  %v1253 = vmul.f32 %v1232, 1.442695
  %v1254 = vpow.pop %v1253
  %v1255 = vmul.f32 %v1233, 1.442695
  %v1256 = vpow.pop %v1255
  %v1257 = vmul.f32 %v1234, 1.442695
  %v1258 = vpow.pop %v1257
  %v1259 = vsub.f32 %v1236, 1.0
  %v1260 = vsub.f32 %v1238, 1.0
  %v1261 = vsub.f32 %v1240, 1.0
  %v1262 = vsub.f32 %v1242, 1.0
  %v1263 = vsub.f32 %v1244, 1.0
  %v1264 = vsub.f32 %v1246, 1.0
  %v1265 = vsub.f32 %v1248, 1.0
  %v1266 = vsub.f32 %v1250, 1.0
  %v1267 = vsub.f32 %v1252, 1.0
  %v1268 = vsub.f32 %v1254, 1.0
  %v1269 = vsub.f32 %v1256, 1.0
  %v1270 = vsub.f32 %v1258, 1.0
  %v1271 = vadd.f32 %v1211, %v1259
  %v1272 = vadd.f32 %v1212, %v1260
  %v1273 = vadd.f32 %v1213, %v1261
  %v1274 = vadd.f32 %v1214, %v1262
  %v1275 = vadd.f32 %v1215, %v1263
  %v1276 = vadd.f32 %v1216, %v1264
  %v1277 = vadd.f32 %v1217, %v1265
  %v1278 = vadd.f32 %v1218, %v1266
  %v1279 = vadd.f32 %v1219, %v1267
  %v1280 = vadd.f32 %v1220, %v1268
  %v1281 = vadd.f32 %v1221, %v1269
  %v1282 = vadd.f32 %v1222, %v1270
  %v1283 = vld [vmem:[%s2] sm:$0xff]
  %v1284 = vld [vmem:[%s2 + $0x8] sm:$0xff]
  %v1285 = vld [vmem:[%s2 + $0x10] sm:$0xff]
  %v1286 = vld [vmem:[%s5] sm:$0xff]
  %v1287 = vld [vmem:[%s5 + $0x8] sm:$0xff]
  %v1288 = vld [vmem:[%s5 + $0x10] sm:$0xff]
  %1290 = vset.pattern.permute.xlu0 0
  %1291 = vperm.xlu0 %1290, %v1286
  %v1292 = vpop.permute.xlu0 %1291
  %1295 = vset.pattern.permute.xlu0 0
  %1296 = vperm.xlu0 %1295, %v1287
  %v1297 = vpop.permute.xlu0 %1296
  %1300 = vset.pattern.permute.xlu0 0
  %1301 = vperm.xlu0 %1300, %v1288
  %v1302 = vpop.permute.xlu0 %1301
  %vm1304 = vcmask 195584
  %v1306 = vsel %vm1304, %v1283, 0
  %v1309 = vsel %vm1304, %v1284, 0
  %v1312 = vsel %vm1304, %v1285, 0
  %1314 = vmatprep.subr.mxu0 0.0
  %1315 = vmatpush1.msra.mxu0 0.0
  %1316 = vmatprep.subr.mxu0 0.0
  %1317 = vmatpush1.msra.mxu0 0.0
  %1318 = vmatprep.subr.mxu0 0.0
  %1319 = vmatpush1.msra.mxu0 0.0
  %1320 = vmatprep.subr.mxu0 0.0
  %1321 = vmatpush1.msra.mxu0 0.0
  %1322 = vmatprep.subr.mxu0 0.0
  %1323 = vmatpush1.msra.mxu0 0.0
  %1324 = vmatprep.subr.mxu0 0.0
  %1325 = vmatpush1.msra.mxu0 0.0
  %1326 = vmatprep.subr.mxu0 0.0
  %1327 = vmatpush1.msra.mxu0 0.0
  %1328 = vmatprep.subr.mxu0 0.0
  %1329 = vmatpush1.msra.mxu0 0.0
  %1330 = vmatprep.subr.mxu0 0.0
  %1331 = vmatpush1.msra.mxu0 0.0
  %1332 = vmatprep.subr.mxu0 0.0
  %1333 = vmatpush1.msra.mxu0 0.0
  %1334 = vmatprep.subr.mxu0 0.0
  %1335 = vmatpush1.msra.mxu0 0.0
  %1336 = vmatprep.subr.mxu0 0.0
  %1337 = vmatpush1.msra.mxu0 0.0
  %1338 = vmatprep.subr.mxu0 0.0
  %1339 = vmatpush1.msra.mxu0 0.0
  %v1340 = vand.u32 %v1280, 4294901760
  %1341 = vmatprep.subr.mxu0 %v1340
  %v1342 = vand.u32 %v1279, 4294901760
  %1343 = vmatpush1.msra.mxu0 %v1342
  %v1344 = vand.u32 %v1276, 4294901760
  %1345 = vmatprep.subr.mxu0 %v1344
  %v1346 = vand.u32 %v1275, 4294901760
  %1347 = vmatpush1.msra.mxu0 %v1346
  %v1348 = vand.u32 %v1272, 4294901760
  %1349 = vmatprep.subr.mxu0 %v1348
  %v1350 = vand.u32 %v1271, 4294901760
  %1351 = vmatpush1.msra.mxu0 %v1350
  %1352 = vmatprep.subr.mxu0 0.0
  %1353 = vmatpush2.msra.mxu0 0.0
  %1354 = vmatprep.subr.mxu0 0.0
  %1355 = vmatpush2.msra.mxu0 0.0
  %1356 = vmatprep.subr.mxu0 0.0
  %1357 = vmatpush2.msra.mxu0 0.0
  %1358 = vmatprep.subr.mxu0 0.0
  %1359 = vmatpush2.msra.mxu0 0.0
  %1360 = vmatprep.subr.mxu0 0.0
  %1361 = vmatpush2.msra.mxu0 0.0
  %1362 = vmatprep.subr.mxu0 0.0
  %1363 = vmatpush2.msra.mxu0 0.0
  %1364 = vmatprep.subr.mxu0 0.0
  %1365 = vmatpush2.msra.mxu0 0.0
  %1366 = vmatprep.subr.mxu0 0.0
  %1367 = vmatpush2.msra.mxu0 0.0
  %1368 = vmatprep.subr.mxu0 0.0
  %1369 = vmatpush2.msra.mxu0 0.0
  %1370 = vmatprep.subr.mxu0 0.0
  %1371 = vmatpush2.msra.mxu0 0.0
  %1372 = vmatprep.subr.mxu0 0.0
  %1373 = vmatpush2.msra.mxu0 0.0
  %1374 = vmatprep.subr.mxu0 0.0
  %1375 = vmatpush2.msra.mxu0 0.0
  %1376 = vmatprep.subr.mxu0 0.0
  %1377 = vmatpush2.msra.mxu0 0.0
  %1378 = vmatprep.subr.mxu0 0.0
  %1379 = vmatpush2.msra.mxu0 0.0
  %1380 = vmatprep.subr.mxu0 0.0
  %1381 = vmatpush2.msra.mxu0 0.0
  %1382 = vmatprep.subr.mxu0 0.0
  %1383 = vmatpush2.msra.mxu0 0.0
  %1384 = vmatprep.mubr.f32.mxu0 0.0
  %v1385 = vand.u32 %v1306, 4294901760
  %v1386 = vsub.f32 %v1306, %v1385
  %v1387 = vand.u32 %v1386, 4294901760
  %v1388 = vsub.f32 %v1386, %v1387
  %v1389 = vand.u32 %v1388, 4294901760
  %1390 = vmatmul.mubr.f32.gmra.mxu0 %v1389
  %v1391 = vpop.f32.mrf.mxu0
  %v1392 = vadd.f32 %v1292, %v1391
  %v1393 = vpop.f32.mrf.mxu0
  %v1394 = vadd.f32 %v1292, %v1393
  %1395 = vmatprep.mubr.f32.mxu0 0.0
  %v1396 = vand.u32 %v1309, 4294901760
  %v1397 = vsub.f32 %v1309, %v1396
  %v1398 = vand.u32 %v1397, 4294901760
  %v1399 = vsub.f32 %v1397, %v1398
  %v1400 = vand.u32 %v1399, 4294901760
  %1401 = vmatmul.mubr.f32.gmra.mxu0 %v1400
  %v1402 = vpop.f32.mrf.mxu0
  %v1403 = vadd.f32 %v1297, %v1402
  %v1404 = vpop.f32.mrf.mxu0
  %v1405 = vadd.f32 %v1297, %v1404
  %1406 = vmatprep.mubr.f32.mxu0 0.0
  %v1407 = vand.u32 %v1312, 4294901760
  %v1408 = vsub.f32 %v1312, %v1407
  %v1409 = vand.u32 %v1408, 4294901760
  %v1410 = vsub.f32 %v1408, %v1409
  %v1411 = vand.u32 %v1410, 4294901760
  %1412 = vmatmul.mubr.f32.gmra.mxu0 %v1411
  %v1413 = vpop.f32.mrf.mxu0
  %v1414 = vadd.f32 %v1302, %v1413
  %v1415 = vpop.f32.mrf.mxu0
  %v1416 = vadd.f32 %v1302, %v1415
  %1417 = vdwg.mxu0
  %1418 = vmatprep.subr.mxu0 0.0
  %1419 = vmatpush1.msra.mxu0 0.0
  %1420 = vmatprep.subr.mxu0 0.0
  %1421 = vmatpush1.msra.mxu0 0.0
  %1422 = vmatprep.subr.mxu0 0.0
  %1423 = vmatpush1.msra.mxu0 0.0
  %1424 = vmatprep.subr.mxu0 0.0
  %1425 = vmatpush1.msra.mxu0 0.0
  %1426 = vmatprep.subr.mxu0 0.0
  %1427 = vmatpush1.msra.mxu0 0.0
  %1428 = vmatprep.subr.mxu0 0.0
  %1429 = vmatpush1.msra.mxu0 0.0
  %1430 = vmatprep.subr.mxu0 0.0
  %1431 = vmatpush1.msra.mxu0 0.0
  %1432 = vmatprep.subr.mxu0 0.0
  %1433 = vmatpush1.msra.mxu0 0.0
  %1434 = vmatprep.subr.mxu0 0.0
  %1435 = vmatpush1.msra.mxu0 0.0
  %1436 = vmatprep.subr.mxu0 0.0
  %1437 = vmatpush1.msra.mxu0 0.0
  %1438 = vmatprep.subr.mxu0 0.0
  %1439 = vmatpush1.msra.mxu0 0.0
  %1440 = vmatprep.subr.mxu0 0.0
  %1441 = vmatpush1.msra.mxu0 0.0
  %1442 = vmatprep.subr.mxu0 0.0
  %1443 = vmatpush1.msra.mxu0 0.0
  %v1444 = vand.u32 %v1280, 4294901760
  %v1445 = vsub.f32 %v1280, %v1444
  %v1446 = vand.u32 %v1445, 4294901760
  %v1447 = vsub.f32 %v1445, %v1446
  %v1448 = vand.u32 %v1447, 4294901760
  %1449 = vmatprep.subr.mxu0 %v1448
  %v1450 = vand.u32 %v1279, 4294901760
  %v1451 = vsub.f32 %v1279, %v1450
  %v1452 = vand.u32 %v1451, 4294901760
  %v1453 = vsub.f32 %v1451, %v1452
  %v1454 = vand.u32 %v1453, 4294901760
  %1455 = vmatpush1.msra.mxu0 %v1454
  %v1456 = vand.u32 %v1276, 4294901760
  %v1457 = vsub.f32 %v1276, %v1456
  %v1458 = vand.u32 %v1457, 4294901760
  %v1459 = vsub.f32 %v1457, %v1458
  %v1460 = vand.u32 %v1459, 4294901760
  %1461 = vmatprep.subr.mxu0 %v1460
  %v1462 = vand.u32 %v1275, 4294901760
  %v1463 = vsub.f32 %v1275, %v1462
  %v1464 = vand.u32 %v1463, 4294901760
  %v1465 = vsub.f32 %v1463, %v1464
  %v1466 = vand.u32 %v1465, 4294901760
  %1467 = vmatpush1.msra.mxu0 %v1466
  %v1468 = vand.u32 %v1272, 4294901760
  %v1469 = vsub.f32 %v1272, %v1468
  %v1470 = vand.u32 %v1469, 4294901760
  %v1471 = vsub.f32 %v1469, %v1470
  %v1472 = vand.u32 %v1471, 4294901760
  %1473 = vmatprep.subr.mxu0 %v1472
  %v1474 = vand.u32 %v1271, 4294901760
  %v1475 = vsub.f32 %v1271, %v1474
  %v1476 = vand.u32 %v1475, 4294901760
  %v1477 = vsub.f32 %v1475, %v1476
  %v1478 = vand.u32 %v1477, 4294901760
  %1479 = vmatpush1.msra.mxu0 %v1478
  %1480 = vmatprep.subr.mxu0 0.0
  %1481 = vmatpush2.msra.mxu0 0.0
  %1482 = vmatprep.subr.mxu0 0.0
  %1483 = vmatpush2.msra.mxu0 0.0
  %1484 = vmatprep.subr.mxu0 0.0
  %1485 = vmatpush2.msra.mxu0 0.0
  %1486 = vmatprep.subr.mxu0 0.0
  %1487 = vmatpush2.msra.mxu0 0.0
  %1488 = vmatprep.subr.mxu0 0.0
  %1489 = vmatpush2.msra.mxu0 0.0
  %1490 = vmatprep.subr.mxu0 0.0
  %1491 = vmatpush2.msra.mxu0 0.0
  %1492 = vmatprep.subr.mxu0 0.0
  %1493 = vmatpush2.msra.mxu0 0.0
  %1494 = vmatprep.subr.mxu0 0.0
  %1495 = vmatpush2.msra.mxu0 0.0
  %1496 = vmatprep.subr.mxu0 0.0
  %1497 = vmatpush2.msra.mxu0 0.0
  %1498 = vmatprep.subr.mxu0 0.0
  %1499 = vmatpush2.msra.mxu0 0.0
  %1500 = vmatprep.subr.mxu0 0.0
  %1501 = vmatpush2.msra.mxu0 0.0
  %1502 = vmatprep.subr.mxu0 0.0
  %1503 = vmatpush2.msra.mxu0 0.0
  %1504 = vmatprep.subr.mxu0 0.0
  %1505 = vmatpush2.msra.mxu0 0.0
  %1506 = vmatprep.subr.mxu0 0.0
  %1507 = vmatpush2.msra.mxu0 0.0
  %1508 = vmatprep.subr.mxu0 0.0
  %1509 = vmatpush2.msra.mxu0 0.0
  %1510 = vmatprep.subr.mxu0 0.0
  %1511 = vmatpush2.msra.mxu0 0.0
  %1512 = vmatprep.mubr.f32.mxu0 0.0
  %v1513 = vand.u32 %v1306, 4294901760
  %1514 = vmatmul.mubr.f32.gmra.mxu0 %v1513
  %v1515 = vpop.f32.mrf.mxu0
  %v1516 = vadd.f32 %v1392, %v1515
  %v1517 = vpop.f32.mrf.mxu0
  %v1518 = vadd.f32 %v1394, %v1517
  %1519 = vmatprep.mubr.f32.mxu0 0.0
  %v1520 = vand.u32 %v1309, 4294901760
  %1521 = vmatmul.mubr.f32.gmra.mxu0 %v1520
  %v1522 = vpop.f32.mrf.mxu0
  %v1523 = vadd.f32 %v1403, %v1522
  %v1524 = vpop.f32.mrf.mxu0
  %v1525 = vadd.f32 %v1405, %v1524
  %1526 = vmatprep.mubr.f32.mxu0 0.0
  %v1527 = vand.u32 %v1312, 4294901760
  %1528 = vmatmul.mubr.f32.gmra.mxu0 %v1527
  %v1529 = vpop.f32.mrf.mxu0
  %v1530 = vadd.f32 %v1414, %v1529
  %v1531 = vpop.f32.mrf.mxu0
  %v1532 = vadd.f32 %v1416, %v1531
  %1533 = vdwg.mxu0
  %1534 = vmatprep.subr.mxu0 0.0
  %1535 = vmatpush1.msra.mxu0 0.0
  %1536 = vmatprep.subr.mxu0 0.0
  %1537 = vmatpush1.msra.mxu0 0.0
  %1538 = vmatprep.subr.mxu0 0.0
  %1539 = vmatpush1.msra.mxu0 0.0
  %1540 = vmatprep.subr.mxu0 0.0
  %1541 = vmatpush1.msra.mxu0 0.0
  %1542 = vmatprep.subr.mxu0 0.0
  %1543 = vmatpush1.msra.mxu0 0.0
  %1544 = vmatprep.subr.mxu0 0.0
  %1545 = vmatpush1.msra.mxu0 0.0
  %1546 = vmatprep.subr.mxu0 0.0
  %1547 = vmatpush1.msra.mxu0 0.0
  %1548 = vmatprep.subr.mxu0 0.0
  %1549 = vmatpush1.msra.mxu0 0.0
  %1550 = vmatprep.subr.mxu0 0.0
  %1551 = vmatpush1.msra.mxu0 0.0
  %1552 = vmatprep.subr.mxu0 0.0
  %1553 = vmatpush1.msra.mxu0 0.0
  %1554 = vmatprep.subr.mxu0 0.0
  %1555 = vmatpush1.msra.mxu0 0.0
  %1556 = vmatprep.subr.mxu0 0.0
  %1557 = vmatpush1.msra.mxu0 0.0
  %1558 = vmatprep.subr.mxu0 0.0
  %1559 = vmatpush1.msra.mxu0 0.0
  %v1560 = vand.u32 %v1280, 4294901760
  %v1561 = vsub.f32 %v1280, %v1560
  %1562 = vmatprep.subr.mxu0 %v1561
  %v1563 = vand.u32 %v1279, 4294901760
  %v1564 = vsub.f32 %v1279, %v1563
  %1565 = vmatpush1.msra.mxu0 %v1564
  %v1566 = vand.u32 %v1276, 4294901760
  %v1567 = vsub.f32 %v1276, %v1566
  %1568 = vmatprep.subr.mxu0 %v1567
  %v1569 = vand.u32 %v1275, 4294901760
  %v1570 = vsub.f32 %v1275, %v1569
  %1571 = vmatpush1.msra.mxu0 %v1570
  %v1572 = vand.u32 %v1272, 4294901760
  %v1573 = vsub.f32 %v1272, %v1572
  %1574 = vmatprep.subr.mxu0 %v1573
  %v1575 = vand.u32 %v1271, 4294901760
  %v1576 = vsub.f32 %v1271, %v1575
  %1577 = vmatpush1.msra.mxu0 %v1576
  %1578 = vmatprep.subr.mxu0 0.0
  %1579 = vmatpush2.msra.mxu0 0.0
  %1580 = vmatprep.subr.mxu0 0.0
  %1581 = vmatpush2.msra.mxu0 0.0
  %1582 = vmatprep.subr.mxu0 0.0
  %1583 = vmatpush2.msra.mxu0 0.0
  %1584 = vmatprep.subr.mxu0 0.0
  %1585 = vmatpush2.msra.mxu0 0.0
  %1586 = vmatprep.subr.mxu0 0.0
  %1587 = vmatpush2.msra.mxu0 0.0
  %1588 = vmatprep.subr.mxu0 0.0
  %1589 = vmatpush2.msra.mxu0 0.0
  %1590 = vmatprep.subr.mxu0 0.0
  %1591 = vmatpush2.msra.mxu0 0.0
  %1592 = vmatprep.subr.mxu0 0.0
  %1593 = vmatpush2.msra.mxu0 0.0
  %1594 = vmatprep.subr.mxu0 0.0
  %1595 = vmatpush2.msra.mxu0 0.0
  %1596 = vmatprep.subr.mxu0 0.0
  %1597 = vmatpush2.msra.mxu0 0.0
  %1598 = vmatprep.subr.mxu0 0.0
  %1599 = vmatpush2.msra.mxu0 0.0
  %1600 = vmatprep.subr.mxu0 0.0
  %1601 = vmatpush2.msra.mxu0 0.0
  %1602 = vmatprep.subr.mxu0 0.0
  %1603 = vmatpush2.msra.mxu0 0.0
  %1604 = vmatprep.subr.mxu0 0.0
  %1605 = vmatpush2.msra.mxu0 0.0
  %1606 = vmatprep.subr.mxu0 0.0
  %1607 = vmatpush2.msra.mxu0 0.0
  %1608 = vmatprep.subr.mxu0 0.0
  %1609 = vmatpush2.msra.mxu0 0.0
  %1610 = vmatprep.mubr.f32.mxu0 0.0
  %v1611 = vand.u32 %v1306, 4294901760
  %v1612 = vsub.f32 %v1306, %v1611
  %1613 = vmatmul.mubr.f32.gmra.mxu0 %v1612
  %v1614 = vpop.f32.mrf.mxu0
  %v1615 = vadd.f32 %v1516, %v1614
  %v1616 = vpop.f32.mrf.mxu0
  %v1617 = vadd.f32 %v1518, %v1616
  %1618 = vmatprep.mubr.f32.mxu0 0.0
  %v1619 = vand.u32 %v1309, 4294901760
  %v1620 = vsub.f32 %v1309, %v1619
  %1621 = vmatmul.mubr.f32.gmra.mxu0 %v1620
  %v1622 = vpop.f32.mrf.mxu0
  %v1623 = vadd.f32 %v1523, %v1622
  %v1624 = vpop.f32.mrf.mxu0
  %v1625 = vadd.f32 %v1525, %v1624
  %1626 = vmatprep.mubr.f32.mxu0 0.0
  %v1627 = vand.u32 %v1312, 4294901760
  %v1628 = vsub.f32 %v1312, %v1627
  %1629 = vmatmul.mubr.f32.gmra.mxu0 %v1628
  %v1630 = vpop.f32.mrf.mxu0
  %v1631 = vadd.f32 %v1530, %v1630
  %v1632 = vpop.f32.mrf.mxu0
  %v1633 = vadd.f32 %v1532, %v1632
  %1634 = vdwg.mxu0
  %1635 = vmatprep.subr.mxu0 0.0
  %1636 = vmatpush1.msra.mxu0 0.0
  %1637 = vmatprep.subr.mxu0 0.0
  %1638 = vmatpush1.msra.mxu0 0.0
  %1639 = vmatprep.subr.mxu0 0.0
  %1640 = vmatpush1.msra.mxu0 0.0
  %1641 = vmatprep.subr.mxu0 0.0
  %1642 = vmatpush1.msra.mxu0 0.0
  %1643 = vmatprep.subr.mxu0 0.0
  %1644 = vmatpush1.msra.mxu0 0.0
  %1645 = vmatprep.subr.mxu0 0.0
  %1646 = vmatpush1.msra.mxu0 0.0
  %1647 = vmatprep.subr.mxu0 0.0
  %1648 = vmatpush1.msra.mxu0 0.0
  %1649 = vmatprep.subr.mxu0 0.0
  %1650 = vmatpush1.msra.mxu0 0.0
  %1651 = vmatprep.subr.mxu0 0.0
  %1652 = vmatpush1.msra.mxu0 0.0
  %1653 = vmatprep.subr.mxu0 0.0
  %1654 = vmatpush1.msra.mxu0 0.0
  %1655 = vmatprep.subr.mxu0 0.0
  %1656 = vmatpush1.msra.mxu0 0.0
  %1657 = vmatprep.subr.mxu0 0.0
  %1658 = vmatpush1.msra.mxu0 0.0
  %1659 = vmatprep.subr.mxu0 0.0
  %1660 = vmatpush1.msra.mxu0 0.0
  %v1661 = vand.u32 %v1280, 4294901760
  %1662 = vmatprep.subr.mxu0 %v1661
  %v1663 = vand.u32 %v1279, 4294901760
  %1664 = vmatpush1.msra.mxu0 %v1663
  %v1665 = vand.u32 %v1276, 4294901760
  %1666 = vmatprep.subr.mxu0 %v1665
  %v1667 = vand.u32 %v1275, 4294901760
  %1668 = vmatpush1.msra.mxu0 %v1667
  %v1669 = vand.u32 %v1272, 4294901760
  %1670 = vmatprep.subr.mxu0 %v1669
  %v1671 = vand.u32 %v1271, 4294901760
  %1672 = vmatpush1.msra.mxu0 %v1671
  %1673 = vmatprep.subr.mxu0 0.0
  %1674 = vmatpush2.msra.mxu0 0.0
  %1675 = vmatprep.subr.mxu0 0.0
  %1676 = vmatpush2.msra.mxu0 0.0
  %1677 = vmatprep.subr.mxu0 0.0
  %1678 = vmatpush2.msra.mxu0 0.0
  %1679 = vmatprep.subr.mxu0 0.0
  %1680 = vmatpush2.msra.mxu0 0.0
  %1681 = vmatprep.subr.mxu0 0.0
  %1682 = vmatpush2.msra.mxu0 0.0
  %1683 = vmatprep.subr.mxu0 0.0
  %1684 = vmatpush2.msra.mxu0 0.0
  %1685 = vmatprep.subr.mxu0 0.0
  %1686 = vmatpush2.msra.mxu0 0.0
  %1687 = vmatprep.subr.mxu0 0.0
  %1688 = vmatpush2.msra.mxu0 0.0
  %1689 = vmatprep.subr.mxu0 0.0
  %1690 = vmatpush2.msra.mxu0 0.0
  %1691 = vmatprep.subr.mxu0 0.0
  %1692 = vmatpush2.msra.mxu0 0.0
  %1693 = vmatprep.subr.mxu0 0.0
  %1694 = vmatpush2.msra.mxu0 0.0
  %1695 = vmatprep.subr.mxu0 0.0
  %1696 = vmatpush2.msra.mxu0 0.0
  %1697 = vmatprep.subr.mxu0 0.0
  %1698 = vmatpush2.msra.mxu0 0.0
  %1699 = vmatprep.subr.mxu0 0.0
  %1700 = vmatpush2.msra.mxu0 0.0
  %1701 = vmatprep.subr.mxu0 0.0
  %1702 = vmatpush2.msra.mxu0 0.0
  %1703 = vmatprep.subr.mxu0 0.0
  %1704 = vmatpush2.msra.mxu0 0.0
  %1705 = vmatprep.mubr.f32.mxu0 0.0
  %v1706 = vand.u32 %v1306, 4294901760
  %v1707 = vsub.f32 %v1306, %v1706
  %v1708 = vand.u32 %v1707, 4294901760
  %1709 = vmatmul.mubr.f32.gmra.mxu0 %v1708
  %v1710 = vpop.f32.mrf.mxu0
  %v1711 = vadd.f32 %v1615, %v1710
  %v1712 = vpop.f32.mrf.mxu0
  %v1713 = vadd.f32 %v1617, %v1712
  %1714 = vmatprep.mubr.f32.mxu0 0.0
  %v1715 = vand.u32 %v1309, 4294901760
  %v1716 = vsub.f32 %v1309, %v1715
  %v1717 = vand.u32 %v1716, 4294901760
  %1718 = vmatmul.mubr.f32.gmra.mxu0 %v1717
  %v1719 = vpop.f32.mrf.mxu0
  %v1720 = vadd.f32 %v1623, %v1719
  %v1721 = vpop.f32.mrf.mxu0
  %v1722 = vadd.f32 %v1625, %v1721
  %1723 = vmatprep.mubr.f32.mxu0 0.0
  %v1724 = vand.u32 %v1312, 4294901760
  %v1725 = vsub.f32 %v1312, %v1724
  %v1726 = vand.u32 %v1725, 4294901760
  %1727 = vmatmul.mubr.f32.gmra.mxu0 %v1726
  %v1728 = vpop.f32.mrf.mxu0
  %v1729 = vadd.f32 %v1631, %v1728
  %v1730 = vpop.f32.mrf.mxu0
  %v1731 = vadd.f32 %v1633, %v1730
  %1732 = vdwg.mxu0
  %1733 = vmatprep.subr.mxu0 0.0
  %1734 = vmatpush1.msra.mxu0 0.0
  %1735 = vmatprep.subr.mxu0 0.0
  %1736 = vmatpush1.msra.mxu0 0.0
  %1737 = vmatprep.subr.mxu0 0.0
  %1738 = vmatpush1.msra.mxu0 0.0
  %1739 = vmatprep.subr.mxu0 0.0
  %1740 = vmatpush1.msra.mxu0 0.0
  %1741 = vmatprep.subr.mxu0 0.0
  %1742 = vmatpush1.msra.mxu0 0.0
  %1743 = vmatprep.subr.mxu0 0.0
  %1744 = vmatpush1.msra.mxu0 0.0
  %1745 = vmatprep.subr.mxu0 0.0
  %1746 = vmatpush1.msra.mxu0 0.0
  %1747 = vmatprep.subr.mxu0 0.0
  %1748 = vmatpush1.msra.mxu0 0.0
  %1749 = vmatprep.subr.mxu0 0.0
  %1750 = vmatpush1.msra.mxu0 0.0
  %1751 = vmatprep.subr.mxu0 0.0
  %1752 = vmatpush1.msra.mxu0 0.0
  %1753 = vmatprep.subr.mxu0 0.0
  %1754 = vmatpush1.msra.mxu0 0.0
  %1755 = vmatprep.subr.mxu0 0.0
  %1756 = vmatpush1.msra.mxu0 0.0
  %1757 = vmatprep.subr.mxu0 0.0
  %1758 = vmatpush1.msra.mxu0 0.0
  %v1759 = vand.u32 %v1280, 4294901760
  %v1760 = vsub.f32 %v1280, %v1759
  %v1761 = vand.u32 %v1760, 4294901760
  %1762 = vmatprep.subr.mxu0 %v1761
  %v1763 = vand.u32 %v1279, 4294901760
  %v1764 = vsub.f32 %v1279, %v1763
  %v1765 = vand.u32 %v1764, 4294901760
  %1766 = vmatpush1.msra.mxu0 %v1765
  %v1767 = vand.u32 %v1276, 4294901760
  %v1768 = vsub.f32 %v1276, %v1767
  %v1769 = vand.u32 %v1768, 4294901760
  %1770 = vmatprep.subr.mxu0 %v1769
  %v1771 = vand.u32 %v1275, 4294901760
  %v1772 = vsub.f32 %v1275, %v1771
  %v1773 = vand.u32 %v1772, 4294901760
  %1774 = vmatpush1.msra.mxu0 %v1773
  %v1775 = vand.u32 %v1272, 4294901760
  %v1776 = vsub.f32 %v1272, %v1775
  %v1777 = vand.u32 %v1776, 4294901760
  %1778 = vmatprep.subr.mxu0 %v1777
  %v1779 = vand.u32 %v1271, 4294901760
  %v1780 = vsub.f32 %v1271, %v1779
  %v1781 = vand.u32 %v1780, 4294901760
  %1782 = vmatpush1.msra.mxu0 %v1781
  %1783 = vmatprep.subr.mxu0 0.0
  %1784 = vmatpush2.msra.mxu0 0.0
  %1785 = vmatprep.subr.mxu0 0.0
  %1786 = vmatpush2.msra.mxu0 0.0
  %1787 = vmatprep.subr.mxu0 0.0
  %1788 = vmatpush2.msra.mxu0 0.0
  %1789 = vmatprep.subr.mxu0 0.0
  %1790 = vmatpush2.msra.mxu0 0.0
  %1791 = vmatprep.subr.mxu0 0.0
  %1792 = vmatpush2.msra.mxu0 0.0
  %1793 = vmatprep.subr.mxu0 0.0
  %1794 = vmatpush2.msra.mxu0 0.0
  %1795 = vmatprep.subr.mxu0 0.0
  %1796 = vmatpush2.msra.mxu0 0.0
  %1797 = vmatprep.subr.mxu0 0.0
  %1798 = vmatpush2.msra.mxu0 0.0
  %1799 = vmatprep.subr.mxu0 0.0
  %1800 = vmatpush2.msra.mxu0 0.0
  %1801 = vmatprep.subr.mxu0 0.0
  %1802 = vmatpush2.msra.mxu0 0.0
  %1803 = vmatprep.subr.mxu0 0.0
  %1804 = vmatpush2.msra.mxu0 0.0
  %1805 = vmatprep.subr.mxu0 0.0
  %1806 = vmatpush2.msra.mxu0 0.0
  %1807 = vmatprep.subr.mxu0 0.0
  %1808 = vmatpush2.msra.mxu0 0.0
  %1809 = vmatprep.subr.mxu0 0.0
  %1810 = vmatpush2.msra.mxu0 0.0
  %1811 = vmatprep.subr.mxu0 0.0
  %1812 = vmatpush2.msra.mxu0 0.0
  %1813 = vmatprep.subr.mxu0 0.0
  %1814 = vmatpush2.msra.mxu0 0.0
  %1815 = vmatprep.mubr.f32.mxu0 0.0
  %v1816 = vand.u32 %v1306, 4294901760
  %1817 = vmatmul.mubr.f32.gmra.mxu0 %v1816
  %v1818 = vpop.f32.mrf.mxu0
  %v1819 = vadd.f32 %v1711, %v1818
  %v1820 = vpop.f32.mrf.mxu0
  %v1821 = vadd.f32 %v1713, %v1820
  %1822 = vmatprep.mubr.f32.mxu0 0.0
  %v1823 = vand.u32 %v1309, 4294901760
  %1824 = vmatmul.mubr.f32.gmra.mxu0 %v1823
  %v1825 = vpop.f32.mrf.mxu0
  %v1826 = vadd.f32 %v1720, %v1825
  %v1827 = vpop.f32.mrf.mxu0
  %v1828 = vadd.f32 %v1722, %v1827
  %1829 = vmatprep.mubr.f32.mxu0 0.0
  %v1830 = vand.u32 %v1312, 4294901760
  %1831 = vmatmul.mubr.f32.gmra.mxu0 %v1830
  %v1832 = vpop.f32.mrf.mxu0
  %v1833 = vadd.f32 %v1729, %v1832
  %v1834 = vpop.f32.mrf.mxu0
  %v1835 = vadd.f32 %v1731, %v1834
  %1836 = vdwg.mxu0
  %1837 = vmatprep.subr.mxu0 0.0
  %1838 = vmatpush1.msra.mxu0 0.0
  %1839 = vmatprep.subr.mxu0 0.0
  %1840 = vmatpush1.msra.mxu0 0.0
  %1841 = vmatprep.subr.mxu0 0.0
  %1842 = vmatpush1.msra.mxu0 0.0
  %1843 = vmatprep.subr.mxu0 0.0
  %1844 = vmatpush1.msra.mxu0 0.0
  %1845 = vmatprep.subr.mxu0 0.0
  %1846 = vmatpush1.msra.mxu0 0.0
  %1847 = vmatprep.subr.mxu0 0.0
  %1848 = vmatpush1.msra.mxu0 0.0
  %1849 = vmatprep.subr.mxu0 0.0
  %1850 = vmatpush1.msra.mxu0 0.0
  %1851 = vmatprep.subr.mxu0 0.0
  %1852 = vmatpush1.msra.mxu0 0.0
  %1853 = vmatprep.subr.mxu0 0.0
  %1854 = vmatpush1.msra.mxu0 0.0
  %1855 = vmatprep.subr.mxu0 0.0
  %1856 = vmatpush1.msra.mxu0 0.0
  %1857 = vmatprep.subr.mxu0 0.0
  %1858 = vmatpush1.msra.mxu0 0.0
  %1859 = vmatprep.subr.mxu0 0.0
  %1860 = vmatpush1.msra.mxu0 0.0
  %1861 = vmatprep.subr.mxu0 0.0
  %1862 = vmatpush1.msra.mxu0 0.0
  %v1863 = vand.u32 %v1280, 4294901760
  %1864 = vmatprep.subr.mxu0 %v1863
  %v1865 = vand.u32 %v1279, 4294901760
  %1866 = vmatpush1.msra.mxu0 %v1865
  %v1867 = vand.u32 %v1276, 4294901760
  %1868 = vmatprep.subr.mxu0 %v1867
  %v1869 = vand.u32 %v1275, 4294901760
  %1870 = vmatpush1.msra.mxu0 %v1869
  %v1871 = vand.u32 %v1272, 4294901760
  %1872 = vmatprep.subr.mxu0 %v1871
  %v1873 = vand.u32 %v1271, 4294901760
  %1874 = vmatpush1.msra.mxu0 %v1873
  %1875 = vmatprep.subr.mxu0 0.0
  %1876 = vmatpush2.msra.mxu0 0.0
  %1877 = vmatprep.subr.mxu0 0.0
  %1878 = vmatpush2.msra.mxu0 0.0
  %1879 = vmatprep.subr.mxu0 0.0
  %1880 = vmatpush2.msra.mxu0 0.0
  %1881 = vmatprep.subr.mxu0 0.0
  %1882 = vmatpush2.msra.mxu0 0.0
  %1883 = vmatprep.subr.mxu0 0.0
  %1884 = vmatpush2.msra.mxu0 0.0
  %1885 = vmatprep.subr.mxu0 0.0
  %1886 = vmatpush2.msra.mxu0 0.0
  %1887 = vmatprep.subr.mxu0 0.0
  %1888 = vmatpush2.msra.mxu0 0.0
  %1889 = vmatprep.subr.mxu0 0.0
  %1890 = vmatpush2.msra.mxu0 0.0
  %1891 = vmatprep.subr.mxu0 0.0
  %1892 = vmatpush2.msra.mxu0 0.0
  %1893 = vmatprep.subr.mxu0 0.0
  %1894 = vmatpush2.msra.mxu0 0.0
  %1895 = vmatprep.subr.mxu0 0.0
  %1896 = vmatpush2.msra.mxu0 0.0
  %1897 = vmatprep.subr.mxu0 0.0
  %1898 = vmatpush2.msra.mxu0 0.0
  %1899 = vmatprep.subr.mxu0 0.0
  %1900 = vmatpush2.msra.mxu0 0.0
  %1901 = vmatprep.subr.mxu0 0.0
  %1902 = vmatpush2.msra.mxu0 0.0
  %1903 = vmatprep.subr.mxu0 0.0
  %1904 = vmatpush2.msra.mxu0 0.0
  %1905 = vmatprep.subr.mxu0 0.0
  %1906 = vmatpush2.msra.mxu0 0.0
  %1907 = vmatprep.mubr.f32.mxu0 0.0
  %v1908 = vand.u32 %v1306, 4294901760
  %1909 = vmatmul.mubr.f32.gmra.mxu0 %v1908
  %v1910 = vpop.f32.mrf.mxu0
  %v1911 = vadd.f32 %v1819, %v1910
  %v1912 = vpop.f32.mrf.mxu0
  %v1913 = vadd.f32 %v1821, %v1912
  %1914 = vmatprep.mubr.f32.mxu0 0.0
  %v1915 = vand.u32 %v1309, 4294901760
  %1916 = vmatmul.mubr.f32.gmra.mxu0 %v1915
  %v1917 = vpop.f32.mrf.mxu0
  %v1918 = vadd.f32 %v1826, %v1917
  %v1919 = vpop.f32.mrf.mxu0
  %v1920 = vadd.f32 %v1828, %v1919
  %1921 = vmatprep.mubr.f32.mxu0 0.0
  %v1922 = vand.u32 %v1312, 4294901760
  %1923 = vmatmul.mubr.f32.gmra.mxu0 %v1922
  %v1924 = vpop.f32.mrf.mxu0
  %v1925 = vadd.f32 %v1833, %v1924
  %v1926 = vpop.f32.mrf.mxu0
  %v1927 = vadd.f32 %v1835, %v1926
  %1928 = vdwg.mxu0
  %1929 = vmatprep.subr.mxu0 0.0
  %1930 = vmatpush1.msra.mxu0 0.0
  %1931 = vmatprep.subr.mxu0 0.0
  %1932 = vmatpush1.msra.mxu0 0.0
  %1933 = vmatprep.subr.mxu0 0.0
  %1934 = vmatpush1.msra.mxu0 0.0
  %1935 = vmatprep.subr.mxu0 0.0
  %1936 = vmatpush1.msra.mxu0 0.0
  %1937 = vmatprep.subr.mxu0 0.0
  %1938 = vmatpush1.msra.mxu0 0.0
  %1939 = vmatprep.subr.mxu0 0.0
  %1940 = vmatpush1.msra.mxu0 0.0
  %1941 = vmatprep.subr.mxu0 0.0
  %1942 = vmatpush1.msra.mxu0 0.0
  %1943 = vmatprep.subr.mxu0 0.0
  %1944 = vmatpush1.msra.mxu0 0.0
  %1945 = vmatprep.subr.mxu0 0.0
  %1946 = vmatpush1.msra.mxu0 0.0
  %1947 = vmatprep.subr.mxu0 0.0
  %1948 = vmatpush1.msra.mxu0 0.0
  %1949 = vmatprep.subr.mxu0 0.0
  %1950 = vmatpush1.msra.mxu0 0.0
  %1951 = vmatprep.subr.mxu0 0.0
  %1952 = vmatpush1.msra.mxu0 0.0
  %1953 = vmatprep.subr.mxu0 0.0
  %1954 = vmatpush1.msra.mxu0 0.0
  %v1955 = vand.u32 %v1282, 4294901760
  %1956 = vmatprep.subr.mxu0 %v1955
  %v1957 = vand.u32 %v1281, 4294901760
  %1958 = vmatpush1.msra.mxu0 %v1957
  %v1959 = vand.u32 %v1278, 4294901760
  %1960 = vmatprep.subr.mxu0 %v1959
  %v1961 = vand.u32 %v1277, 4294901760
  %1962 = vmatpush1.msra.mxu0 %v1961
  %v1963 = vand.u32 %v1274, 4294901760
  %1964 = vmatprep.subr.mxu0 %v1963
  %v1965 = vand.u32 %v1273, 4294901760
  %1966 = vmatpush1.msra.mxu0 %v1965
  %1967 = vmatprep.subr.mxu0 0.0
  %1968 = vmatpush2.msra.mxu0 0.0
  %1969 = vmatprep.subr.mxu0 0.0
  %1970 = vmatpush2.msra.mxu0 0.0
  %1971 = vmatprep.subr.mxu0 0.0
  %1972 = vmatpush2.msra.mxu0 0.0
  %1973 = vmatprep.subr.mxu0 0.0
  %1974 = vmatpush2.msra.mxu0 0.0
  %1975 = vmatprep.subr.mxu0 0.0
  %1976 = vmatpush2.msra.mxu0 0.0
  %1977 = vmatprep.subr.mxu0 0.0
  %1978 = vmatpush2.msra.mxu0 0.0
  %1979 = vmatprep.subr.mxu0 0.0
  %1980 = vmatpush2.msra.mxu0 0.0
  %1981 = vmatprep.subr.mxu0 0.0
  %1982 = vmatpush2.msra.mxu0 0.0
  %1983 = vmatprep.subr.mxu0 0.0
  %1984 = vmatpush2.msra.mxu0 0.0
  %1985 = vmatprep.subr.mxu0 0.0
  %1986 = vmatpush2.msra.mxu0 0.0
  %1987 = vmatprep.subr.mxu0 0.0
  %1988 = vmatpush2.msra.mxu0 0.0
  %1989 = vmatprep.subr.mxu0 0.0
  %1990 = vmatpush2.msra.mxu0 0.0
  %1991 = vmatprep.subr.mxu0 0.0
  %1992 = vmatpush2.msra.mxu0 0.0
  %1993 = vmatprep.subr.mxu0 0.0
  %1994 = vmatpush2.msra.mxu0 0.0
  %1995 = vmatprep.subr.mxu0 0.0
  %1996 = vmatpush2.msra.mxu0 0.0
  %1997 = vmatprep.subr.mxu0 0.0
  %1998 = vmatpush2.msra.mxu0 0.0
  %1999 = vmatprep.mubr.f32.mxu0 0.0
  %v2000 = vand.u32 %v1306, 4294901760
  %v2001 = vsub.f32 %v1306, %v2000
  %v2002 = vand.u32 %v2001, 4294901760
  %v2003 = vsub.f32 %v2001, %v2002
  %v2004 = vand.u32 %v2003, 4294901760
  %2005 = vmatmul.mubr.f32.gmra.mxu0 %v2004
  %v2006 = vpop.f32.mrf.mxu0
  %v2007 = vadd.f32 %v1292, %v2006
  %v2008 = vpop.f32.mrf.mxu0
  %v2009 = vadd.f32 %v1292, %v2008
  %2010 = vmatprep.mubr.f32.mxu0 0.0
  %v2011 = vand.u32 %v1309, 4294901760
  %v2012 = vsub.f32 %v1309, %v2011
  %v2013 = vand.u32 %v2012, 4294901760
  %v2014 = vsub.f32 %v2012, %v2013
  %v2015 = vand.u32 %v2014, 4294901760
  %2016 = vmatmul.mubr.f32.gmra.mxu0 %v2015
  %v2017 = vpop.f32.mrf.mxu0
  %v2018 = vadd.f32 %v1297, %v2017
  %v2019 = vpop.f32.mrf.mxu0
  %v2020 = vadd.f32 %v1297, %v2019
  %2021 = vmatprep.mubr.f32.mxu0 0.0
  %v2022 = vand.u32 %v1312, 4294901760
  %v2023 = vsub.f32 %v1312, %v2022
  %v2024 = vand.u32 %v2023, 4294901760
  %v2025 = vsub.f32 %v2023, %v2024
  %v2026 = vand.u32 %v2025, 4294901760
  %2027 = vmatmul.mubr.f32.gmra.mxu0 %v2026
  %v2028 = vpop.f32.mrf.mxu0
  %v2029 = vadd.f32 %v1302, %v2028
  %v2030 = vpop.f32.mrf.mxu0
  %v2031 = vadd.f32 %v1302, %v2030
  %2032 = vdwg.mxu0
  %2033 = vmatprep.subr.mxu0 0.0
  %2034 = vmatpush1.msra.mxu0 0.0
  %2035 = vmatprep.subr.mxu0 0.0
  %2036 = vmatpush1.msra.mxu0 0.0
  %2037 = vmatprep.subr.mxu0 0.0
  %2038 = vmatpush1.msra.mxu0 0.0
  %2039 = vmatprep.subr.mxu0 0.0
  %2040 = vmatpush1.msra.mxu0 0.0
  %2041 = vmatprep.subr.mxu0 0.0
  %2042 = vmatpush1.msra.mxu0 0.0
  %2043 = vmatprep.subr.mxu0 0.0
  %2044 = vmatpush1.msra.mxu0 0.0
  %2045 = vmatprep.subr.mxu0 0.0
  %2046 = vmatpush1.msra.mxu0 0.0
  %2047 = vmatprep.subr.mxu0 0.0
  %2048 = vmatpush1.msra.mxu0 0.0
  %2049 = vmatprep.subr.mxu0 0.0
  %2050 = vmatpush1.msra.mxu0 0.0
  %2051 = vmatprep.subr.mxu0 0.0
  %2052 = vmatpush1.msra.mxu0 0.0
  %2053 = vmatprep.subr.mxu0 0.0
  %2054 = vmatpush1.msra.mxu0 0.0
  %2055 = vmatprep.subr.mxu0 0.0
  %2056 = vmatpush1.msra.mxu0 0.0
  %2057 = vmatprep.subr.mxu0 0.0
  %2058 = vmatpush1.msra.mxu0 0.0
  %v2059 = vand.u32 %v1282, 4294901760
  %v2060 = vsub.f32 %v1282, %v2059
  %v2061 = vand.u32 %v2060, 4294901760
  %v2062 = vsub.f32 %v2060, %v2061
  %v2063 = vand.u32 %v2062, 4294901760
  %2064 = vmatprep.subr.mxu0 %v2063
  %v2065 = vand.u32 %v1281, 4294901760
  %v2066 = vsub.f32 %v1281, %v2065
  %v2067 = vand.u32 %v2066, 4294901760
  %v2068 = vsub.f32 %v2066, %v2067
  %v2069 = vand.u32 %v2068, 4294901760
  %2070 = vmatpush1.msra.mxu0 %v2069
  %v2071 = vand.u32 %v1278, 4294901760
  %v2072 = vsub.f32 %v1278, %v2071
  %v2073 = vand.u32 %v2072, 4294901760
  %v2074 = vsub.f32 %v2072, %v2073
  %v2075 = vand.u32 %v2074, 4294901760
  %2076 = vmatprep.subr.mxu0 %v2075
  %v2077 = vand.u32 %v1277, 4294901760
  %v2078 = vsub.f32 %v1277, %v2077
  %v2079 = vand.u32 %v2078, 4294901760
  %v2080 = vsub.f32 %v2078, %v2079
  %v2081 = vand.u32 %v2080, 4294901760
  %2082 = vmatpush1.msra.mxu0 %v2081
  %v2083 = vand.u32 %v1274, 4294901760
  %v2084 = vsub.f32 %v1274, %v2083
  %v2085 = vand.u32 %v2084, 4294901760
  %v2086 = vsub.f32 %v2084, %v2085
  %v2087 = vand.u32 %v2086, 4294901760
  %2088 = vmatprep.subr.mxu0 %v2087
  %v2089 = vand.u32 %v1273, 4294901760
  %v2090 = vsub.f32 %v1273, %v2089
  %v2091 = vand.u32 %v2090, 4294901760
  %v2092 = vsub.f32 %v2090, %v2091
  %v2093 = vand.u32 %v2092, 4294901760
  %2094 = vmatpush1.msra.mxu0 %v2093
  %2095 = vmatprep.subr.mxu0 0.0
  %2096 = vmatpush2.msra.mxu0 0.0
  %2097 = vmatprep.subr.mxu0 0.0
  %2098 = vmatpush2.msra.mxu0 0.0
  %2099 = vmatprep.subr.mxu0 0.0
  %2100 = vmatpush2.msra.mxu0 0.0
  %2101 = vmatprep.subr.mxu0 0.0
  %2102 = vmatpush2.msra.mxu0 0.0
  %2103 = vmatprep.subr.mxu0 0.0
  %2104 = vmatpush2.msra.mxu0 0.0
  %2105 = vmatprep.subr.mxu0 0.0
  %2106 = vmatpush2.msra.mxu0 0.0
  %2107 = vmatprep.subr.mxu0 0.0
  %2108 = vmatpush2.msra.mxu0 0.0
  %2109 = vmatprep.subr.mxu0 0.0
  %2110 = vmatpush2.msra.mxu0 0.0
  %2111 = vmatprep.subr.mxu0 0.0
  %2112 = vmatpush2.msra.mxu0 0.0
  %2113 = vmatprep.subr.mxu0 0.0
  %2114 = vmatpush2.msra.mxu0 0.0
  %2115 = vmatprep.subr.mxu0 0.0
  %2116 = vmatpush2.msra.mxu0 0.0
  %2117 = vmatprep.subr.mxu0 0.0
  %2118 = vmatpush2.msra.mxu0 0.0
  %2119 = vmatprep.subr.mxu0 0.0
  %2120 = vmatpush2.msra.mxu0 0.0
  %2121 = vmatprep.subr.mxu0 0.0
  %2122 = vmatpush2.msra.mxu0 0.0
  %2123 = vmatprep.subr.mxu0 0.0
  %2124 = vmatpush2.msra.mxu0 0.0
  %2125 = vmatprep.subr.mxu0 0.0
  %2126 = vmatpush2.msra.mxu0 0.0
  %2127 = vmatprep.mubr.f32.mxu0 0.0
  %v2128 = vand.u32 %v1306, 4294901760
  %2129 = vmatmul.mubr.f32.gmra.mxu0 %v2128
  %v2130 = vpop.f32.mrf.mxu0
  %v2131 = vadd.f32 %v2007, %v2130
  %v2132 = vpop.f32.mrf.mxu0
  %v2133 = vadd.f32 %v2009, %v2132
  %2134 = vmatprep.mubr.f32.mxu0 0.0
  %v2135 = vand.u32 %v1309, 4294901760
  %2136 = vmatmul.mubr.f32.gmra.mxu0 %v2135
  %v2137 = vpop.f32.mrf.mxu0
  %v2138 = vadd.f32 %v2018, %v2137
  %v2139 = vpop.f32.mrf.mxu0
  %v2140 = vadd.f32 %v2020, %v2139
  %2141 = vmatprep.mubr.f32.mxu0 0.0
  %v2142 = vand.u32 %v1312, 4294901760
  %2143 = vmatmul.mubr.f32.gmra.mxu0 %v2142
  %v2144 = vpop.f32.mrf.mxu0
  %v2145 = vadd.f32 %v2029, %v2144
  %v2146 = vpop.f32.mrf.mxu0
  %v2147 = vadd.f32 %v2031, %v2146
  %2148 = vdwg.mxu0
  %2149 = vmatprep.subr.mxu0 0.0
  %2150 = vmatpush1.msra.mxu0 0.0
  %2151 = vmatprep.subr.mxu0 0.0
  %2152 = vmatpush1.msra.mxu0 0.0
  %2153 = vmatprep.subr.mxu0 0.0
  %2154 = vmatpush1.msra.mxu0 0.0
  %2155 = vmatprep.subr.mxu0 0.0
  %2156 = vmatpush1.msra.mxu0 0.0
  %2157 = vmatprep.subr.mxu0 0.0
  %2158 = vmatpush1.msra.mxu0 0.0
  %2159 = vmatprep.subr.mxu0 0.0
  %2160 = vmatpush1.msra.mxu0 0.0
  %2161 = vmatprep.subr.mxu0 0.0
  %2162 = vmatpush1.msra.mxu0 0.0
  %2163 = vmatprep.subr.mxu0 0.0
  %2164 = vmatpush1.msra.mxu0 0.0
  %2165 = vmatprep.subr.mxu0 0.0
  %2166 = vmatpush1.msra.mxu0 0.0
  %2167 = vmatprep.subr.mxu0 0.0
  %2168 = vmatpush1.msra.mxu0 0.0
  %2169 = vmatprep.subr.mxu0 0.0
  %2170 = vmatpush1.msra.mxu0 0.0
  %2171 = vmatprep.subr.mxu0 0.0
  %2172 = vmatpush1.msra.mxu0 0.0
  %2173 = vmatprep.subr.mxu0 0.0
  %2174 = vmatpush1.msra.mxu0 0.0
  %v2175 = vand.u32 %v1282, 4294901760
  %v2176 = vsub.f32 %v1282, %v2175
  %2177 = vmatprep.subr.mxu0 %v2176
  %v2178 = vand.u32 %v1281, 4294901760
  %v2179 = vsub.f32 %v1281, %v2178
  %2180 = vmatpush1.msra.mxu0 %v2179
  %v2181 = vand.u32 %v1278, 4294901760
  %v2182 = vsub.f32 %v1278, %v2181
  %2183 = vmatprep.subr.mxu0 %v2182
  %v2184 = vand.u32 %v1277, 4294901760
  %v2185 = vsub.f32 %v1277, %v2184
  %2186 = vmatpush1.msra.mxu0 %v2185
  %v2187 = vand.u32 %v1274, 4294901760
  %v2188 = vsub.f32 %v1274, %v2187
  %2189 = vmatprep.subr.mxu0 %v2188
  %v2190 = vand.u32 %v1273, 4294901760
  %v2191 = vsub.f32 %v1273, %v2190
  %2192 = vmatpush1.msra.mxu0 %v2191
  %2193 = vmatprep.subr.mxu0 0.0
  %2194 = vmatpush2.msra.mxu0 0.0
  %2195 = vmatprep.subr.mxu0 0.0
  %2196 = vmatpush2.msra.mxu0 0.0
  %2197 = vmatprep.subr.mxu0 0.0
  %2198 = vmatpush2.msra.mxu0 0.0
  %2199 = vmatprep.subr.mxu0 0.0
  %2200 = vmatpush2.msra.mxu0 0.0
  %2201 = vmatprep.subr.mxu0 0.0
  %2202 = vmatpush2.msra.mxu0 0.0
  %2203 = vmatprep.subr.mxu0 0.0
  %2204 = vmatpush2.msra.mxu0 0.0
  %2205 = vmatprep.subr.mxu0 0.0
  %2206 = vmatpush2.msra.mxu0 0.0
  %2207 = vmatprep.subr.mxu0 0.0
  %2208 = vmatpush2.msra.mxu0 0.0
  %2209 = vmatprep.subr.mxu0 0.0
  %2210 = vmatpush2.msra.mxu0 0.0
  %2211 = vmatprep.subr.mxu0 0.0
  %2212 = vmatpush2.msra.mxu0 0.0
  %2213 = vmatprep.subr.mxu0 0.0
  %2214 = vmatpush2.msra.mxu0 0.0
  %2215 = vmatprep.subr.mxu0 0.0
  %2216 = vmatpush2.msra.mxu0 0.0
  %2217 = vmatprep.subr.mxu0 0.0
  %2218 = vmatpush2.msra.mxu0 0.0
  %2219 = vmatprep.subr.mxu0 0.0
  %2220 = vmatpush2.msra.mxu0 0.0
  %2221 = vmatprep.subr.mxu0 0.0
  %2222 = vmatpush2.msra.mxu0 0.0
  %2223 = vmatprep.subr.mxu0 0.0
  %2224 = vmatpush2.msra.mxu0 0.0
  %2225 = vmatprep.mubr.f32.mxu0 0.0
  %v2226 = vand.u32 %v1306, 4294901760
  %v2227 = vsub.f32 %v1306, %v2226
  %2228 = vmatmul.mubr.f32.gmra.mxu0 %v2227
  %v2229 = vpop.f32.mrf.mxu0
  %v2230 = vadd.f32 %v2131, %v2229
  %v2231 = vpop.f32.mrf.mxu0
  %v2232 = vadd.f32 %v2133, %v2231
  %2233 = vmatprep.mubr.f32.mxu0 0.0
  %v2234 = vand.u32 %v1309, 4294901760
  %v2235 = vsub.f32 %v1309, %v2234
  %2236 = vmatmul.mubr.f32.gmra.mxu0 %v2235
  %v2237 = vpop.f32.mrf.mxu0
  %v2238 = vadd.f32 %v2138, %v2237
  %v2239 = vpop.f32.mrf.mxu0
  %v2240 = vadd.f32 %v2140, %v2239
  %2241 = vmatprep.mubr.f32.mxu0 0.0
  %v2242 = vand.u32 %v1312, 4294901760
  %v2243 = vsub.f32 %v1312, %v2242
  %2244 = vmatmul.mubr.f32.gmra.mxu0 %v2243
  %v2245 = vpop.f32.mrf.mxu0
  %v2246 = vadd.f32 %v2145, %v2245
  %v2247 = vpop.f32.mrf.mxu0
  %v2248 = vadd.f32 %v2147, %v2247
  %2249 = vdwg.mxu0
  %2250 = vmatprep.subr.mxu0 0.0
  %2251 = vmatpush1.msra.mxu0 0.0
  %2252 = vmatprep.subr.mxu0 0.0
  %2253 = vmatpush1.msra.mxu0 0.0
  %2254 = vmatprep.subr.mxu0 0.0
  %2255 = vmatpush1.msra.mxu0 0.0
  %2256 = vmatprep.subr.mxu0 0.0
  %2257 = vmatpush1.msra.mxu0 0.0
  %2258 = vmatprep.subr.mxu0 0.0
  %2259 = vmatpush1.msra.mxu0 0.0
  %2260 = vmatprep.subr.mxu0 0.0
  %2261 = vmatpush1.msra.mxu0 0.0
  %2262 = vmatprep.subr.mxu0 0.0
  %2263 = vmatpush1.msra.mxu0 0.0
  %2264 = vmatprep.subr.mxu0 0.0
  %2265 = vmatpush1.msra.mxu0 0.0
  %2266 = vmatprep.subr.mxu0 0.0
  %2267 = vmatpush1.msra.mxu0 0.0
  %2268 = vmatprep.subr.mxu0 0.0
  %2269 = vmatpush1.msra.mxu0 0.0
  %2270 = vmatprep.subr.mxu0 0.0
  %2271 = vmatpush1.msra.mxu0 0.0
  %2272 = vmatprep.subr.mxu0 0.0
  %2273 = vmatpush1.msra.mxu0 0.0
  %2274 = vmatprep.subr.mxu0 0.0
  %2275 = vmatpush1.msra.mxu0 0.0
  %v2276 = vand.u32 %v1282, 4294901760
  %2277 = vmatprep.subr.mxu0 %v2276
  %v2278 = vand.u32 %v1281, 4294901760
  %2279 = vmatpush1.msra.mxu0 %v2278
  %v2280 = vand.u32 %v1278, 4294901760
  %2281 = vmatprep.subr.mxu0 %v2280
  %v2282 = vand.u32 %v1277, 4294901760
  %2283 = vmatpush1.msra.mxu0 %v2282
  %v2284 = vand.u32 %v1274, 4294901760
  %2285 = vmatprep.subr.mxu0 %v2284
  %v2286 = vand.u32 %v1273, 4294901760
  %2287 = vmatpush1.msra.mxu0 %v2286
  %2288 = vmatprep.subr.mxu0 0.0
  %2289 = vmatpush2.msra.mxu0 0.0
  %2290 = vmatprep.subr.mxu0 0.0
  %2291 = vmatpush2.msra.mxu0 0.0
  %2292 = vmatprep.subr.mxu0 0.0
  %2293 = vmatpush2.msra.mxu0 0.0
  %2294 = vmatprep.subr.mxu0 0.0
  %2295 = vmatpush2.msra.mxu0 0.0
  %2296 = vmatprep.subr.mxu0 0.0
  %2297 = vmatpush2.msra.mxu0 0.0
  %2298 = vmatprep.subr.mxu0 0.0
  %2299 = vmatpush2.msra.mxu0 0.0
  %2300 = vmatprep.subr.mxu0 0.0
  %2301 = vmatpush2.msra.mxu0 0.0
  %2302 = vmatprep.subr.mxu0 0.0
  %2303 = vmatpush2.msra.mxu0 0.0
  %2304 = vmatprep.subr.mxu0 0.0
  %2305 = vmatpush2.msra.mxu0 0.0
  %2306 = vmatprep.subr.mxu0 0.0
  %2307 = vmatpush2.msra.mxu0 0.0
  %2308 = vmatprep.subr.mxu0 0.0
  %2309 = vmatpush2.msra.mxu0 0.0
  %2310 = vmatprep.subr.mxu0 0.0
  %2311 = vmatpush2.msra.mxu0 0.0
  %2312 = vmatprep.subr.mxu0 0.0
  %2313 = vmatpush2.msra.mxu0 0.0
  %2314 = vmatprep.subr.mxu0 0.0
  %2315 = vmatpush2.msra.mxu0 0.0
  %2316 = vmatprep.subr.mxu0 0.0
  %2317 = vmatpush2.msra.mxu0 0.0
  %2318 = vmatprep.subr.mxu0 0.0
  %2319 = vmatpush2.msra.mxu0 0.0
  %2320 = vmatprep.mubr.f32.mxu0 0.0
  %v2321 = vand.u32 %v1306, 4294901760
  %v2322 = vsub.f32 %v1306, %v2321
  %v2323 = vand.u32 %v2322, 4294901760
  %2324 = vmatmul.mubr.f32.gmra.mxu0 %v2323
  %v2325 = vpop.f32.mrf.mxu0
  %v2326 = vadd.f32 %v2230, %v2325
  %v2327 = vpop.f32.mrf.mxu0
  %v2328 = vadd.f32 %v2232, %v2327
  %2329 = vmatprep.mubr.f32.mxu0 0.0
  %v2330 = vand.u32 %v1309, 4294901760
  %v2331 = vsub.f32 %v1309, %v2330
  %v2332 = vand.u32 %v2331, 4294901760
  %2333 = vmatmul.mubr.f32.gmra.mxu0 %v2332
  %v2334 = vpop.f32.mrf.mxu0
  %v2335 = vadd.f32 %v2238, %v2334
  %v2336 = vpop.f32.mrf.mxu0
  %v2337 = vadd.f32 %v2240, %v2336
  %2338 = vmatprep.mubr.f32.mxu0 0.0
  %v2339 = vand.u32 %v1312, 4294901760
  %v2340 = vsub.f32 %v1312, %v2339
  %v2341 = vand.u32 %v2340, 4294901760
  %2342 = vmatmul.mubr.f32.gmra.mxu0 %v2341
  %v2343 = vpop.f32.mrf.mxu0
  %v2344 = vadd.f32 %v2246, %v2343
  %v2345 = vpop.f32.mrf.mxu0
  %v2346 = vadd.f32 %v2248, %v2345
  %2347 = vdwg.mxu0
  %2348 = vmatprep.subr.mxu0 0.0
  %2349 = vmatpush1.msra.mxu0 0.0
  %2350 = vmatprep.subr.mxu0 0.0
  %2351 = vmatpush1.msra.mxu0 0.0
  %2352 = vmatprep.subr.mxu0 0.0
  %2353 = vmatpush1.msra.mxu0 0.0
  %2354 = vmatprep.subr.mxu0 0.0
  %2355 = vmatpush1.msra.mxu0 0.0
  %2356 = vmatprep.subr.mxu0 0.0
  %2357 = vmatpush1.msra.mxu0 0.0
  %2358 = vmatprep.subr.mxu0 0.0
  %2359 = vmatpush1.msra.mxu0 0.0
  %2360 = vmatprep.subr.mxu0 0.0
  %2361 = vmatpush1.msra.mxu0 0.0
  %2362 = vmatprep.subr.mxu0 0.0
  %2363 = vmatpush1.msra.mxu0 0.0
  %2364 = vmatprep.subr.mxu0 0.0
  %2365 = vmatpush1.msra.mxu0 0.0
  %2366 = vmatprep.subr.mxu0 0.0
  %2367 = vmatpush1.msra.mxu0 0.0
  %2368 = vmatprep.subr.mxu0 0.0
  %2369 = vmatpush1.msra.mxu0 0.0
  %2370 = vmatprep.subr.mxu0 0.0
  %2371 = vmatpush1.msra.mxu0 0.0
  %2372 = vmatprep.subr.mxu0 0.0
  %2373 = vmatpush1.msra.mxu0 0.0
  %v2374 = vand.u32 %v1282, 4294901760
  %v2375 = vsub.f32 %v1282, %v2374
  %v2376 = vand.u32 %v2375, 4294901760
  %2377 = vmatprep.subr.mxu0 %v2376
  %v2378 = vand.u32 %v1281, 4294901760
  %v2379 = vsub.f32 %v1281, %v2378
  %v2380 = vand.u32 %v2379, 4294901760
  %2381 = vmatpush1.msra.mxu0 %v2380
  %v2382 = vand.u32 %v1278, 4294901760
  %v2383 = vsub.f32 %v1278, %v2382
  %v2384 = vand.u32 %v2383, 4294901760
  %2385 = vmatprep.subr.mxu0 %v2384
  %v2386 = vand.u32 %v1277, 4294901760
  %v2387 = vsub.f32 %v1277, %v2386
  %v2388 = vand.u32 %v2387, 4294901760
  %2389 = vmatpush1.msra.mxu0 %v2388
  %v2390 = vand.u32 %v1274, 4294901760
  %v2391 = vsub.f32 %v1274, %v2390
  %v2392 = vand.u32 %v2391, 4294901760
  %2393 = vmatprep.subr.mxu0 %v2392
  %v2394 = vand.u32 %v1273, 4294901760
  %v2395 = vsub.f32 %v1273, %v2394
  %v2396 = vand.u32 %v2395, 4294901760
  %2397 = vmatpush1.msra.mxu0 %v2396
  %2398 = vmatprep.subr.mxu0 0.0
  %2399 = vmatpush2.msra.mxu0 0.0
  %2400 = vmatprep.subr.mxu0 0.0
  %2401 = vmatpush2.msra.mxu0 0.0
  %2402 = vmatprep.subr.mxu0 0.0
  %2403 = vmatpush2.msra.mxu0 0.0
  %2404 = vmatprep.subr.mxu0 0.0
  %2405 = vmatpush2.msra.mxu0 0.0
  %2406 = vmatprep.subr.mxu0 0.0
  %2407 = vmatpush2.msra.mxu0 0.0
  %2408 = vmatprep.subr.mxu0 0.0
  %2409 = vmatpush2.msra.mxu0 0.0
  %2410 = vmatprep.subr.mxu0 0.0
  %2411 = vmatpush2.msra.mxu0 0.0
  %2412 = vmatprep.subr.mxu0 0.0
  %2413 = vmatpush2.msra.mxu0 0.0
  %2414 = vmatprep.subr.mxu0 0.0
  %2415 = vmatpush2.msra.mxu0 0.0
  %2416 = vmatprep.subr.mxu0 0.0
  %2417 = vmatpush2.msra.mxu0 0.0
  %2418 = vmatprep.subr.mxu0 0.0
  %2419 = vmatpush2.msra.mxu0 0.0
  %2420 = vmatprep.subr.mxu0 0.0
  %2421 = vmatpush2.msra.mxu0 0.0
  %2422 = vmatprep.subr.mxu0 0.0
  %2423 = vmatpush2.msra.mxu0 0.0
  %2424 = vmatprep.subr.mxu0 0.0
  %2425 = vmatpush2.msra.mxu0 0.0
  %2426 = vmatprep.subr.mxu0 0.0
  %2427 = vmatpush2.msra.mxu0 0.0
  %2428 = vmatprep.subr.mxu0 0.0
  %2429 = vmatpush2.msra.mxu0 0.0
  %2430 = vmatprep.mubr.f32.mxu0 0.0
  %v2431 = vand.u32 %v1306, 4294901760
  %2432 = vmatmul.mubr.f32.gmra.mxu0 %v2431
  %v2433 = vpop.f32.mrf.mxu0
  %v2434 = vadd.f32 %v2326, %v2433
  %v2435 = vpop.f32.mrf.mxu0
  %v2436 = vadd.f32 %v2328, %v2435
  %2437 = vmatprep.mubr.f32.mxu0 0.0
  %v2438 = vand.u32 %v1309, 4294901760
  %2439 = vmatmul.mubr.f32.gmra.mxu0 %v2438
  %v2440 = vpop.f32.mrf.mxu0
  %v2441 = vadd.f32 %v2335, %v2440
  %v2442 = vpop.f32.mrf.mxu0
  %v2443 = vadd.f32 %v2337, %v2442
  %2444 = vmatprep.mubr.f32.mxu0 0.0
  %v2445 = vand.u32 %v1312, 4294901760
  %2446 = vmatmul.mubr.f32.gmra.mxu0 %v2445
  %v2447 = vpop.f32.mrf.mxu0
  %v2448 = vadd.f32 %v2344, %v2447
  %v2449 = vpop.f32.mrf.mxu0
  %v2450 = vadd.f32 %v2346, %v2449
  %2451 = vdwg.mxu0
  %2452 = vmatprep.subr.mxu0 0.0
  %2453 = vmatpush1.msra.mxu0 0.0
  %2454 = vmatprep.subr.mxu0 0.0
  %2455 = vmatpush1.msra.mxu0 0.0
  %2456 = vmatprep.subr.mxu0 0.0
  %2457 = vmatpush1.msra.mxu0 0.0
  %2458 = vmatprep.subr.mxu0 0.0
  %2459 = vmatpush1.msra.mxu0 0.0
  %2460 = vmatprep.subr.mxu0 0.0
  %2461 = vmatpush1.msra.mxu0 0.0
  %2462 = vmatprep.subr.mxu0 0.0
  %2463 = vmatpush1.msra.mxu0 0.0
  %2464 = vmatprep.subr.mxu0 0.0
  %2465 = vmatpush1.msra.mxu0 0.0
  %2466 = vmatprep.subr.mxu0 0.0
  %2467 = vmatpush1.msra.mxu0 0.0
  %2468 = vmatprep.subr.mxu0 0.0
  %2469 = vmatpush1.msra.mxu0 0.0
  %2470 = vmatprep.subr.mxu0 0.0
  %2471 = vmatpush1.msra.mxu0 0.0
  %2472 = vmatprep.subr.mxu0 0.0
  %2473 = vmatpush1.msra.mxu0 0.0
  %2474 = vmatprep.subr.mxu0 0.0
  %2475 = vmatpush1.msra.mxu0 0.0
  %2476 = vmatprep.subr.mxu0 0.0
  %2477 = vmatpush1.msra.mxu0 0.0
  %v2478 = vand.u32 %v1282, 4294901760
  %2479 = vmatprep.subr.mxu0 %v2478
  %v2480 = vand.u32 %v1281, 4294901760
  %2481 = vmatpush1.msra.mxu0 %v2480
  %v2482 = vand.u32 %v1278, 4294901760
  %2483 = vmatprep.subr.mxu0 %v2482
  %v2484 = vand.u32 %v1277, 4294901760
  %2485 = vmatpush1.msra.mxu0 %v2484
  %v2486 = vand.u32 %v1274, 4294901760
  %2487 = vmatprep.subr.mxu0 %v2486
  %v2488 = vand.u32 %v1273, 4294901760
  %2489 = vmatpush1.msra.mxu0 %v2488
  %2490 = vmatprep.subr.mxu0 0.0
  %2491 = vmatpush2.msra.mxu0 0.0
  %2492 = vmatprep.subr.mxu0 0.0
  %2493 = vmatpush2.msra.mxu0 0.0
  %2494 = vmatprep.subr.mxu0 0.0
  %2495 = vmatpush2.msra.mxu0 0.0
  %2496 = vmatprep.subr.mxu0 0.0
  %2497 = vmatpush2.msra.mxu0 0.0
  %2498 = vmatprep.subr.mxu0 0.0
  %2499 = vmatpush2.msra.mxu0 0.0
  %2500 = vmatprep.subr.mxu0 0.0
  %2501 = vmatpush2.msra.mxu0 0.0
  %2502 = vmatprep.subr.mxu0 0.0
  %2503 = vmatpush2.msra.mxu0 0.0
  %2504 = vmatprep.subr.mxu0 0.0
  %2505 = vmatpush2.msra.mxu0 0.0
  %2506 = vmatprep.subr.mxu0 0.0
  %2507 = vmatpush2.msra.mxu0 0.0
  %2508 = vmatprep.subr.mxu0 0.0
  %2509 = vmatpush2.msra.mxu0 0.0
  %2510 = vmatprep.subr.mxu0 0.0
  %2511 = vmatpush2.msra.mxu0 0.0
  %2512 = vmatprep.subr.mxu0 0.0
  %2513 = vmatpush2.msra.mxu0 0.0
  %2514 = vmatprep.subr.mxu0 0.0
  %2515 = vmatpush2.msra.mxu0 0.0
  %2516 = vmatprep.subr.mxu0 0.0
  %2517 = vmatpush2.msra.mxu0 0.0
  %2518 = vmatprep.subr.mxu0 0.0
  %2519 = vmatpush2.msra.mxu0 0.0
  %2520 = vmatprep.subr.mxu0 0.0
  %2521 = vmatpush2.msra.mxu0 0.0
  %2522 = vmatprep.mubr.f32.mxu0 0.0
  %v2523 = vand.u32 %v1306, 4294901760
  %2524 = vmatmul.mubr.f32.gmra.mxu0 %v2523
  %v2525 = vpop.f32.mrf.mxu0
  %v2526 = vadd.f32 %v2434, %v2525
  %v2527 = vpop.f32.mrf.mxu0
  %v2528 = vadd.f32 %v2436, %v2527
  %2529 = vmatprep.mubr.f32.mxu0 0.0
  %v2530 = vand.u32 %v1309, 4294901760
  %2531 = vmatmul.mubr.f32.gmra.mxu0 %v2530
  %v2532 = vpop.f32.mrf.mxu0
  %v2533 = vadd.f32 %v2441, %v2532
  %v2534 = vpop.f32.mrf.mxu0
  %v2535 = vadd.f32 %v2443, %v2534
  %2536 = vmatprep.mubr.f32.mxu0 0.0
  %v2537 = vand.u32 %v1312, 4294901760
  %2538 = vmatmul.mubr.f32.gmra.mxu0 %v2537
  %v2539 = vpop.f32.mrf.mxu0
  %v2540 = vadd.f32 %v2448, %v2539
  %v2541 = vpop.f32.mrf.mxu0
  %v2542 = vadd.f32 %v2450, %v2541
  %2543 = vdwg.mxu0
  %v2544 = vmax.f32 %v1911, 0.0
  %v2545 = vmax.f32 %v1913, 0.0
  %v2546 = vmax.f32 %v2526, 0.0
  %v2547 = vmax.f32 %v2528, 0.0
  %v2548 = vmax.f32 %v1918, 0.0
  %v2549 = vmax.f32 %v1920, 0.0
  %v2550 = vmax.f32 %v2533, 0.0
  %v2551 = vmax.f32 %v2535, 0.0
  %v2552 = vmax.f32 %v1925, 0.0
  %v2553 = vmax.f32 %v1927, 0.0
  %v2554 = vmax.f32 %v2540, 0.0
  %v2555 = vmax.f32 %v2542, 0.0
  %v2556 = vmin.f32 %v1911, 0.0
  %v2557 = vmin.f32 %v1913, 0.0
  %v2558 = vmin.f32 %v2526, 0.0
  %v2559 = vmin.f32 %v2528, 0.0
  %v2560 = vmin.f32 %v1918, 0.0
  %v2561 = vmin.f32 %v1920, 0.0
  %v2562 = vmin.f32 %v2533, 0.0
  %v2563 = vmin.f32 %v2535, 0.0
  %v2564 = vmin.f32 %v1925, 0.0
  %v2565 = vmin.f32 %v1927, 0.0
  %v2566 = vmin.f32 %v2540, 0.0
  %v2567 = vmin.f32 %v2542, 0.0
  %v2568 = vmul.f32 %v2556, 1.442695
  %v2569 = vpow.pop %v2568
  %v2570 = vmul.f32 %v2557, 1.442695
  %v2571 = vpow.pop %v2570
  %v2572 = vmul.f32 %v2558, 1.442695
  %v2573 = vpow.pop %v2572
  %v2574 = vmul.f32 %v2559, 1.442695
  %v2575 = vpow.pop %v2574
  %v2576 = vmul.f32 %v2560, 1.442695
  %v2577 = vpow.pop %v2576
  %v2578 = vmul.f32 %v2561, 1.442695
  %v2579 = vpow.pop %v2578
  %v2580 = vmul.f32 %v2562, 1.442695
  %v2581 = vpow.pop %v2580
  %v2582 = vmul.f32 %v2563, 1.442695
  %v2583 = vpow.pop %v2582
  %v2584 = vmul.f32 %v2564, 1.442695
  %v2585 = vpow.pop %v2584
  %v2586 = vmul.f32 %v2565, 1.442695
  %v2587 = vpow.pop %v2586
  %v2588 = vmul.f32 %v2566, 1.442695
  %v2589 = vpow.pop %v2588
  %v2590 = vmul.f32 %v2567, 1.442695
  %v2591 = vpow.pop %v2590
  %v2592 = vsub.f32 %v2569, 1.0
  %v2593 = vsub.f32 %v2571, 1.0
  %v2594 = vsub.f32 %v2573, 1.0
  %v2595 = vsub.f32 %v2575, 1.0
  %v2596 = vsub.f32 %v2577, 1.0
  %v2597 = vsub.f32 %v2579, 1.0
  %v2598 = vsub.f32 %v2581, 1.0
  %v2599 = vsub.f32 %v2583, 1.0
  %v2600 = vsub.f32 %v2585, 1.0
  %v2601 = vsub.f32 %v2587, 1.0
  %v2602 = vsub.f32 %v2589, 1.0
  %v2603 = vsub.f32 %v2591, 1.0
  %v2604 = vadd.f32 %v2544, %v2592
  %v2605 = vadd.f32 %v2545, %v2593
  %v2606 = vadd.f32 %v2546, %v2594
  %v2607 = vadd.f32 %v2547, %v2595
  %v2608 = vadd.f32 %v2548, %v2596
  %v2609 = vadd.f32 %v2549, %v2597
  %v2610 = vadd.f32 %v2550, %v2598
  %v2611 = vadd.f32 %v2551, %v2599
  %v2612 = vadd.f32 %v2552, %v2600
  %v2613 = vadd.f32 %v2553, %v2601
  %v2614 = vadd.f32 %v2554, %v2602
  %v2615 = vadd.f32 %v2555, %v2603
  %v2616 = vld [vmem:[%s3] sm:$0x3]
  %v2617 = vld [vmem:[%s6] sm:$0x3]
  %2619 = vset.pattern.permute.xlu0 0
  %2620 = vperm.xlu0 %2619, %v2617
  %v2621 = vpop.permute.xlu0 %2620
  %v2624 = vsel %vm1304, %v2616, 0
  %2626 = vmatprep.subr.mxu0 0.0
  %2627 = vmatpush1.msra.mxu0 0.0
  %2628 = vmatprep.subr.mxu0 0.0
  %2629 = vmatpush1.msra.mxu0 0.0
  %2630 = vmatprep.subr.mxu0 0.0
  %2631 = vmatpush1.msra.mxu0 0.0
  %2632 = vmatprep.subr.mxu0 0.0
  %2633 = vmatpush1.msra.mxu0 0.0
  %2634 = vmatprep.subr.mxu0 0.0
  %2635 = vmatpush1.msra.mxu0 0.0
  %2636 = vmatprep.subr.mxu0 0.0
  %2637 = vmatpush1.msra.mxu0 0.0
  %2638 = vmatprep.subr.mxu0 0.0
  %2639 = vmatpush1.msra.mxu0 0.0
  %2640 = vmatprep.subr.mxu0 0.0
  %2641 = vmatpush1.msra.mxu0 0.0
  %2642 = vmatprep.subr.mxu0 0.0
  %2643 = vmatpush1.msra.mxu0 0.0
  %2644 = vmatprep.subr.mxu0 0.0
  %2645 = vmatpush1.msra.mxu0 0.0
  %2646 = vmatprep.subr.mxu0 0.0
  %2647 = vmatpush1.msra.mxu0 0.0
  %2648 = vmatprep.subr.mxu0 0.0
  %2649 = vmatpush1.msra.mxu0 0.0
  %2650 = vmatprep.subr.mxu0 0.0
  %2651 = vmatpush1.msra.mxu0 0.0
  %v2652 = vand.u32 %v2613, 4294901760
  %2653 = vmatprep.subr.mxu0 %v2652
  %v2654 = vand.u32 %v2612, 4294901760
  %2655 = vmatpush1.msra.mxu0 %v2654
  %v2656 = vand.u32 %v2609, 4294901760
  %2657 = vmatprep.subr.mxu0 %v2656
  %v2658 = vand.u32 %v2608, 4294901760
  %2659 = vmatpush1.msra.mxu0 %v2658
  %v2660 = vand.u32 %v2605, 4294901760
  %2661 = vmatprep.subr.mxu0 %v2660
  %v2662 = vand.u32 %v2604, 4294901760
  %2663 = vmatpush1.msra.mxu0 %v2662
  %2664 = vmatprep.subr.mxu0 0.0
  %2665 = vmatpush2.msra.mxu0 0.0
  %2666 = vmatprep.subr.mxu0 0.0
  %2667 = vmatpush2.msra.mxu0 0.0
  %2668 = vmatprep.subr.mxu0 0.0
  %2669 = vmatpush2.msra.mxu0 0.0
  %2670 = vmatprep.subr.mxu0 0.0
  %2671 = vmatpush2.msra.mxu0 0.0
  %2672 = vmatprep.subr.mxu0 0.0
  %2673 = vmatpush2.msra.mxu0 0.0
  %2674 = vmatprep.subr.mxu0 0.0
  %2675 = vmatpush2.msra.mxu0 0.0
  %2676 = vmatprep.subr.mxu0 0.0
  %2677 = vmatpush2.msra.mxu0 0.0
  %2678 = vmatprep.subr.mxu0 0.0
  %2679 = vmatpush2.msra.mxu0 0.0
  %2680 = vmatprep.subr.mxu0 0.0
  %2681 = vmatpush2.msra.mxu0 0.0
  %2682 = vmatprep.subr.mxu0 0.0
  %2683 = vmatpush2.msra.mxu0 0.0
  %2684 = vmatprep.subr.mxu0 0.0
  %2685 = vmatpush2.msra.mxu0 0.0
  %2686 = vmatprep.subr.mxu0 0.0
  %2687 = vmatpush2.msra.mxu0 0.0
  %2688 = vmatprep.subr.mxu0 0.0
  %2689 = vmatpush2.msra.mxu0 0.0
  %2690 = vmatprep.subr.mxu0 0.0
  %2691 = vmatpush2.msra.mxu0 0.0
  %2692 = vmatprep.subr.mxu0 0.0
  %2693 = vmatpush2.msra.mxu0 0.0
  %2694 = vmatprep.subr.mxu0 0.0
  %2695 = vmatpush2.msra.mxu0 0.0
  %2696 = vmatprep.mubr.f32.mxu0 0.0
  %v2697 = vand.u32 %v2624, 4294901760
  %v2698 = vsub.f32 %v2624, %v2697
  %v2699 = vand.u32 %v2698, 4294901760
  %v2700 = vsub.f32 %v2698, %v2699
  %v2701 = vand.u32 %v2700, 4294901760
  %2702 = vmatmul.mubr.f32.gmra.mxu0 %v2701
  %v2703 = vpop.f32.mrf.mxu0
  %v2704 = vadd.f32 %v2621, %v2703
  %v2705 = vpop.f32.mrf.mxu0
  %v2706 = vadd.f32 %v2621, %v2705
  %2707 = vdwg.mxu0
  %2708 = vmatprep.subr.mxu0 0.0
  %2709 = vmatpush1.msra.mxu0 0.0
  %2710 = vmatprep.subr.mxu0 0.0
  %2711 = vmatpush1.msra.mxu0 0.0
  %2712 = vmatprep.subr.mxu0 0.0
  %2713 = vmatpush1.msra.mxu0 0.0
  %2714 = vmatprep.subr.mxu0 0.0
  %2715 = vmatpush1.msra.mxu0 0.0
  %2716 = vmatprep.subr.mxu0 0.0
  %2717 = vmatpush1.msra.mxu0 0.0
  %2718 = vmatprep.subr.mxu0 0.0
  %2719 = vmatpush1.msra.mxu0 0.0
  %2720 = vmatprep.subr.mxu0 0.0
  %2721 = vmatpush1.msra.mxu0 0.0
  %2722 = vmatprep.subr.mxu0 0.0
  %2723 = vmatpush1.msra.mxu0 0.0
  %2724 = vmatprep.subr.mxu0 0.0
  %2725 = vmatpush1.msra.mxu0 0.0
  %2726 = vmatprep.subr.mxu0 0.0
  %2727 = vmatpush1.msra.mxu0 0.0
  %2728 = vmatprep.subr.mxu0 0.0
  %2729 = vmatpush1.msra.mxu0 0.0
  %2730 = vmatprep.subr.mxu0 0.0
  %2731 = vmatpush1.msra.mxu0 0.0
  %2732 = vmatprep.subr.mxu0 0.0
  %2733 = vmatpush1.msra.mxu0 0.0
  %v2734 = vand.u32 %v2613, 4294901760
  %v2735 = vsub.f32 %v2613, %v2734
  %v2736 = vand.u32 %v2735, 4294901760
  %v2737 = vsub.f32 %v2735, %v2736
  %v2738 = vand.u32 %v2737, 4294901760
  %2739 = vmatprep.subr.mxu0 %v2738
  %v2740 = vand.u32 %v2612, 4294901760
  %v2741 = vsub.f32 %v2612, %v2740
  %v2742 = vand.u32 %v2741, 4294901760
  %v2743 = vsub.f32 %v2741, %v2742
  %v2744 = vand.u32 %v2743, 4294901760
  %2745 = vmatpush1.msra.mxu0 %v2744
  %v2746 = vand.u32 %v2609, 4294901760
  %v2747 = vsub.f32 %v2609, %v2746
  %v2748 = vand.u32 %v2747, 4294901760
  %v2749 = vsub.f32 %v2747, %v2748
  %v2750 = vand.u32 %v2749, 4294901760
  %2751 = vmatprep.subr.mxu0 %v2750
  %v2752 = vand.u32 %v2608, 4294901760
  %v2753 = vsub.f32 %v2608, %v2752
  %v2754 = vand.u32 %v2753, 4294901760
  %v2755 = vsub.f32 %v2753, %v2754
  %v2756 = vand.u32 %v2755, 4294901760
  %2757 = vmatpush1.msra.mxu0 %v2756
  %v2758 = vand.u32 %v2605, 4294901760
  %v2759 = vsub.f32 %v2605, %v2758
  %v2760 = vand.u32 %v2759, 4294901760
  %v2761 = vsub.f32 %v2759, %v2760
  %v2762 = vand.u32 %v2761, 4294901760
  %2763 = vmatprep.subr.mxu0 %v2762
  %v2764 = vand.u32 %v2604, 4294901760
  %v2765 = vsub.f32 %v2604, %v2764
  %v2766 = vand.u32 %v2765, 4294901760
  %v2767 = vsub.f32 %v2765, %v2766
  %v2768 = vand.u32 %v2767, 4294901760
  %2769 = vmatpush1.msra.mxu0 %v2768
  %2770 = vmatprep.subr.mxu0 0.0
  %2771 = vmatpush2.msra.mxu0 0.0
  %2772 = vmatprep.subr.mxu0 0.0
  %2773 = vmatpush2.msra.mxu0 0.0
  %2774 = vmatprep.subr.mxu0 0.0
  %2775 = vmatpush2.msra.mxu0 0.0
  %2776 = vmatprep.subr.mxu0 0.0
  %2777 = vmatpush2.msra.mxu0 0.0
  %2778 = vmatprep.subr.mxu0 0.0
  %2779 = vmatpush2.msra.mxu0 0.0
  %2780 = vmatprep.subr.mxu0 0.0
  %2781 = vmatpush2.msra.mxu0 0.0
  %2782 = vmatprep.subr.mxu0 0.0
  %2783 = vmatpush2.msra.mxu0 0.0
  %2784 = vmatprep.subr.mxu0 0.0
  %2785 = vmatpush2.msra.mxu0 0.0
  %2786 = vmatprep.subr.mxu0 0.0
  %2787 = vmatpush2.msra.mxu0 0.0
  %2788 = vmatprep.subr.mxu0 0.0
  %2789 = vmatpush2.msra.mxu0 0.0
  %2790 = vmatprep.subr.mxu0 0.0
  %2791 = vmatpush2.msra.mxu0 0.0
  %2792 = vmatprep.subr.mxu0 0.0
  %2793 = vmatpush2.msra.mxu0 0.0
  %2794 = vmatprep.subr.mxu0 0.0
  %2795 = vmatpush2.msra.mxu0 0.0
  %2796 = vmatprep.subr.mxu0 0.0
  %2797 = vmatpush2.msra.mxu0 0.0
  %2798 = vmatprep.subr.mxu0 0.0
  %2799 = vmatpush2.msra.mxu0 0.0
  %2800 = vmatprep.subr.mxu0 0.0
  %2801 = vmatpush2.msra.mxu0 0.0
  %2802 = vmatprep.mubr.f32.mxu0 0.0
  %v2803 = vand.u32 %v2624, 4294901760
  %2804 = vmatmul.mubr.f32.gmra.mxu0 %v2803
  %v2805 = vpop.f32.mrf.mxu0
  %v2806 = vadd.f32 %v2704, %v2805
  %v2807 = vpop.f32.mrf.mxu0
  %v2808 = vadd.f32 %v2706, %v2807
  %2809 = vdwg.mxu0
  %2810 = vmatprep.subr.mxu0 0.0
  %2811 = vmatpush1.msra.mxu0 0.0
  %2812 = vmatprep.subr.mxu0 0.0
  %2813 = vmatpush1.msra.mxu0 0.0
  %2814 = vmatprep.subr.mxu0 0.0
  %2815 = vmatpush1.msra.mxu0 0.0
  %2816 = vmatprep.subr.mxu0 0.0
  %2817 = vmatpush1.msra.mxu0 0.0
  %2818 = vmatprep.subr.mxu0 0.0
  %2819 = vmatpush1.msra.mxu0 0.0
  %2820 = vmatprep.subr.mxu0 0.0
  %2821 = vmatpush1.msra.mxu0 0.0
  %2822 = vmatprep.subr.mxu0 0.0
  %2823 = vmatpush1.msra.mxu0 0.0
  %2824 = vmatprep.subr.mxu0 0.0
  %2825 = vmatpush1.msra.mxu0 0.0
  %2826 = vmatprep.subr.mxu0 0.0
  %2827 = vmatpush1.msra.mxu0 0.0
  %2828 = vmatprep.subr.mxu0 0.0
  %2829 = vmatpush1.msra.mxu0 0.0
  %2830 = vmatprep.subr.mxu0 0.0
  %2831 = vmatpush1.msra.mxu0 0.0
  %2832 = vmatprep.subr.mxu0 0.0
  %2833 = vmatpush1.msra.mxu0 0.0
  %2834 = vmatprep.subr.mxu0 0.0
  %2835 = vmatpush1.msra.mxu0 0.0
  %v2836 = vand.u32 %v2613, 4294901760
  %v2837 = vsub.f32 %v2613, %v2836
  %2838 = vmatprep.subr.mxu0 %v2837
  %v2839 = vand.u32 %v2612, 4294901760
  %v2840 = vsub.f32 %v2612, %v2839
  %2841 = vmatpush1.msra.mxu0 %v2840
  %v2842 = vand.u32 %v2609, 4294901760
  %v2843 = vsub.f32 %v2609, %v2842
  %2844 = vmatprep.subr.mxu0 %v2843
  %v2845 = vand.u32 %v2608, 4294901760
  %v2846 = vsub.f32 %v2608, %v2845
  %2847 = vmatpush1.msra.mxu0 %v2846
  %v2848 = vand.u32 %v2605, 4294901760
  %v2849 = vsub.f32 %v2605, %v2848
  %2850 = vmatprep.subr.mxu0 %v2849
  %v2851 = vand.u32 %v2604, 4294901760
  %v2852 = vsub.f32 %v2604, %v2851
  %2853 = vmatpush1.msra.mxu0 %v2852
  %2854 = vmatprep.subr.mxu0 0.0
  %2855 = vmatpush2.msra.mxu0 0.0
  %2856 = vmatprep.subr.mxu0 0.0
  %2857 = vmatpush2.msra.mxu0 0.0
  %2858 = vmatprep.subr.mxu0 0.0
  %2859 = vmatpush2.msra.mxu0 0.0
  %2860 = vmatprep.subr.mxu0 0.0
  %2861 = vmatpush2.msra.mxu0 0.0
  %2862 = vmatprep.subr.mxu0 0.0
  %2863 = vmatpush2.msra.mxu0 0.0
  %2864 = vmatprep.subr.mxu0 0.0
  %2865 = vmatpush2.msra.mxu0 0.0
  %2866 = vmatprep.subr.mxu0 0.0
  %2867 = vmatpush2.msra.mxu0 0.0
  %2868 = vmatprep.subr.mxu0 0.0
  %2869 = vmatpush2.msra.mxu0 0.0
  %2870 = vmatprep.subr.mxu0 0.0
  %2871 = vmatpush2.msra.mxu0 0.0
  %2872 = vmatprep.subr.mxu0 0.0
  %2873 = vmatpush2.msra.mxu0 0.0
  %2874 = vmatprep.subr.mxu0 0.0
  %2875 = vmatpush2.msra.mxu0 0.0
  %2876 = vmatprep.subr.mxu0 0.0
  %2877 = vmatpush2.msra.mxu0 0.0
  %2878 = vmatprep.subr.mxu0 0.0
  %2879 = vmatpush2.msra.mxu0 0.0
  %2880 = vmatprep.subr.mxu0 0.0
  %2881 = vmatpush2.msra.mxu0 0.0
  %2882 = vmatprep.subr.mxu0 0.0
  %2883 = vmatpush2.msra.mxu0 0.0
  %2884 = vmatprep.subr.mxu0 0.0
  %2885 = vmatpush2.msra.mxu0 0.0
  %2886 = vmatprep.mubr.f32.mxu0 0.0
  %v2887 = vand.u32 %v2624, 4294901760
  %v2888 = vsub.f32 %v2624, %v2887
  %2889 = vmatmul.mubr.f32.gmra.mxu0 %v2888
  %v2890 = vpop.f32.mrf.mxu0
  %v2891 = vadd.f32 %v2806, %v2890
  %v2892 = vpop.f32.mrf.mxu0
  %v2893 = vadd.f32 %v2808, %v2892
  %2894 = vdwg.mxu0
  %2895 = vmatprep.subr.mxu0 0.0
  %2896 = vmatpush1.msra.mxu0 0.0
  %2897 = vmatprep.subr.mxu0 0.0
  %2898 = vmatpush1.msra.mxu0 0.0
  %2899 = vmatprep.subr.mxu0 0.0
  %2900 = vmatpush1.msra.mxu0 0.0
  %2901 = vmatprep.subr.mxu0 0.0
  %2902 = vmatpush1.msra.mxu0 0.0
  %2903 = vmatprep.subr.mxu0 0.0
  %2904 = vmatpush1.msra.mxu0 0.0
  %2905 = vmatprep.subr.mxu0 0.0
  %2906 = vmatpush1.msra.mxu0 0.0
  %2907 = vmatprep.subr.mxu0 0.0
  %2908 = vmatpush1.msra.mxu0 0.0
  %2909 = vmatprep.subr.mxu0 0.0
  %2910 = vmatpush1.msra.mxu0 0.0
  %2911 = vmatprep.subr.mxu0 0.0
  %2912 = vmatpush1.msra.mxu0 0.0
  %2913 = vmatprep.subr.mxu0 0.0
  %2914 = vmatpush1.msra.mxu0 0.0
  %2915 = vmatprep.subr.mxu0 0.0
  %2916 = vmatpush1.msra.mxu0 0.0
  %2917 = vmatprep.subr.mxu0 0.0
  %2918 = vmatpush1.msra.mxu0 0.0
  %2919 = vmatprep.subr.mxu0 0.0
  %2920 = vmatpush1.msra.mxu0 0.0
  %v2921 = vand.u32 %v2613, 4294901760
  %2922 = vmatprep.subr.mxu0 %v2921
  %v2923 = vand.u32 %v2612, 4294901760
  %2924 = vmatpush1.msra.mxu0 %v2923
  %v2925 = vand.u32 %v2609, 4294901760
  %2926 = vmatprep.subr.mxu0 %v2925
  %v2927 = vand.u32 %v2608, 4294901760
  %2928 = vmatpush1.msra.mxu0 %v2927
  %v2929 = vand.u32 %v2605, 4294901760
  %2930 = vmatprep.subr.mxu0 %v2929
  %v2931 = vand.u32 %v2604, 4294901760
  %2932 = vmatpush1.msra.mxu0 %v2931
  %2933 = vmatprep.subr.mxu0 0.0
  %2934 = vmatpush2.msra.mxu0 0.0
  %2935 = vmatprep.subr.mxu0 0.0
  %2936 = vmatpush2.msra.mxu0 0.0
  %2937 = vmatprep.subr.mxu0 0.0
  %2938 = vmatpush2.msra.mxu0 0.0
  %2939 = vmatprep.subr.mxu0 0.0
  %2940 = vmatpush2.msra.mxu0 0.0
  %2941 = vmatprep.subr.mxu0 0.0
  %2942 = vmatpush2.msra.mxu0 0.0
  %2943 = vmatprep.subr.mxu0 0.0
  %2944 = vmatpush2.msra.mxu0 0.0
  %2945 = vmatprep.subr.mxu0 0.0
  %2946 = vmatpush2.msra.mxu0 0.0
  %2947 = vmatprep.subr.mxu0 0.0
  %2948 = vmatpush2.msra.mxu0 0.0
  %2949 = vmatprep.subr.mxu0 0.0
  %2950 = vmatpush2.msra.mxu0 0.0
  %2951 = vmatprep.subr.mxu0 0.0
  %2952 = vmatpush2.msra.mxu0 0.0
  %2953 = vmatprep.subr.mxu0 0.0
  %2954 = vmatpush2.msra.mxu0 0.0
  %2955 = vmatprep.subr.mxu0 0.0
  %2956 = vmatpush2.msra.mxu0 0.0
  %2957 = vmatprep.subr.mxu0 0.0
  %2958 = vmatpush2.msra.mxu0 0.0
  %2959 = vmatprep.subr.mxu0 0.0
  %2960 = vmatpush2.msra.mxu0 0.0
  %2961 = vmatprep.subr.mxu0 0.0
  %2962 = vmatpush2.msra.mxu0 0.0
  %2963 = vmatprep.subr.mxu0 0.0
  %2964 = vmatpush2.msra.mxu0 0.0
  %2965 = vmatprep.mubr.f32.mxu0 0.0
  %v2966 = vand.u32 %v2624, 4294901760
  %v2967 = vsub.f32 %v2624, %v2966
  %v2968 = vand.u32 %v2967, 4294901760
  %2969 = vmatmul.mubr.f32.gmra.mxu0 %v2968
  %v2970 = vpop.f32.mrf.mxu0
  %v2971 = vadd.f32 %v2891, %v2970
  %v2972 = vpop.f32.mrf.mxu0
  %v2973 = vadd.f32 %v2893, %v2972
  %2974 = vdwg.mxu0
  %2975 = vmatprep.subr.mxu0 0.0
  %2976 = vmatpush1.msra.mxu0 0.0
  %2977 = vmatprep.subr.mxu0 0.0
  %2978 = vmatpush1.msra.mxu0 0.0
  %2979 = vmatprep.subr.mxu0 0.0
  %2980 = vmatpush1.msra.mxu0 0.0
  %2981 = vmatprep.subr.mxu0 0.0
  %2982 = vmatpush1.msra.mxu0 0.0
  %2983 = vmatprep.subr.mxu0 0.0
  %2984 = vmatpush1.msra.mxu0 0.0
  %2985 = vmatprep.subr.mxu0 0.0
  %2986 = vmatpush1.msra.mxu0 0.0
  %2987 = vmatprep.subr.mxu0 0.0
  %2988 = vmatpush1.msra.mxu0 0.0
  %2989 = vmatprep.subr.mxu0 0.0
  %2990 = vmatpush1.msra.mxu0 0.0
  %2991 = vmatprep.subr.mxu0 0.0
  %2992 = vmatpush1.msra.mxu0 0.0
  %2993 = vmatprep.subr.mxu0 0.0
  %2994 = vmatpush1.msra.mxu0 0.0
  %2995 = vmatprep.subr.mxu0 0.0
  %2996 = vmatpush1.msra.mxu0 0.0
  %2997 = vmatprep.subr.mxu0 0.0
  %2998 = vmatpush1.msra.mxu0 0.0
  %2999 = vmatprep.subr.mxu0 0.0
  %3000 = vmatpush1.msra.mxu0 0.0
  %v3001 = vand.u32 %v2613, 4294901760
  %v3002 = vsub.f32 %v2613, %v3001
  %v3003 = vand.u32 %v3002, 4294901760
  %3004 = vmatprep.subr.mxu0 %v3003
  %v3005 = vand.u32 %v2612, 4294901760
  %v3006 = vsub.f32 %v2612, %v3005
  %v3007 = vand.u32 %v3006, 4294901760
  %3008 = vmatpush1.msra.mxu0 %v3007
  %v3009 = vand.u32 %v2609, 4294901760
  %v3010 = vsub.f32 %v2609, %v3009
  %v3011 = vand.u32 %v3010, 4294901760
  %3012 = vmatprep.subr.mxu0 %v3011
  %v3013 = vand.u32 %v2608, 4294901760
  %v3014 = vsub.f32 %v2608, %v3013
  %v3015 = vand.u32 %v3014, 4294901760
  %3016 = vmatpush1.msra.mxu0 %v3015
  %v3017 = vand.u32 %v2605, 4294901760
  %v3018 = vsub.f32 %v2605, %v3017
  %v3019 = vand.u32 %v3018, 4294901760
  %3020 = vmatprep.subr.mxu0 %v3019
  %v3021 = vand.u32 %v2604, 4294901760
  %v3022 = vsub.f32 %v2604, %v3021
  %v3023 = vand.u32 %v3022, 4294901760
  %3024 = vmatpush1.msra.mxu0 %v3023
  %3025 = vmatprep.subr.mxu0 0.0
  %3026 = vmatpush2.msra.mxu0 0.0
  %3027 = vmatprep.subr.mxu0 0.0
  %3028 = vmatpush2.msra.mxu0 0.0
  %3029 = vmatprep.subr.mxu0 0.0
  %3030 = vmatpush2.msra.mxu0 0.0
  %3031 = vmatprep.subr.mxu0 0.0
  %3032 = vmatpush2.msra.mxu0 0.0
  %3033 = vmatprep.subr.mxu0 0.0
  %3034 = vmatpush2.msra.mxu0 0.0
  %3035 = vmatprep.subr.mxu0 0.0
  %3036 = vmatpush2.msra.mxu0 0.0
  %3037 = vmatprep.subr.mxu0 0.0
  %3038 = vmatpush2.msra.mxu0 0.0
  %3039 = vmatprep.subr.mxu0 0.0
  %3040 = vmatpush2.msra.mxu0 0.0
  %3041 = vmatprep.subr.mxu0 0.0
  %3042 = vmatpush2.msra.mxu0 0.0
  %3043 = vmatprep.subr.mxu0 0.0
  %3044 = vmatpush2.msra.mxu0 0.0
  %3045 = vmatprep.subr.mxu0 0.0
  %3046 = vmatpush2.msra.mxu0 0.0
  %3047 = vmatprep.subr.mxu0 0.0
  %3048 = vmatpush2.msra.mxu0 0.0
  %3049 = vmatprep.subr.mxu0 0.0
  %3050 = vmatpush2.msra.mxu0 0.0
  %3051 = vmatprep.subr.mxu0 0.0
  %3052 = vmatpush2.msra.mxu0 0.0
  %3053 = vmatprep.subr.mxu0 0.0
  %3054 = vmatpush2.msra.mxu0 0.0
  %3055 = vmatprep.subr.mxu0 0.0
  %3056 = vmatpush2.msra.mxu0 0.0
  %3057 = vmatprep.mubr.f32.mxu0 0.0
  %v3058 = vand.u32 %v2624, 4294901760
  %3059 = vmatmul.mubr.f32.gmra.mxu0 %v3058
  %v3060 = vpop.f32.mrf.mxu0
  %v3061 = vadd.f32 %v2971, %v3060
  %v3062 = vpop.f32.mrf.mxu0
  %v3063 = vadd.f32 %v2973, %v3062
  %3064 = vdwg.mxu0
  %3065 = vmatprep.subr.mxu0 0.0
  %3066 = vmatpush1.msra.mxu0 0.0
  %3067 = vmatprep.subr.mxu0 0.0
  %3068 = vmatpush1.msra.mxu0 0.0
  %3069 = vmatprep.subr.mxu0 0.0
  %3070 = vmatpush1.msra.mxu0 0.0
  %3071 = vmatprep.subr.mxu0 0.0
  %3072 = vmatpush1.msra.mxu0 0.0
  %3073 = vmatprep.subr.mxu0 0.0
  %3074 = vmatpush1.msra.mxu0 0.0
  %3075 = vmatprep.subr.mxu0 0.0
  %3076 = vmatpush1.msra.mxu0 0.0
  %3077 = vmatprep.subr.mxu0 0.0
  %3078 = vmatpush1.msra.mxu0 0.0
  %3079 = vmatprep.subr.mxu0 0.0
  %3080 = vmatpush1.msra.mxu0 0.0
  %3081 = vmatprep.subr.mxu0 0.0
  %3082 = vmatpush1.msra.mxu0 0.0
  %3083 = vmatprep.subr.mxu0 0.0
  %3084 = vmatpush1.msra.mxu0 0.0
  %3085 = vmatprep.subr.mxu0 0.0
  %3086 = vmatpush1.msra.mxu0 0.0
  %3087 = vmatprep.subr.mxu0 0.0
  %3088 = vmatpush1.msra.mxu0 0.0
  %3089 = vmatprep.subr.mxu0 0.0
  %3090 = vmatpush1.msra.mxu0 0.0
  %v3091 = vand.u32 %v2613, 4294901760
  %3092 = vmatprep.subr.mxu0 %v3091
  %v3093 = vand.u32 %v2612, 4294901760
  %3094 = vmatpush1.msra.mxu0 %v3093
  %v3095 = vand.u32 %v2609, 4294901760
  %3096 = vmatprep.subr.mxu0 %v3095
  %v3097 = vand.u32 %v2608, 4294901760
  %3098 = vmatpush1.msra.mxu0 %v3097
  %v3099 = vand.u32 %v2605, 4294901760
  %3100 = vmatprep.subr.mxu0 %v3099
  %v3101 = vand.u32 %v2604, 4294901760
  %3102 = vmatpush1.msra.mxu0 %v3101
  %3103 = vmatprep.subr.mxu0 0.0
  %3104 = vmatpush2.msra.mxu0 0.0
  %3105 = vmatprep.subr.mxu0 0.0
  %3106 = vmatpush2.msra.mxu0 0.0
  %3107 = vmatprep.subr.mxu0 0.0
  %3108 = vmatpush2.msra.mxu0 0.0
  %3109 = vmatprep.subr.mxu0 0.0
  %3110 = vmatpush2.msra.mxu0 0.0
  %3111 = vmatprep.subr.mxu0 0.0
  %3112 = vmatpush2.msra.mxu0 0.0
  %3113 = vmatprep.subr.mxu0 0.0
  %3114 = vmatpush2.msra.mxu0 0.0
  %3115 = vmatprep.subr.mxu0 0.0
  %3116 = vmatpush2.msra.mxu0 0.0
  %3117 = vmatprep.subr.mxu0 0.0
  %3118 = vmatpush2.msra.mxu0 0.0
  %3119 = vmatprep.subr.mxu0 0.0
  %3120 = vmatpush2.msra.mxu0 0.0
  %3121 = vmatprep.subr.mxu0 0.0
  %3122 = vmatpush2.msra.mxu0 0.0
  %3123 = vmatprep.subr.mxu0 0.0
  %3124 = vmatpush2.msra.mxu0 0.0
  %3125 = vmatprep.subr.mxu0 0.0
  %3126 = vmatpush2.msra.mxu0 0.0
  %3127 = vmatprep.subr.mxu0 0.0
  %3128 = vmatpush2.msra.mxu0 0.0
  %3129 = vmatprep.subr.mxu0 0.0
  %3130 = vmatpush2.msra.mxu0 0.0
  %3131 = vmatprep.subr.mxu0 0.0
  %3132 = vmatpush2.msra.mxu0 0.0
  %3133 = vmatprep.subr.mxu0 0.0
  %3134 = vmatpush2.msra.mxu0 0.0
  %3135 = vmatprep.mubr.f32.mxu0 0.0
  %v3136 = vand.u32 %v2624, 4294901760
  %3137 = vmatmul.mubr.f32.gmra.mxu0 %v3136
  %v3138 = vpop.f32.mrf.mxu0
  %v3139 = vadd.f32 %v3061, %v3138
  %v3140 = vpop.f32.mrf.mxu0
  %v3141 = vadd.f32 %v3063, %v3140
  %3142 = vdwg.mxu0
  %3143 = vmatprep.subr.mxu0 0.0
  %3144 = vmatpush1.msra.mxu0 0.0
  %3145 = vmatprep.subr.mxu0 0.0
  %3146 = vmatpush1.msra.mxu0 0.0
  %3147 = vmatprep.subr.mxu0 0.0
  %3148 = vmatpush1.msra.mxu0 0.0
  %3149 = vmatprep.subr.mxu0 0.0
  %3150 = vmatpush1.msra.mxu0 0.0
  %3151 = vmatprep.subr.mxu0 0.0
  %3152 = vmatpush1.msra.mxu0 0.0
  %3153 = vmatprep.subr.mxu0 0.0
  %3154 = vmatpush1.msra.mxu0 0.0
  %3155 = vmatprep.subr.mxu0 0.0
  %3156 = vmatpush1.msra.mxu0 0.0
  %3157 = vmatprep.subr.mxu0 0.0
  %3158 = vmatpush1.msra.mxu0 0.0
  %3159 = vmatprep.subr.mxu0 0.0
  %3160 = vmatpush1.msra.mxu0 0.0
  %3161 = vmatprep.subr.mxu0 0.0
  %3162 = vmatpush1.msra.mxu0 0.0
  %3163 = vmatprep.subr.mxu0 0.0
  %3164 = vmatpush1.msra.mxu0 0.0
  %3165 = vmatprep.subr.mxu0 0.0
  %3166 = vmatpush1.msra.mxu0 0.0
  %3167 = vmatprep.subr.mxu0 0.0
  %3168 = vmatpush1.msra.mxu0 0.0
  %v3169 = vand.u32 %v2615, 4294901760
  %3170 = vmatprep.subr.mxu0 %v3169
  %v3171 = vand.u32 %v2614, 4294901760
  %3172 = vmatpush1.msra.mxu0 %v3171
  %v3173 = vand.u32 %v2611, 4294901760
  %3174 = vmatprep.subr.mxu0 %v3173
  %v3175 = vand.u32 %v2610, 4294901760
  %3176 = vmatpush1.msra.mxu0 %v3175
  %v3177 = vand.u32 %v2607, 4294901760
  %3178 = vmatprep.subr.mxu0 %v3177
  %v3179 = vand.u32 %v2606, 4294901760
  %3180 = vmatpush1.msra.mxu0 %v3179
  %3181 = vmatprep.subr.mxu0 0.0
  %3182 = vmatpush2.msra.mxu0 0.0
  %3183 = vmatprep.subr.mxu0 0.0
  %3184 = vmatpush2.msra.mxu0 0.0
  %3185 = vmatprep.subr.mxu0 0.0
  %3186 = vmatpush2.msra.mxu0 0.0
  %3187 = vmatprep.subr.mxu0 0.0
  %3188 = vmatpush2.msra.mxu0 0.0
  %3189 = vmatprep.subr.mxu0 0.0
  %3190 = vmatpush2.msra.mxu0 0.0
  %3191 = vmatprep.subr.mxu0 0.0
  %3192 = vmatpush2.msra.mxu0 0.0
  %3193 = vmatprep.subr.mxu0 0.0
  %3194 = vmatpush2.msra.mxu0 0.0
  %3195 = vmatprep.subr.mxu0 0.0
  %3196 = vmatpush2.msra.mxu0 0.0
  %3197 = vmatprep.subr.mxu0 0.0
  %3198 = vmatpush2.msra.mxu0 0.0
  %3199 = vmatprep.subr.mxu0 0.0
  %3200 = vmatpush2.msra.mxu0 0.0
  %3201 = vmatprep.subr.mxu0 0.0
  %3202 = vmatpush2.msra.mxu0 0.0
  %3203 = vmatprep.subr.mxu0 0.0
  %3204 = vmatpush2.msra.mxu0 0.0
  %3205 = vmatprep.subr.mxu0 0.0
  %3206 = vmatpush2.msra.mxu0 0.0
  %3207 = vmatprep.subr.mxu0 0.0
  %3208 = vmatpush2.msra.mxu0 0.0
  %3209 = vmatprep.subr.mxu0 0.0
  %3210 = vmatpush2.msra.mxu0 0.0
  %3211 = vmatprep.subr.mxu0 0.0
  %3212 = vmatpush2.msra.mxu0 0.0
  %3213 = vmatprep.mubr.f32.mxu0 0.0
  %v3214 = vand.u32 %v2624, 4294901760
  %v3215 = vsub.f32 %v2624, %v3214
  %v3216 = vand.u32 %v3215, 4294901760
  %v3217 = vsub.f32 %v3215, %v3216
  %v3218 = vand.u32 %v3217, 4294901760
  %3219 = vmatmul.mubr.f32.gmra.mxu0 %v3218
  %v3220 = vpop.f32.mrf.mxu0
  %v3221 = vadd.f32 %v2621, %v3220
  %v3222 = vpop.f32.mrf.mxu0
  %v3223 = vadd.f32 %v2621, %v3222
  %3224 = vdwg.mxu0
  %3225 = vmatprep.subr.mxu0 0.0
  %3226 = vmatpush1.msra.mxu0 0.0
  %3227 = vmatprep.subr.mxu0 0.0
  %3228 = vmatpush1.msra.mxu0 0.0
  %3229 = vmatprep.subr.mxu0 0.0
  %3230 = vmatpush1.msra.mxu0 0.0
  %3231 = vmatprep.subr.mxu0 0.0
  %3232 = vmatpush1.msra.mxu0 0.0
  %3233 = vmatprep.subr.mxu0 0.0
  %3234 = vmatpush1.msra.mxu0 0.0
  %3235 = vmatprep.subr.mxu0 0.0
  %3236 = vmatpush1.msra.mxu0 0.0
  %3237 = vmatprep.subr.mxu0 0.0
  %3238 = vmatpush1.msra.mxu0 0.0
  %3239 = vmatprep.subr.mxu0 0.0
  %3240 = vmatpush1.msra.mxu0 0.0
  %3241 = vmatprep.subr.mxu0 0.0
  %3242 = vmatpush1.msra.mxu0 0.0
  %3243 = vmatprep.subr.mxu0 0.0
  %3244 = vmatpush1.msra.mxu0 0.0
  %3245 = vmatprep.subr.mxu0 0.0
  %3246 = vmatpush1.msra.mxu0 0.0
  %3247 = vmatprep.subr.mxu0 0.0
  %3248 = vmatpush1.msra.mxu0 0.0
  %3249 = vmatprep.subr.mxu0 0.0
  %3250 = vmatpush1.msra.mxu0 0.0
  %v3251 = vand.u32 %v2615, 4294901760
  %v3252 = vsub.f32 %v2615, %v3251
  %v3253 = vand.u32 %v3252, 4294901760
  %v3254 = vsub.f32 %v3252, %v3253
  %v3255 = vand.u32 %v3254, 4294901760
  %3256 = vmatprep.subr.mxu0 %v3255
  %v3257 = vand.u32 %v2614, 4294901760
  %v3258 = vsub.f32 %v2614, %v3257
  %v3259 = vand.u32 %v3258, 4294901760
  %v3260 = vsub.f32 %v3258, %v3259
  %v3261 = vand.u32 %v3260, 4294901760
  %3262 = vmatpush1.msra.mxu0 %v3261
  %v3263 = vand.u32 %v2611, 4294901760
  %v3264 = vsub.f32 %v2611, %v3263
  %v3265 = vand.u32 %v3264, 4294901760
  %v3266 = vsub.f32 %v3264, %v3265
  %v3267 = vand.u32 %v3266, 4294901760
  %3268 = vmatprep.subr.mxu0 %v3267
  %v3269 = vand.u32 %v2610, 4294901760
  %v3270 = vsub.f32 %v2610, %v3269
  %v3271 = vand.u32 %v3270, 4294901760
  %v3272 = vsub.f32 %v3270, %v3271
  %v3273 = vand.u32 %v3272, 4294901760
  %3274 = vmatpush1.msra.mxu0 %v3273
  %v3275 = vand.u32 %v2607, 4294901760
  %v3276 = vsub.f32 %v2607, %v3275
  %v3277 = vand.u32 %v3276, 4294901760
  %v3278 = vsub.f32 %v3276, %v3277
  %v3279 = vand.u32 %v3278, 4294901760
  %3280 = vmatprep.subr.mxu0 %v3279
  %v3281 = vand.u32 %v2606, 4294901760
  %v3282 = vsub.f32 %v2606, %v3281
  %v3283 = vand.u32 %v3282, 4294901760
  %v3284 = vsub.f32 %v3282, %v3283
  %v3285 = vand.u32 %v3284, 4294901760
  %3286 = vmatpush1.msra.mxu0 %v3285
  %3287 = vmatprep.subr.mxu0 0.0
  %3288 = vmatpush2.msra.mxu0 0.0
  %3289 = vmatprep.subr.mxu0 0.0
  %3290 = vmatpush2.msra.mxu0 0.0
  %3291 = vmatprep.subr.mxu0 0.0
  %3292 = vmatpush2.msra.mxu0 0.0
  %3293 = vmatprep.subr.mxu0 0.0
  %3294 = vmatpush2.msra.mxu0 0.0
  %3295 = vmatprep.subr.mxu0 0.0
  %3296 = vmatpush2.msra.mxu0 0.0
  %3297 = vmatprep.subr.mxu0 0.0
  %3298 = vmatpush2.msra.mxu0 0.0
  %3299 = vmatprep.subr.mxu0 0.0
  %3300 = vmatpush2.msra.mxu0 0.0
  %3301 = vmatprep.subr.mxu0 0.0
  %3302 = vmatpush2.msra.mxu0 0.0
  %3303 = vmatprep.subr.mxu0 0.0
  %3304 = vmatpush2.msra.mxu0 0.0
  %3305 = vmatprep.subr.mxu0 0.0
  %3306 = vmatpush2.msra.mxu0 0.0
  %3307 = vmatprep.subr.mxu0 0.0
  %3308 = vmatpush2.msra.mxu0 0.0
  %3309 = vmatprep.subr.mxu0 0.0
  %3310 = vmatpush2.msra.mxu0 0.0
  %3311 = vmatprep.subr.mxu0 0.0
  %3312 = vmatpush2.msra.mxu0 0.0
  %3313 = vmatprep.subr.mxu0 0.0
  %3314 = vmatpush2.msra.mxu0 0.0
  %3315 = vmatprep.subr.mxu0 0.0
  %3316 = vmatpush2.msra.mxu0 0.0
  %3317 = vmatprep.subr.mxu0 0.0
  %3318 = vmatpush2.msra.mxu0 0.0
  %3319 = vmatprep.mubr.f32.mxu0 0.0
  %v3320 = vand.u32 %v2624, 4294901760
  %3321 = vmatmul.mubr.f32.gmra.mxu0 %v3320
  %v3322 = vpop.f32.mrf.mxu0
  %v3323 = vadd.f32 %v3221, %v3322
  %v3324 = vpop.f32.mrf.mxu0
  %v3325 = vadd.f32 %v3223, %v3324
  %3326 = vdwg.mxu0
  %3327 = vmatprep.subr.mxu0 0.0
  %3328 = vmatpush1.msra.mxu0 0.0
  %3329 = vmatprep.subr.mxu0 0.0
  %3330 = vmatpush1.msra.mxu0 0.0
  %3331 = vmatprep.subr.mxu0 0.0
  %3332 = vmatpush1.msra.mxu0 0.0
  %3333 = vmatprep.subr.mxu0 0.0
  %3334 = vmatpush1.msra.mxu0 0.0
  %3335 = vmatprep.subr.mxu0 0.0
  %3336 = vmatpush1.msra.mxu0 0.0
  %3337 = vmatprep.subr.mxu0 0.0
  %3338 = vmatpush1.msra.mxu0 0.0
  %3339 = vmatprep.subr.mxu0 0.0
  %3340 = vmatpush1.msra.mxu0 0.0
  %3341 = vmatprep.subr.mxu0 0.0
  %3342 = vmatpush1.msra.mxu0 0.0
  %3343 = vmatprep.subr.mxu0 0.0
  %3344 = vmatpush1.msra.mxu0 0.0
  %3345 = vmatprep.subr.mxu0 0.0
  %3346 = vmatpush1.msra.mxu0 0.0
  %3347 = vmatprep.subr.mxu0 0.0
  %3348 = vmatpush1.msra.mxu0 0.0
  %3349 = vmatprep.subr.mxu0 0.0
  %3350 = vmatpush1.msra.mxu0 0.0
  %3351 = vmatprep.subr.mxu0 0.0
  %3352 = vmatpush1.msra.mxu0 0.0
  %v3353 = vand.u32 %v2615, 4294901760
  %v3354 = vsub.f32 %v2615, %v3353
  %3355 = vmatprep.subr.mxu0 %v3354
  %v3356 = vand.u32 %v2614, 4294901760
  %v3357 = vsub.f32 %v2614, %v3356
  %3358 = vmatpush1.msra.mxu0 %v3357
  %v3359 = vand.u32 %v2611, 4294901760
  %v3360 = vsub.f32 %v2611, %v3359
  %3361 = vmatprep.subr.mxu0 %v3360
  %v3362 = vand.u32 %v2610, 4294901760
  %v3363 = vsub.f32 %v2610, %v3362
  %3364 = vmatpush1.msra.mxu0 %v3363
  %v3365 = vand.u32 %v2607, 4294901760
  %v3366 = vsub.f32 %v2607, %v3365
  %3367 = vmatprep.subr.mxu0 %v3366
  %v3368 = vand.u32 %v2606, 4294901760
  %v3369 = vsub.f32 %v2606, %v3368
  %3370 = vmatpush1.msra.mxu0 %v3369
  %3371 = vmatprep.subr.mxu0 0.0
  %3372 = vmatpush2.msra.mxu0 0.0
  %3373 = vmatprep.subr.mxu0 0.0
  %3374 = vmatpush2.msra.mxu0 0.0
  %3375 = vmatprep.subr.mxu0 0.0
  %3376 = vmatpush2.msra.mxu0 0.0
  %3377 = vmatprep.subr.mxu0 0.0
  %3378 = vmatpush2.msra.mxu0 0.0
  %3379 = vmatprep.subr.mxu0 0.0
  %3380 = vmatpush2.msra.mxu0 0.0
  %3381 = vmatprep.subr.mxu0 0.0
  %3382 = vmatpush2.msra.mxu0 0.0
  %3383 = vmatprep.subr.mxu0 0.0
  %3384 = vmatpush2.msra.mxu0 0.0
  %3385 = vmatprep.subr.mxu0 0.0
  %3386 = vmatpush2.msra.mxu0 0.0
  %3387 = vmatprep.subr.mxu0 0.0
  %3388 = vmatpush2.msra.mxu0 0.0
  %3389 = vmatprep.subr.mxu0 0.0
  %3390 = vmatpush2.msra.mxu0 0.0
  %3391 = vmatprep.subr.mxu0 0.0
  %3392 = vmatpush2.msra.mxu0 0.0
  %3393 = vmatprep.subr.mxu0 0.0
  %3394 = vmatpush2.msra.mxu0 0.0
  %3395 = vmatprep.subr.mxu0 0.0
  %3396 = vmatpush2.msra.mxu0 0.0
  %3397 = vmatprep.subr.mxu0 0.0
  %3398 = vmatpush2.msra.mxu0 0.0
  %3399 = vmatprep.subr.mxu0 0.0
  %3400 = vmatpush2.msra.mxu0 0.0
  %3401 = vmatprep.subr.mxu0 0.0
  %3402 = vmatpush2.msra.mxu0 0.0
  %3403 = vmatprep.mubr.f32.mxu0 0.0
  %v3404 = vand.u32 %v2624, 4294901760
  %v3405 = vsub.f32 %v2624, %v3404
  %3406 = vmatmul.mubr.f32.gmra.mxu0 %v3405
  %v3407 = vpop.f32.mrf.mxu0
  %v3408 = vadd.f32 %v3323, %v3407
  %v3409 = vpop.f32.mrf.mxu0
  %v3410 = vadd.f32 %v3325, %v3409
  %3411 = vdwg.mxu0
  %3412 = vmatprep.subr.mxu0 0.0
  %3413 = vmatpush1.msra.mxu0 0.0
  %3414 = vmatprep.subr.mxu0 0.0
  %3415 = vmatpush1.msra.mxu0 0.0
  %3416 = vmatprep.subr.mxu0 0.0
  %3417 = vmatpush1.msra.mxu0 0.0
  %3418 = vmatprep.subr.mxu0 0.0
  %3419 = vmatpush1.msra.mxu0 0.0
  %3420 = vmatprep.subr.mxu0 0.0
  %3421 = vmatpush1.msra.mxu0 0.0
  %3422 = vmatprep.subr.mxu0 0.0
  %3423 = vmatpush1.msra.mxu0 0.0
  %3424 = vmatprep.subr.mxu0 0.0
  %3425 = vmatpush1.msra.mxu0 0.0
  %3426 = vmatprep.subr.mxu0 0.0
  %3427 = vmatpush1.msra.mxu0 0.0
  %3428 = vmatprep.subr.mxu0 0.0
  %3429 = vmatpush1.msra.mxu0 0.0
  %3430 = vmatprep.subr.mxu0 0.0
  %3431 = vmatpush1.msra.mxu0 0.0
  %3432 = vmatprep.subr.mxu0 0.0
  %3433 = vmatpush1.msra.mxu0 0.0
  %3434 = vmatprep.subr.mxu0 0.0
  %3435 = vmatpush1.msra.mxu0 0.0
  %3436 = vmatprep.subr.mxu0 0.0
  %3437 = vmatpush1.msra.mxu0 0.0
  %v3438 = vand.u32 %v2615, 4294901760
  %3439 = vmatprep.subr.mxu0 %v3438
  %v3440 = vand.u32 %v2614, 4294901760
  %3441 = vmatpush1.msra.mxu0 %v3440
  %v3442 = vand.u32 %v2611, 4294901760
  %3443 = vmatprep.subr.mxu0 %v3442
  %v3444 = vand.u32 %v2610, 4294901760
  %3445 = vmatpush1.msra.mxu0 %v3444
  %v3446 = vand.u32 %v2607, 4294901760
  %3447 = vmatprep.subr.mxu0 %v3446
  %v3448 = vand.u32 %v2606, 4294901760
  %3449 = vmatpush1.msra.mxu0 %v3448
  %3450 = vmatprep.subr.mxu0 0.0
  %3451 = vmatpush2.msra.mxu0 0.0
  %3452 = vmatprep.subr.mxu0 0.0
  %3453 = vmatpush2.msra.mxu0 0.0
  %3454 = vmatprep.subr.mxu0 0.0
  %3455 = vmatpush2.msra.mxu0 0.0
  %3456 = vmatprep.subr.mxu0 0.0
  %3457 = vmatpush2.msra.mxu0 0.0
  %3458 = vmatprep.subr.mxu0 0.0
  %3459 = vmatpush2.msra.mxu0 0.0
  %3460 = vmatprep.subr.mxu0 0.0
  %3461 = vmatpush2.msra.mxu0 0.0
  %3462 = vmatprep.subr.mxu0 0.0
  %3463 = vmatpush2.msra.mxu0 0.0
  %3464 = vmatprep.subr.mxu0 0.0
  %3465 = vmatpush2.msra.mxu0 0.0
  %3466 = vmatprep.subr.mxu0 0.0
  %3467 = vmatpush2.msra.mxu0 0.0
  %3468 = vmatprep.subr.mxu0 0.0
  %3469 = vmatpush2.msra.mxu0 0.0
  %3470 = vmatprep.subr.mxu0 0.0
  %3471 = vmatpush2.msra.mxu0 0.0
  %3472 = vmatprep.subr.mxu0 0.0
  %3473 = vmatpush2.msra.mxu0 0.0
  %3474 = vmatprep.subr.mxu0 0.0
  %3475 = vmatpush2.msra.mxu0 0.0
  %3476 = vmatprep.subr.mxu0 0.0
  %3477 = vmatpush2.msra.mxu0 0.0
  %3478 = vmatprep.subr.mxu0 0.0
  %3479 = vmatpush2.msra.mxu0 0.0
  %3480 = vmatprep.subr.mxu0 0.0
  %3481 = vmatpush2.msra.mxu0 0.0
  %3482 = vmatprep.mubr.f32.mxu0 0.0
  %v3483 = vand.u32 %v2624, 4294901760
  %v3484 = vsub.f32 %v2624, %v3483
  %v3485 = vand.u32 %v3484, 4294901760
  %3486 = vmatmul.mubr.f32.gmra.mxu0 %v3485
  %v3487 = vpop.f32.mrf.mxu0
  %v3488 = vadd.f32 %v3408, %v3487
  %v3489 = vpop.f32.mrf.mxu0
  %v3490 = vadd.f32 %v3410, %v3489
  %3491 = vdwg.mxu0
  %3492 = vmatprep.subr.mxu0 0.0
  %3493 = vmatpush1.msra.mxu0 0.0
  %3494 = vmatprep.subr.mxu0 0.0
  %3495 = vmatpush1.msra.mxu0 0.0
  %3496 = vmatprep.subr.mxu0 0.0
  %3497 = vmatpush1.msra.mxu0 0.0
  %3498 = vmatprep.subr.mxu0 0.0
  %3499 = vmatpush1.msra.mxu0 0.0
  %3500 = vmatprep.subr.mxu0 0.0
  %3501 = vmatpush1.msra.mxu0 0.0
  %3502 = vmatprep.subr.mxu0 0.0
  %3503 = vmatpush1.msra.mxu0 0.0
  %3504 = vmatprep.subr.mxu0 0.0
  %3505 = vmatpush1.msra.mxu0 0.0
  %3506 = vmatprep.subr.mxu0 0.0
  %3507 = vmatpush1.msra.mxu0 0.0
  %3508 = vmatprep.subr.mxu0 0.0
  %3509 = vmatpush1.msra.mxu0 0.0
  %3510 = vmatprep.subr.mxu0 0.0
  %3511 = vmatpush1.msra.mxu0 0.0
  %3512 = vmatprep.subr.mxu0 0.0
  %3513 = vmatpush1.msra.mxu0 0.0
  %3514 = vmatprep.subr.mxu0 0.0
  %3515 = vmatpush1.msra.mxu0 0.0
  %3516 = vmatprep.subr.mxu0 0.0
  %3517 = vmatpush1.msra.mxu0 0.0
  %v3518 = vand.u32 %v2615, 4294901760
  %v3519 = vsub.f32 %v2615, %v3518
  %v3520 = vand.u32 %v3519, 4294901760
  %3521 = vmatprep.subr.mxu0 %v3520
  %v3522 = vand.u32 %v2614, 4294901760
  %v3523 = vsub.f32 %v2614, %v3522
  %v3524 = vand.u32 %v3523, 4294901760
  %3525 = vmatpush1.msra.mxu0 %v3524
  %v3526 = vand.u32 %v2611, 4294901760
  %v3527 = vsub.f32 %v2611, %v3526
  %v3528 = vand.u32 %v3527, 4294901760
  %3529 = vmatprep.subr.mxu0 %v3528
  %v3530 = vand.u32 %v2610, 4294901760
  %v3531 = vsub.f32 %v2610, %v3530
  %v3532 = vand.u32 %v3531, 4294901760
  %3533 = vmatpush1.msra.mxu0 %v3532
  %v3534 = vand.u32 %v2607, 4294901760
  %v3535 = vsub.f32 %v2607, %v3534
  %v3536 = vand.u32 %v3535, 4294901760
  %3537 = vmatprep.subr.mxu0 %v3536
  %v3538 = vand.u32 %v2606, 4294901760
  %v3539 = vsub.f32 %v2606, %v3538
  %v3540 = vand.u32 %v3539, 4294901760
  %3541 = vmatpush1.msra.mxu0 %v3540
  %3542 = vmatprep.subr.mxu0 0.0
  %3543 = vmatpush2.msra.mxu0 0.0
  %3544 = vmatprep.subr.mxu0 0.0
  %3545 = vmatpush2.msra.mxu0 0.0
  %3546 = vmatprep.subr.mxu0 0.0
  %3547 = vmatpush2.msra.mxu0 0.0
  %3548 = vmatprep.subr.mxu0 0.0
  %3549 = vmatpush2.msra.mxu0 0.0
  %3550 = vmatprep.subr.mxu0 0.0
  %3551 = vmatpush2.msra.mxu0 0.0
  %3552 = vmatprep.subr.mxu0 0.0
  %3553 = vmatpush2.msra.mxu0 0.0
  %3554 = vmatprep.subr.mxu0 0.0
  %3555 = vmatpush2.msra.mxu0 0.0
  %3556 = vmatprep.subr.mxu0 0.0
  %3557 = vmatpush2.msra.mxu0 0.0
  %3558 = vmatprep.subr.mxu0 0.0
  %3559 = vmatpush2.msra.mxu0 0.0
  %3560 = vmatprep.subr.mxu0 0.0
  %3561 = vmatpush2.msra.mxu0 0.0
  %3562 = vmatprep.subr.mxu0 0.0
  %3563 = vmatpush2.msra.mxu0 0.0
  %3564 = vmatprep.subr.mxu0 0.0
  %3565 = vmatpush2.msra.mxu0 0.0
  %3566 = vmatprep.subr.mxu0 0.0
  %3567 = vmatpush2.msra.mxu0 0.0
  %3568 = vmatprep.subr.mxu0 0.0
  %3569 = vmatpush2.msra.mxu0 0.0
  %3570 = vmatprep.subr.mxu0 0.0
  %3571 = vmatpush2.msra.mxu0 0.0
  %3572 = vmatprep.subr.mxu0 0.0
  %3573 = vmatpush2.msra.mxu0 0.0
  %3574 = vmatprep.mubr.f32.mxu0 0.0
  %v3575 = vand.u32 %v2624, 4294901760
  %3576 = vmatmul.mubr.f32.gmra.mxu0 %v3575
  %v3577 = vpop.f32.mrf.mxu0
  %v3578 = vadd.f32 %v3488, %v3577
  %v3579 = vpop.f32.mrf.mxu0
  %v3580 = vadd.f32 %v3490, %v3579
  %3581 = vdwg.mxu0
  %3582 = vmatprep.subr.mxu0 0.0
  %3583 = vmatpush1.msra.mxu0 0.0
  %3584 = vmatprep.subr.mxu0 0.0
  %3585 = vmatpush1.msra.mxu0 0.0
  %3586 = vmatprep.subr.mxu0 0.0
  %3587 = vmatpush1.msra.mxu0 0.0
  %3588 = vmatprep.subr.mxu0 0.0
  %3589 = vmatpush1.msra.mxu0 0.0
  %3590 = vmatprep.subr.mxu0 0.0
  %3591 = vmatpush1.msra.mxu0 0.0
  %3592 = vmatprep.subr.mxu0 0.0
  %3593 = vmatpush1.msra.mxu0 0.0
  %3594 = vmatprep.subr.mxu0 0.0
  %3595 = vmatpush1.msra.mxu0 0.0
  %3596 = vmatprep.subr.mxu0 0.0
  %3597 = vmatpush1.msra.mxu0 0.0
  %3598 = vmatprep.subr.mxu0 0.0
  %3599 = vmatpush1.msra.mxu0 0.0
  %3600 = vmatprep.subr.mxu0 0.0
  %3601 = vmatpush1.msra.mxu0 0.0
  %3602 = vmatprep.subr.mxu0 0.0
  %3603 = vmatpush1.msra.mxu0 0.0
  %3604 = vmatprep.subr.mxu0 0.0
  %3605 = vmatpush1.msra.mxu0 0.0
  %3606 = vmatprep.subr.mxu0 0.0
  %3607 = vmatpush1.msra.mxu0 0.0
  %v3608 = vand.u32 %v2615, 4294901760
  %3609 = vmatprep.subr.mxu0 %v3608
  %v3610 = vand.u32 %v2614, 4294901760
  %3611 = vmatpush1.msra.mxu0 %v3610
  %v3612 = vand.u32 %v2611, 4294901760
  %3613 = vmatprep.subr.mxu0 %v3612
  %v3614 = vand.u32 %v2610, 4294901760
  %3615 = vmatpush1.msra.mxu0 %v3614
  %v3616 = vand.u32 %v2607, 4294901760
  %3617 = vmatprep.subr.mxu0 %v3616
  %v3618 = vand.u32 %v2606, 4294901760
  %3619 = vmatpush1.msra.mxu0 %v3618
  %3620 = vmatprep.subr.mxu0 0.0
  %3621 = vmatpush2.msra.mxu0 0.0
  %3622 = vmatprep.subr.mxu0 0.0
  %3623 = vmatpush2.msra.mxu0 0.0
  %3624 = vmatprep.subr.mxu0 0.0
  %3625 = vmatpush2.msra.mxu0 0.0
  %3626 = vmatprep.subr.mxu0 0.0
  %3627 = vmatpush2.msra.mxu0 0.0
  %3628 = vmatprep.subr.mxu0 0.0
  %3629 = vmatpush2.msra.mxu0 0.0
  %3630 = vmatprep.subr.mxu0 0.0
  %3631 = vmatpush2.msra.mxu0 0.0
  %3632 = vmatprep.subr.mxu0 0.0
  %3633 = vmatpush2.msra.mxu0 0.0
  %3634 = vmatprep.subr.mxu0 0.0
  %3635 = vmatpush2.msra.mxu0 0.0
  %3636 = vmatprep.subr.mxu0 0.0
  %3637 = vmatpush2.msra.mxu0 0.0
  %3638 = vmatprep.subr.mxu0 0.0
  %3639 = vmatpush2.msra.mxu0 0.0
  %3640 = vmatprep.subr.mxu0 0.0
  %3641 = vmatpush2.msra.mxu0 0.0
  %3642 = vmatprep.subr.mxu0 0.0
  %3643 = vmatpush2.msra.mxu0 0.0
  %3644 = vmatprep.subr.mxu0 0.0
  %3645 = vmatpush2.msra.mxu0 0.0
  %3646 = vmatprep.subr.mxu0 0.0
  %3647 = vmatpush2.msra.mxu0 0.0
  %3648 = vmatprep.subr.mxu0 0.0
  %3649 = vmatpush2.msra.mxu0 0.0
  %3650 = vmatprep.subr.mxu0 0.0
  %3651 = vmatpush2.msra.mxu0 0.0
  %3652 = vmatprep.mubr.f32.mxu0 0.0
  %v3653 = vand.u32 %v2624, 4294901760
  %3654 = vmatmul.mubr.f32.gmra.mxu0 %v3653
  %v3655 = vpop.f32.mrf.mxu0
  %v3656 = vadd.f32 %v3578, %v3655
  %v3657 = vpop.f32.mrf.mxu0
  %v3658 = vadd.f32 %v3580, %v3657
  %3659 = vdwg.mxu0
  %v3660 = vmax.f32 %v3139, 0.0
  %v3661 = vmax.f32 %v3141, 0.0
  %v3662 = vmax.f32 %v3656, 0.0
  %v3663 = vmax.f32 %v3658, 0.0
  %v3664 = vmin.f32 %v3139, 0.0
  %v3665 = vmin.f32 %v3141, 0.0
  %v3666 = vmin.f32 %v3656, 0.0
  %v3667 = vmin.f32 %v3658, 0.0
  %v3668 = vmul.f32 %v3664, 1.442695
  %v3669 = vpow.pop %v3668
  %v3670 = vmul.f32 %v3665, 1.442695
  %v3671 = vpow.pop %v3670
  %v3672 = vmul.f32 %v3666, 1.442695
  %v3673 = vpow.pop %v3672
  %v3674 = vmul.f32 %v3667, 1.442695
  %v3675 = vpow.pop %v3674
  %v3676 = vsub.f32 %v3669, 1.0
  %v3677 = vsub.f32 %v3671, 1.0
  %v3678 = vsub.f32 %v3673, 1.0
  %v3679 = vsub.f32 %v3675, 1.0
  %v3680 = vadd.f32 %v3660, %v3676
  %v3681 = vadd.f32 %v3661, %v3677
  %v3682 = vadd.f32 %v3662, %v3678
  %v3683 = vadd.f32 %v3663, %v3679
  %v3688 = vcombine.low %v3680, %v3681
  %v3689 = vcombine.low %v3682, %v3683
  %v3691 = vunpack.c.l.s4 1983009808
  %v3692 = vunpack.c.0.s8 %v3691
  %v3693 = vlaneseq
  %v3694 = vshrl.u32 %v3693, 7
  %v3695 = vsub.s32 %v3692, %v3694
  %v3696 = vrot.slane %v3688, %v3695
  %v3698 = vunpack.c.l.s4 1983009808
  %v3699 = vunpack.c.0.s8 %v3698
  %v3700 = vlaneseq
  %v3701 = vshrl.u32 %v3700, 7
  %v3702 = vsub.s32 %v3699, %v3701
  %v3703 = vrot.slane %v3689, %v3702
  %v3704 = vcombine.low %v3696, %v3703
  %3706 = vst [vmem:[%s7] sm:$0xff] %v3704
  // Predicated region
  $region30: #{demodulator_forward.1} parent=0 // pred_check
    _
  $region31: #{demodulator_forward.1} parent=0 // pred_check_branch
    %3708 = sbr.rel (0) target = $region33
  $region32: #{demodulator_forward.1} parent=0 // pred_region
    _
  $region33: #{demodulator_forward.1} parent=0 // pred_fallthru
    _
  // Predicated region
  $region34: #{demodulator_forward.1} parent=0 // pred_check
    _
  $region35: #{demodulator_forward.1} parent=0 // pred_check_branch
    %3710 = sbr.rel (0) target = $region37
  $region36: #{demodulator_forward.1} parent=0 // pred_region
    _
  $region37: #{demodulator_forward.1} parent=0 // pred_fallthru
    _

</llo_original>
